<compile_context>
chip_gen: v6e
topology: v6e:2x2x1
jax: 0.10.0
libtpu: 0.0.40
codegen_flags: <defaults>
</compile_context>

<pallas_src>
import functools

import jax
import jax.numpy as jnp
from jax import lax
from jax.experimental import pallas as pl
from jax.experimental.pallas import tpu as pltpu

BN_EPS = 1e-5
LRELU_SLOPE = 0.01                   # nn.LeakyReLU default negative_slope
LANES = 128                          # pad Cout to 128 lanes -> lane-dense output
TILE_TARGET_ROWS = 256               # rows per conv tile (bump to 512-2048 on v6e)
VMEM_LIMIT_BYTES = 32 * 1024 * 1024  # conservative: v7x has 64 MiB physical VMEM
MATMUL_DTYPE = jnp.bfloat16          # MXU-native everywhere; accumulation is f32


def _round_up(x, m):
    return (x + m - 1) // m * m


def _pick_depth_tile(d, hw, target_rows):
    best = 1
    for t in range(1, d + 1):
        if d % t == 0 and t * hw <= target_rows:
            best = t
    return best


def _pick_row_tile(m, target=512):
    for t in range(min(m, target), 7, -1):
        if m % t == 0 and t % 8 == 0:
            return t
    return m


# ------------------------------ Pallas kernels --------------------------------
def _conv_stats_kernel(x_ref, w_ref, b_ref, y_ref, stats_ref, *, td, hw, tm):
    """One conv-output tile (3 accumulated MXU matmuls) + per-tile BN stats.

    x_ref:     ((D+2)*H*W, 9*Cin) bf16  per-batch padded slab, (kh,kw) taps in channels
    w_ref:     (3, 9*Cin, Cpad)   bf16  per-kd weight slabs
    b_ref:     (1, Cpad)          f32   conv bias
    y_ref:     (tm, Cpad)         f32   pre-BN conv output tile (lane-dense)
    stats_ref: (2, Cpad)          f32   rows = [sum, sum of squares] over the tile
    """
    dt = pl.program_id(1)
    acc = jnp.zeros(y_ref.shape, jnp.float32)
    for kd in range(3):                           # static, unrolled: 3 matmuls
        row0 = (dt * td + kd) * hw
        if hw % 8 == 0:
            row0 = pl.multiple_of(row0, hw)       # sublane-aligned dynamic slice
        lhs = x_ref[pl.ds(row0, tm), :]           # (tm, 9*Cin) bf16
        acc = acc + jnp.dot(lhs, w_ref[kd], preferred_element_type=jnp.float32)
    y = acc + b_ref[...]                          # conv bias, broadcast over rows
    y_ref[...] = y
    # Per-tile statistics; the tiny global reduction is finished in plain JAX.
    s = jnp.sum(y, axis=0, keepdims=True)
    ss = jnp.sum(y * y, axis=0, keepdims=True)
    stats_ref[...] = jnp.concatenate([s, ss], axis=0)


def _bn_lrelu_kernel(y_ref, scale_ref, shift_ref, o_ref):
    """Per-channel affine BN (precomputed scale/shift) fused with LeakyReLU."""
    y = y_ref[...] * scale_ref[...] + shift_ref[...]
    o_ref[...] = jnp.where(y >= 0.0, y, LRELU_SLOPE * y).astype(o_ref.dtype)


# -------------------------------- JAX glue ------------------------------------
def _preshift_hw(x_ndhwc):
    """(N,D,H,W,C) -> (N, (D+2)*H*W, 9*C).

    Zero-pad spatially and fold the 9 (kh, kw) taps into the channel axis
    (tap order (kh, kw, c) matches _pack_weights).  This is a 9x expansion in
    HBM vs 27x for a full im2col; the kd tap costs no extra HBM traffic.
    """
    n, d, h, w, c = x_ndhwc.shape
    xp = jnp.pad(x_ndhwc, ((0, 0), (1, 1), (1, 1), (1, 1), (0, 0)))
    slabs = [xp[:, :, kh:kh + h, kw:kw + w, :] for kh in range(3) for kw in range(3)]
    xs = jnp.concatenate(slabs, axis=-1)          # (N, D+2, H, W, 9C)
    return xs.reshape(n, (d + 2) * h * w, 9 * c)


def _pack_weights(w_oidhw, cpad):
    """PyTorch (O,I,3,3,3) -> (3, 9*I, cpad): kd-major, rows ordered (kh,kw,i)."""
    o, i, kd, kh, kw = w_oidhw.shape
    wt = jnp.transpose(w_oidhw, (2, 3, 4, 1, 0)).reshape(kd, kh * kw * i, o)
    return jnp.pad(wt, ((0, 0), (0, 0), (0, cpad - o)))


def conv_bn_lrelu_block(x_ndhwc, w, b, gamma, beta, *, out_dtype=jnp.float32):
    """One Conv3d(3x3x3, pad=1) + BatchNorm3d(train stats) + LeakyReLU block."""
    n, d, h, wdim, cin = x_ndhwc.shape
    cout = int(w.shape[0])
    cpad = _round_up(cout, LANES)
    hw = h * wdim
    m = n * d * hw
    kc = 9 * cin
    rows_in = (d + 2) * hw

    td = _pick_depth_tile(d, hw, TILE_TARGET_ROWS)
    n_dt = d // td
    tm = td * hw
    assert tm % 8 == 0, "row tile must be sublane-aligned"

    xs = _preshift_hw(x_ndhwc).astype(MATMUL_DTYPE)      # (N, rows_in, kc) bf16
    wk = _pack_weights(w, cpad).astype(MATMUL_DTYPE)     # (3, kc, cpad)    bf16
    b_p = jnp.pad(b, (0, cpad - cout)).reshape(1, cpad).astype(jnp.float32)
    g_p = jnp.pad(gamma, (0, cpad - cout)).astype(jnp.float32)
    be_p = jnp.pad(beta, (0, cpad - cout)).astype(jnp.float32)

    kernel = functools.partial(_conv_stats_kernel, td=td, hw=hw, tm=tm)
    flops = int(2 * m * (27 * cin) * cpad)
    bytes_acc = int(xs.size * 2 + wk.size * 2 + b_p.size * 4
                    + m * cpad * 4 + n * n_dt * 2 * cpad * 4)

    y, stats = pl.pallas_call(
        kernel,
        out_shape=(jax.ShapeDtypeStruct((m, cpad), jnp.float32),
                   jax.ShapeDtypeStruct((n * n_dt, 2, cpad), jnp.float32)),
        grid=(n, n_dt),
        in_specs=[
            # Whole per-batch padded slab; revisited across the dt axis, so it is
            # DMA'd from HBM exactly once per batch and stays VMEM-resident.
            # TODO(synk): for very large D*H*W this slab should become a halo'd
            # manual DMA (memory_space=pl.ANY + make_async_copy) instead.
            pl.BlockSpec((None, rows_in, kc), lambda nb, t: (nb, 0, 0)),
            pl.BlockSpec((3, kc, cpad), lambda nb, t: (0, 0, 0)),
            pl.BlockSpec((1, cpad), lambda nb, t: (0, 0)),
        ],
        out_specs=(
            pl.BlockSpec((tm, cpad), lambda nb, t: (nb * n_dt + t, 0)),
            pl.BlockSpec((None, 2, cpad), lambda nb, t: (nb * n_dt + t, 0, 0)),
        ),
        compiler_params=pltpu.CompilerParams(
            dimension_semantics=("parallel", "parallel"),
            vmem_limit_bytes=VMEM_LIMIT_BYTES),
        cost_estimate=pl.CostEstimate(flops=flops, transcendentals=0,
                                      bytes_accessed=bytes_acc),
    )(xs, wk, b_p)

    # Global batch statistics (tiny: num_tiles x Cpad) -> per-channel scale/shift.
    ssum = jnp.sum(stats[:, 0, :], axis=0)
    ssq = jnp.sum(stats[:, 1, :], axis=0)
    mean = ssum / m
    var = jnp.maximum(ssq / m - mean * mean, 0.0)        # biased var (PyTorch norm)
    inv = lax.rsqrt(var + BN_EPS)
    scale = (g_p * inv).reshape(1, cpad)
    shift = (be_p - mean * g_p * inv).reshape(1, cpad)

    tm2 = _pick_row_tile(m, 512)
    out_bytes = int(m * cpad * (4 + jnp.dtype(out_dtype).itemsize) + 2 * cpad * 4)
    out = pl.pallas_call(
        _bn_lrelu_kernel,
        out_shape=jax.ShapeDtypeStruct((m, cpad), out_dtype),
        grid=(m // tm2,),
        in_specs=[pl.BlockSpec((tm2, cpad), lambda i: (i, 0)),
                  pl.BlockSpec((1, cpad), lambda i: (0, 0)),
                  pl.BlockSpec((1, cpad), lambda i: (0, 0))],
        out_specs=pl.BlockSpec((tm2, cpad), lambda i: (i, 0)),
        compiler_params=pltpu.CompilerParams(
            dimension_semantics=("parallel",),
            vmem_limit_bytes=VMEM_LIMIT_BYTES),
        cost_estimate=pl.CostEstimate(flops=int(3 * m * cpad), transcendentals=0,
                                      bytes_accessed=out_bytes),
    )(y, scale, shift)

    return out[:, :cout].reshape(n, d, h, wdim, cout)


def double_conv_forward(x_ncdhw, params):
    """DoubleConv forward.  Input/output are NCDHW (PyTorch convention)."""
    x = jnp.transpose(x_ncdhw, (0, 2, 3, 4, 1))          # -> NDHWC
    h1 = conv_bn_lrelu_block(x, params["w1"], params["b1"], params["g1"],
                             params["be1"], out_dtype=MATMUL_DTYPE)  # bf16 feeds block-2 MXU
    h2 = conv_bn_lrelu_block(h1, params["w2"], params["b2"], params["g2"],
                             params["be2"], out_dtype=jnp.float32)
    return jnp.transpose(h2, (0, 4, 1, 2, 3))            # -> NCDHW


# ----------------------------- pure-JAX reference ------------------------------
def _round_bf16(x):
    return x.astype(jnp.bfloat16).astype(jnp.float32)


def _ref_block(x_ncdhw, w, b, gamma, beta):
    # Same numerics as the kernels: bf16-rounded conv operands, f32 accumulation,
    # f32 BatchNorm/LeakyReLU epilogue.
    y = lax.conv_general_dilated(
        _round_bf16(x_ncdhw), _round_bf16(w), window_strides=(1, 1, 1),
        padding=((1, 1), (1, 1), (1, 1)),
        dimension_numbers=("NCDHW", "OIDHW", "NCDHW"),
        precision=lax.Precision.HIGHEST)
    y = y + b[None, :, None, None, None]
    mean = jnp.mean(y, axis=(0, 2, 3, 4), keepdims=True)
    var = jnp.mean((y - mean) ** 2, axis=(0, 2, 3, 4), keepdims=True)
    y = (y - mean) * lax.rsqrt(var + BN_EPS)
    y = y * gamma[None, :, None, None, None] + beta[None, :, None, None, None]
    return jnp.where(y >= 0.0, y, LRELU_SLOPE * y)


def ref_forward(x_ncdhw, p):
    h1 = _ref_block(x_ncdhw, p["w1"], p["b1"], p["g1"], p["be1"])
    return _ref_block(h1, p["w2"], p["b2"], p["g2"], p["be2"])


# ----------------------------------- main --------------------------------------
if __name__ == "__main__":
    key = jax.random.PRNGKey(0)
    N, IN_CH, OUT_CH, D, H, W = 2, 4, 8, 8, 8, 8

    ks = jax.random.split(key, 9)
    x = jax.random.normal(ks[0], (N, IN_CH, D, H, W), dtype=jnp.float32)

    fan1 = IN_CH * 27
    fan2 = OUT_CH * 27
    params = {
        "w1": jax.random.normal(ks[1], (OUT_CH, IN_CH, 3, 3, 3), jnp.float32) / jnp.sqrt(fan1),
        "b1": 0.1 * jax.random.normal(ks[2], (OUT_CH,), jnp.float32),
        "g1": 1.0 + 0.1 * jax.random.normal(ks[3], (OUT_CH,), jnp.float32),
        "be1": 0.1 * jax.random.normal(ks[4], (OUT_CH,), jnp.float32),
        "w2": jax.random.normal(ks[5], (OUT_CH, OUT_CH, 3, 3, 3), jnp.float32) / jnp.sqrt(fan2),
        "b2": 0.1 * jax.random.normal(ks[6], (OUT_CH,), jnp.float32),
        "g2": 1.0 + 0.1 * jax.random.normal(ks[7], (OUT_CH,), jnp.float32),
        "be2": 0.1 * jax.random.normal(ks[8], (OUT_CH,), jnp.float32),
    }

    out = jax.block_until_ready(jax.jit(double_conv_forward)(x, params))
    assert out.shape == (N, OUT_CH, D, H, W), out.shape
    assert bool(jnp.all(jnp.isfinite(out)))

    ref = jax.block_until_ready(jax.jit(ref_forward)(x, params))
    err = float(jnp.max(jnp.abs(out - ref)))
    assert jnp.allclose(out, ref, atol=2e-3, rtol=2e-3), err

    print("KERNEL_OK")
</pallas_src>

<mosaic_0001>
module attributes {stable_mosaic.version = 11 : i64} {
  func.func @_conv_stats_kernel(%arg0: i32, %arg1: i32, %arg2: memref<1x640x36xbf16, #tpu.memory_space<vmem>>, %arg3: memref<3x36x128xbf16, #tpu.memory_space<vmem>>, %arg4: memref<1x128xf32, #tpu.memory_space<vmem>>, %arg5: memref<256x128xf32, #tpu.memory_space<vmem>>, %arg6: memref<1x2x128xf32, #tpu.memory_space<vmem>>) attributes {dimension_semantics = [#tpu.dimension_semantics<parallel>, #tpu.dimension_semantics<parallel>], iteration_bounds = array<i64: 2, 2>, scalar_prefetch = 0 : i64, scratch_operands = 0 : i64, tpu.core_type = #tpu.core_type<tc>, window_params = [{transform_indices = @transform_0, window_bounds = array<i64: 1, 640, 36>}, {pipeline_mode = #tpu.pipeline_mode<synchronous>, transform_indices = @transform_1, window_bounds = array<i64: 3, 36, 128>}, {pipeline_mode = #tpu.pipeline_mode<synchronous>, transform_indices = @transform_2, window_bounds = array<i64: 1, 128>}, {transform_indices = @transform_3, window_bounds = array<i64: 256, 128>}, {transform_indices = @transform_4, window_bounds = array<i64: 1, 2, 128>}]} {
    %cst = arith.constant 0.000000e+00 : f32
    %0 = vector.broadcast %cst : f32 to vector<256x128xf32>
    %c4_i32 = arith.constant 4 : i32
    %1 = arith.muli %arg1, %c4_i32 : i32
    %c0_i32 = arith.constant 0 : i32
    %2 = arith.addi %1, %c0_i32 : i32
    %c64_i32 = arith.constant 64 : i32
    %3 = arith.muli %2, %c64_i32 : i32
    %4 = tpu.assume_multiple %3, 64 : i32
    %c0 = arith.constant 0 : index
    %5 = arith.index_cast %4 : i32 to index
    %c0_0 = arith.constant 0 : index
    %6 = vector.load %arg2[%c0, %5, %c0_0] : memref<1x640x36xbf16, #tpu.memory_space<vmem>>, vector<1x256x36xbf16>
    %7 = vector.shape_cast %6 : vector<1x256x36xbf16> to vector<256x36xbf16>
    %c0_1 = arith.constant 0 : index
    %c0_2 = arith.constant 0 : index
    %c0_3 = arith.constant 0 : index
    %8 = vector.load %arg3[%c0_1, %c0_2, %c0_3] : memref<3x36x128xbf16, #tpu.memory_space<vmem>>, vector<1x36x128xbf16>
    %9 = vector.shape_cast %8 : vector<1x36x128xbf16> to vector<36x128xbf16>
    %cst_4 = arith.constant dense<0.000000e+00> : vector<256x128xf32>
    %10 = tpu.matmul %7, %9, %cst_4 {dimension_numbers = #tpu.dot_dimension_numbers<[1], [0], [0], [1], [0, 0, 1, 1], [], []>} : vector<256x36xbf16>, vector<36x128xbf16>, vector<256x128xf32> -> vector<256x128xf32>
    %11 = arith.addf %0, %10 : vector<256x128xf32>
    %c4_i32_5 = arith.constant 4 : i32
    %12 = arith.muli %arg1, %c4_i32_5 : i32
    %c1_i32 = arith.constant 1 : i32
    %13 = arith.addi %12, %c1_i32 : i32
    %c64_i32_6 = arith.constant 64 : i32
    %14 = arith.muli %13, %c64_i32_6 : i32
    %15 = tpu.assume_multiple %14, 64 : i32
    %c0_7 = arith.constant 0 : index
    %16 = arith.index_cast %15 : i32 to index
    %c0_8 = arith.constant 0 : index
    %17 = vector.load %arg2[%c0_7, %16, %c0_8] : memref<1x640x36xbf16, #tpu.memory_space<vmem>>, vector<1x256x36xbf16>
    %18 = vector.shape_cast %17 : vector<1x256x36xbf16> to vector<256x36xbf16>
    %c1 = arith.constant 1 : index
    %c0_9 = arith.constant 0 : index
    %c0_10 = arith.constant 0 : index
    %19 = vector.load %arg3[%c1, %c0_9, %c0_10] : memref<3x36x128xbf16, #tpu.memory_space<vmem>>, vector<1x36x128xbf16>
    %20 = vector.shape_cast %19 : vector<1x36x128xbf16> to vector<36x128xbf16>
    %cst_11 = arith.constant dense<0.000000e+00> : vector<256x128xf32>
    %21 = tpu.matmul %18, %20, %cst_11 {dimension_numbers = #tpu.dot_dimension_numbers<[1], [0], [0], [1], [0, 0, 1, 1], [], []>} : vector<256x36xbf16>, vector<36x128xbf16>, vector<256x128xf32> -> vector<256x128xf32>
    %22 = arith.addf %11, %21 : vector<256x128xf32>
    %c4_i32_12 = arith.constant 4 : i32
    %23 = arith.muli %arg1, %c4_i32_12 : i32
    %c2_i32 = arith.constant 2 : i32
    %24 = arith.addi %23, %c2_i32 : i32
    %c64_i32_13 = arith.constant 64 : i32
    %25 = arith.muli %24, %c64_i32_13 : i32
    %26 = tpu.assume_multiple %25, 64 : i32
    %c0_14 = arith.constant 0 : index
    %27 = arith.index_cast %26 : i32 to index
    %c0_15 = arith.constant 0 : index
    %28 = vector.load %arg2[%c0_14, %27, %c0_15] : memref<1x640x36xbf16, #tpu.memory_space<vmem>>, vector<1x256x36xbf16>
    %29 = vector.shape_cast %28 : vector<1x256x36xbf16> to vector<256x36xbf16>
    %c2 = arith.constant 2 : index
    %c0_16 = arith.constant 0 : index
    %c0_17 = arith.constant 0 : index
    %30 = vector.load %arg3[%c2, %c0_16, %c0_17] : memref<3x36x128xbf16, #tpu.memory_space<vmem>>, vector<1x36x128xbf16>
    %31 = vector.shape_cast %30 : vector<1x36x128xbf16> to vector<36x128xbf16>
    %cst_18 = arith.constant dense<0.000000e+00> : vector<256x128xf32>
    %32 = tpu.matmul %29, %31, %cst_18 {dimension_numbers = #tpu.dot_dimension_numbers<[1], [0], [0], [1], [0, 0, 1, 1], [], []>} : vector<256x36xbf16>, vector<36x128xbf16>, vector<256x128xf32> -> vector<256x128xf32>
    %33 = arith.addf %22, %32 : vector<256x128xf32>
    %c0_19 = arith.constant 0 : index
    %c0_20 = arith.constant 0 : index
    %34 = vector.load %arg4[%c0_19, %c0_20] : memref<1x128xf32, #tpu.memory_space<vmem>>, vector<1x128xf32>
    %35 = vector.broadcast %34 : vector<1x128xf32> to vector<256x128xf32>
    %36 = arith.addf %33, %35 : vector<256x128xf32>
    %c0_21 = arith.constant 0 : index
    %c0_22 = arith.constant 0 : index
    %37 = vector.load %arg5[%c0_21, %c0_22] : memref<256x128xf32, #tpu.memory_space<vmem>>, vector<256x128xf32>
    tpu.vector_store %arg5[%c0_21, %c0_22], %36 {strides = array<i32>} : memref<256x128xf32, #tpu.memory_space<vmem>>, vector<256x128xf32>,
    %cst_23 = arith.constant dense<0.000000e+00> : vector<128xf32>
    %38 = vector.multi_reduction <add>, %36, %cst_23 [0] : vector<256x128xf32> to vector<128xf32>
    %39 = vector.shape_cast %38 : vector<128xf32> to vector<1x128xf32>
    %40 = arith.mulf %36, %36 : vector<256x128xf32>
    %cst_24 = arith.constant dense<0.000000e+00> : vector<128xf32>
    %41 = vector.multi_reduction <add>, %40, %cst_24 [0] : vector<256x128xf32> to vector<128xf32>
    %42 = vector.shape_cast %41 : vector<128xf32> to vector<1x128xf32>
    %43 = tpu.concatenate %39, %42 in 0 : vector<1x128xf32>, vector<1x128xf32> -> vector<2x128xf32>
    %c0_25 = arith.constant 0 : index
    %c0_26 = arith.constant 0 : index
    %c0_27 = arith.constant 0 : index
    %44 = vector.load %arg6[%c0_25, %c0_26, %c0_27] : memref<1x2x128xf32, #tpu.memory_space<vmem>>, vector<1x2x128xf32>
    %45 = vector.shape_cast %44 : vector<1x2x128xf32> to vector<2x128xf32>
    %46 = vector.shape_cast %43 : vector<2x128xf32> to vector<1x2x128xf32>
    tpu.vector_store %arg6[%c0_25, %c0_26, %c0_27], %46 {strides = array<i32>} : memref<1x2x128xf32, #tpu.memory_space<vmem>>, vector<1x2x128xf32>,
    return
  }
  func.func @transform_0(%arg0: i32, %arg1: i32) -> (i32, i32, i32) {
    %c0_i32 = arith.constant 0 : i32
    %c0_i32_0 = arith.constant 0 : i32
    %c0_i32_1 = arith.constant 0 : i32
    return %arg0, %c0_i32, %c0_i32_0 : i32, i32, i32
  }
  func.func @transform_1(%arg0: i32, %arg1: i32) -> (i32, i32, i32) {
    %c0_i32 = arith.constant 0 : i32
    %c0_i32_0 = arith.constant 0 : i32
    %c0_i32_1 = arith.constant 0 : i32
    %c0_i32_2 = arith.constant 0 : i32
    return %c0_i32, %c0_i32_0, %c0_i32_1 : i32, i32, i32
  }
  func.func @transform_2(%arg0: i32, %arg1: i32) -> (i32, i32) {
    %c0_i32 = arith.constant 0 : i32
    %c0_i32_0 = arith.constant 0 : i32
    %c0_i32_1 = arith.constant 0 : i32
    return %c0_i32, %c0_i32_0 : i32, i32
  }
  func.func @transform_3(%arg0: i32, %arg1: i32) -> (i32, i32) {
    %c2_i32 = arith.constant 2 : i32
    %0 = arith.muli %arg0, %c2_i32 : i32
    %1 = arith.addi %0, %arg1 : i32
    %c0_i32 = arith.constant 0 : i32
    %c0_i32_0 = arith.constant 0 : i32
    return %1, %c0_i32 : i32, i32
  }
  func.func @transform_4(%arg0: i32, %arg1: i32) -> (i32, i32, i32) {
    %c2_i32 = arith.constant 2 : i32
    %0 = arith.muli %arg0, %c2_i32 : i32
    %1 = arith.addi %0, %arg1 : i32
    %c0_i32 = arith.constant 0 : i32
    %c0_i32_0 = arith.constant 0 : i32
    %c0_i32_1 = arith.constant 0 : i32
    return %1, %c0_i32, %c0_i32_0 : i32, i32, i32
  }
}

module attributes {stable_mosaic.version = 11 : i64} {
  func.func @_bn_lrelu_kernel(%arg0: i32, %arg1: memref<512x128xf32, #tpu.memory_space<vmem>>, %arg2: memref<1x128xf32, #tpu.memory_space<vmem>>, %arg3: memref<1x128xf32, #tpu.memory_space<vmem>>, %arg4: memref<512x128xbf16, #tpu.memory_space<vmem>>) attributes {dimension_semantics = [#tpu.dimension_semantics<parallel>], iteration_bounds = array<i64: 2>, scalar_prefetch = 0 : i64, scratch_operands = 0 : i64, tpu.core_type = #tpu.core_type<tc>, window_params = [{transform_indices = @transform_0, window_bounds = array<i64: 512, 128>}, {pipeline_mode = #tpu.pipeline_mode<synchronous>, transform_indices = @transform_1, window_bounds = array<i64: 1, 128>}, {pipeline_mode = #tpu.pipeline_mode<synchronous>, transform_indices = @transform_2, window_bounds = array<i64: 1, 128>}, {transform_indices = @transform_3, window_bounds = array<i64: 512, 128>}]} {
    %c0 = arith.constant 0 : index
    %c0_0 = arith.constant 0 : index
    %0 = vector.load %arg1[%c0, %c0_0] : memref<512x128xf32, #tpu.memory_space<vmem>>, vector<512x128xf32>
    %c0_1 = arith.constant 0 : index
    %c0_2 = arith.constant 0 : index
    %1 = vector.load %arg2[%c0_1, %c0_2] : memref<1x128xf32, #tpu.memory_space<vmem>>, vector<1x128xf32>
    %2 = vector.broadcast %1 : vector<1x128xf32> to vector<512x128xf32>
    %3 = arith.mulf %0, %2 : vector<512x128xf32>
    %c0_3 = arith.constant 0 : index
    %c0_4 = arith.constant 0 : index
    %4 = vector.load %arg3[%c0_3, %c0_4] : memref<1x128xf32, #tpu.memory_space<vmem>>, vector<1x128xf32>
    %5 = vector.broadcast %4 : vector<1x128xf32> to vector<512x128xf32>
    %6 = arith.addf %3, %5 : vector<512x128xf32>
    %cst = arith.constant 0.000000e+00 : f32
    %7 = vector.broadcast %cst : f32 to vector<512x128xf32>
    %8 = arith.cmpf oge, %6, %7 : vector<512x128xf32>
    %cst_5 = arith.constant 0.00999999977 : f32
    %9 = vector.broadcast %cst_5 : f32 to vector<512x128xf32>
    %10 = arith.mulf %9, %6 : vector<512x128xf32>
    %11 = arith.select %8, %6, %10 : vector<512x128xi1>, vector<512x128xf32>
    %12 = arith.truncf %11 : vector<512x128xf32> to vector<512x128xbf16>
    %c0_6 = arith.constant 0 : index
    %c0_7 = arith.constant 0 : index
    %13 = vector.load %arg4[%c0_6, %c0_7] : memref<512x128xbf16, #tpu.memory_space<vmem>>, vector<512x128xbf16>
    tpu.vector_store %arg4[%c0_6, %c0_7], %12 {strides = array<i32>} : memref<512x128xbf16, #tpu.memory_space<vmem>>, vector<512x128xbf16>,
    return
  }
  func.func @transform_0(%arg0: i32) -> (i32, i32) {
    %c0_i32 = arith.constant 0 : i32
    %c0_i32_0 = arith.constant 0 : i32
    return %arg0, %c0_i32 : i32, i32
  }
  func.func @transform_1(%arg0: i32) -> (i32, i32) {
    %c0_i32 = arith.constant 0 : i32
    %c0_i32_0 = arith.constant 0 : i32
    %c0_i32_1 = arith.constant 0 : i32
    return %c0_i32, %c0_i32_0 : i32, i32
  }
  func.func @transform_2(%arg0: i32) -> (i32, i32) {
    %c0_i32 = arith.constant 0 : i32
    %c0_i32_0 = arith.constant 0 : i32
    %c0_i32_1 = arith.constant 0 : i32
    return %c0_i32, %c0_i32_0 : i32, i32
  }
  func.func @transform_3(%arg0: i32) -> (i32, i32) {
    %c0_i32 = arith.constant 0 : i32
    %c0_i32_0 = arith.constant 0 : i32
    return %arg0, %c0_i32 : i32, i32
  }
}

module attributes {stable_mosaic.version = 11 : i64} {
  func.func @_conv_stats_kernel(%arg0: i32, %arg1: i32, %arg2: memref<1x640x72xbf16, #tpu.memory_space<vmem>>, %arg3: memref<3x72x128xbf16, #tpu.memory_space<vmem>>, %arg4: memref<1x128xf32, #tpu.memory_space<vmem>>, %arg5: memref<256x128xf32, #tpu.memory_space<vmem>>, %arg6: memref<1x2x128xf32, #tpu.memory_space<vmem>>) attributes {dimension_semantics = [#tpu.dimension_semantics<parallel>, #tpu.dimension_semantics<parallel>], iteration_bounds = array<i64: 2, 2>, scalar_prefetch = 0 : i64, scratch_operands = 0 : i64, tpu.core_type = #tpu.core_type<tc>, window_params = [{transform_indices = @transform_0, window_bounds = array<i64: 1, 640, 72>}, {pipeline_mode = #tpu.pipeline_mode<synchronous>, transform_indices = @transform_1, window_bounds = array<i64: 3, 72, 128>}, {pipeline_mode = #tpu.pipeline_mode<synchronous>, transform_indices = @transform_2, window_bounds = array<i64: 1, 128>}, {transform_indices = @transform_3, window_bounds = array<i64: 256, 128>}, {transform_indices = @transform_4, window_bounds = array<i64: 1, 2, 128>}]} {
    %cst = arith.constant 0.000000e+00 : f32
    %0 = vector.broadcast %cst : f32 to vector<256x128xf32>
    %c4_i32 = arith.constant 4 : i32
    %1 = arith.muli %arg1, %c4_i32 : i32
    %c0_i32 = arith.constant 0 : i32
    %2 = arith.addi %1, %c0_i32 : i32
    %c64_i32 = arith.constant 64 : i32
    %3 = arith.muli %2, %c64_i32 : i32
    %4 = tpu.assume_multiple %3, 64 : i32
    %c0 = arith.constant 0 : index
    %5 = arith.index_cast %4 : i32 to index
    %c0_0 = arith.constant 0 : index
    %6 = vector.load %arg2[%c0, %5, %c0_0] : memref<1x640x72xbf16, #tpu.memory_space<vmem>>, vector<1x256x72xbf16>
    %7 = vector.shape_cast %6 : vector<1x256x72xbf16> to vector<256x72xbf16>
    %c0_1 = arith.constant 0 : index
    %c0_2 = arith.constant 0 : index
    %c0_3 = arith.constant 0 : index
    %8 = vector.load %arg3[%c0_1, %c0_2, %c0_3] : memref<3x72x128xbf16, #tpu.memory_space<vmem>>, vector<1x72x128xbf16>
    %9 = vector.shape_cast %8 : vector<1x72x128xbf16> to vector<72x128xbf16>
    %cst_4 = arith.constant dense<0.000000e+00> : vector<256x128xf32>
    %10 = tpu.matmul %7, %9, %cst_4 {dimension_numbers = #tpu.dot_dimension_numbers<[1], [0], [0], [1], [0, 0, 1, 1], [], []>} : vector<256x72xbf16>, vector<72x128xbf16>, vector<256x128xf32> -> vector<256x128xf32>
    %11 = arith.addf %0, %10 : vector<256x128xf32>
    %c4_i32_5 = arith.constant 4 : i32
    %12 = arith.muli %arg1, %c4_i32_5 : i32
    %c1_i32 = arith.constant 1 : i32
    %13 = arith.addi %12, %c1_i32 : i32
    %c64_i32_6 = arith.constant 64 : i32
    %14 = arith.muli %13, %c64_i32_6 : i32
    %15 = tpu.assume_multiple %14, 64 : i32
    %c0_7 = arith.constant 0 : index
    %16 = arith.index_cast %15 : i32 to index
    %c0_8 = arith.constant 0 : index
    %17 = vector.load %arg2[%c0_7, %16, %c0_8] : memref<1x640x72xbf16, #tpu.memory_space<vmem>>, vector<1x256x72xbf16>
    %18 = vector.shape_cast %17 : vector<1x256x72xbf16> to vector<256x72xbf16>
    %c1 = arith.constant 1 : index
    %c0_9 = arith.constant 0 : index
    %c0_10 = arith.constant 0 : index
    %19 = vector.load %arg3[%c1, %c0_9, %c0_10] : memref<3x72x128xbf16, #tpu.memory_space<vmem>>, vector<1x72x128xbf16>
    %20 = vector.shape_cast %19 : vector<1x72x128xbf16> to vector<72x128xbf16>
    %cst_11 = arith.constant dense<0.000000e+00> : vector<256x128xf32>
    %21 = tpu.matmul %18, %20, %cst_11 {dimension_numbers = #tpu.dot_dimension_numbers<[1], [0], [0], [1], [0, 0, 1, 1], [], []>} : vector<256x72xbf16>, vector<72x128xbf16>, vector<256x128xf32> -> vector<256x128xf32>
    %22 = arith.addf %11, %21 : vector<256x128xf32>
    %c4_i32_12 = arith.constant 4 : i32
    %23 = arith.muli %arg1, %c4_i32_12 : i32
    %c2_i32 = arith.constant 2 : i32
    %24 = arith.addi %23, %c2_i32 : i32
    %c64_i32_13 = arith.constant 64 : i32
    %25 = arith.muli %24, %c64_i32_13 : i32
    %26 = tpu.assume_multiple %25, 64 : i32
    %c0_14 = arith.constant 0 : index
    %27 = arith.index_cast %26 : i32 to index
    %c0_15 = arith.constant 0 : index
    %28 = vector.load %arg2[%c0_14, %27, %c0_15] : memref<1x640x72xbf16, #tpu.memory_space<vmem>>, vector<1x256x72xbf16>
    %29 = vector.shape_cast %28 : vector<1x256x72xbf16> to vector<256x72xbf16>
    %c2 = arith.constant 2 : index
    %c0_16 = arith.constant 0 : index
    %c0_17 = arith.constant 0 : index
    %30 = vector.load %arg3[%c2, %c0_16, %c0_17] : memref<3x72x128xbf16, #tpu.memory_space<vmem>>, vector<1x72x128xbf16>
    %31 = vector.shape_cast %30 : vector<1x72x128xbf16> to vector<72x128xbf16>
    %cst_18 = arith.constant dense<0.000000e+00> : vector<256x128xf32>
    %32 = tpu.matmul %29, %31, %cst_18 {dimension_numbers = #tpu.dot_dimension_numbers<[1], [0], [0], [1], [0, 0, 1, 1], [], []>} : vector<256x72xbf16>, vector<72x128xbf16>, vector<256x128xf32> -> vector<256x128xf32>
    %33 = arith.addf %22, %32 : vector<256x128xf32>
    %c0_19 = arith.constant 0 : index
    %c0_20 = arith.constant 0 : index
    %34 = vector.load %arg4[%c0_19, %c0_20] : memref<1x128xf32, #tpu.memory_space<vmem>>, vector<1x128xf32>
    %35 = vector.broadcast %34 : vector<1x128xf32> to vector<256x128xf32>
    %36 = arith.addf %33, %35 : vector<256x128xf32>
    %c0_21 = arith.constant 0 : index
    %c0_22 = arith.constant 0 : index
    %37 = vector.load %arg5[%c0_21, %c0_22] : memref<256x128xf32, #tpu.memory_space<vmem>>, vector<256x128xf32>
    tpu.vector_store %arg5[%c0_21, %c0_22], %36 {strides = array<i32>} : memref<256x128xf32, #tpu.memory_space<vmem>>, vector<256x128xf32>,
    %cst_23 = arith.constant dense<0.000000e+00> : vector<128xf32>
    %38 = vector.multi_reduction <add>, %36, %cst_23 [0] : vector<256x128xf32> to vector<128xf32>
    %39 = vector.shape_cast %38 : vector<128xf32> to vector<1x128xf32>
    %40 = arith.mulf %36, %36 : vector<256x128xf32>
    %cst_24 = arith.constant dense<0.000000e+00> : vector<128xf32>
    %41 = vector.multi_reduction <add>, %40, %cst_24 [0] : vector<256x128xf32> to vector<128xf32>
    %42 = vector.shape_cast %41 : vector<128xf32> to vector<1x128xf32>
    %43 = tpu.concatenate %39, %42 in 0 : vector<1x128xf32>, vector<1x128xf32> -> vector<2x128xf32>
    %c0_25 = arith.constant 0 : index
    %c0_26 = arith.constant 0 : index
    %c0_27 = arith.constant 0 : index
    %44 = vector.load %arg6[%c0_25, %c0_26, %c0_27] : memref<1x2x128xf32, #tpu.memory_space<vmem>>, vector<1x2x128xf32>
    %45 = vector.shape_cast %44 : vector<1x2x128xf32> to vector<2x128xf32>
    %46 = vector.shape_cast %43 : vector<2x128xf32> to vector<1x2x128xf32>
    tpu.vector_store %arg6[%c0_25, %c0_26, %c0_27], %46 {strides = array<i32>} : memref<1x2x128xf32, #tpu.memory_space<vmem>>, vector<1x2x128xf32>,
    return
  }
  func.func @transform_0(%arg0: i32, %arg1: i32) -> (i32, i32, i32) {
    %c0_i32 = arith.constant 0 : i32
    %c0_i32_0 = arith.constant 0 : i32
    %c0_i32_1 = arith.constant 0 : i32
    return %arg0, %c0_i32, %c0_i32_0 : i32, i32, i32
  }
  func.func @transform_1(%arg0: i32, %arg1: i32) -> (i32, i32, i32) {
    %c0_i32 = arith.constant 0 : i32
    %c0_i32_0 = arith.constant 0 : i32
    %c0_i32_1 = arith.constant 0 : i32
    %c0_i32_2 = arith.constant 0 : i32
    return %c0_i32, %c0_i32_0, %c0_i32_1 : i32, i32, i32
  }
  func.func @transform_2(%arg0: i32, %arg1: i32) -> (i32, i32) {
    %c0_i32 = arith.constant 0 : i32
    %c0_i32_0 = arith.constant 0 : i32
    %c0_i32_1 = arith.constant 0 : i32
    return %c0_i32, %c0_i32_0 : i32, i32
  }
  func.func @transform_3(%arg0: i32, %arg1: i32) -> (i32, i32) {
    %c2_i32 = arith.constant 2 : i32
    %0 = arith.muli %arg0, %c2_i32 : i32
    %1 = arith.addi %0, %arg1 : i32
    %c0_i32 = arith.constant 0 : i32
    %c0_i32_0 = arith.constant 0 : i32
    return %1, %c0_i32 : i32, i32
  }
  func.func @transform_4(%arg0: i32, %arg1: i32) -> (i32, i32, i32) {
    %c2_i32 = arith.constant 2 : i32
    %0 = arith.muli %arg0, %c2_i32 : i32
    %1 = arith.addi %0, %arg1 : i32
    %c0_i32 = arith.constant 0 : i32
    %c0_i32_0 = arith.constant 0 : i32
    %c0_i32_1 = arith.constant 0 : i32
    return %1, %c0_i32, %c0_i32_0 : i32, i32, i32
  }
}

module attributes {stable_mosaic.version = 11 : i64} {
  func.func @_bn_lrelu_kernel(%arg0: i32, %arg1: memref<512x128xf32, #tpu.memory_space<vmem>>, %arg2: memref<1x128xf32, #tpu.memory_space<vmem>>, %arg3: memref<1x128xf32, #tpu.memory_space<vmem>>, %arg4: memref<512x128xf32, #tpu.memory_space<vmem>>) attributes {dimension_semantics = [#tpu.dimension_semantics<parallel>], iteration_bounds = array<i64: 2>, scalar_prefetch = 0 : i64, scratch_operands = 0 : i64, tpu.core_type = #tpu.core_type<tc>, window_params = [{transform_indices = @transform_0, window_bounds = array<i64: 512, 128>}, {pipeline_mode = #tpu.pipeline_mode<synchronous>, transform_indices = @transform_1, window_bounds = array<i64: 1, 128>}, {pipeline_mode = #tpu.pipeline_mode<synchronous>, transform_indices = @transform_2, window_bounds = array<i64: 1, 128>}, {transform_indices = @transform_3, window_bounds = array<i64: 512, 128>}]} {
    %c0 = arith.constant 0 : index
    %c0_0 = arith.constant 0 : index
    %0 = vector.load %arg1[%c0, %c0_0] : memref<512x128xf32, #tpu.memory_space<vmem>>, vector<512x128xf32>
    %c0_1 = arith.constant 0 : index
    %c0_2 = arith.constant 0 : index
    %1 = vector.load %arg2[%c0_1, %c0_2] : memref<1x128xf32, #tpu.memory_space<vmem>>, vector<1x128xf32>
    %2 = vector.broadcast %1 : vector<1x128xf32> to vector<512x128xf32>
    %3 = arith.mulf %0, %2 : vector<512x128xf32>
    %c0_3 = arith.constant 0 : index
    %c0_4 = arith.constant 0 : index
    %4 = vector.load %arg3[%c0_3, %c0_4] : memref<1x128xf32, #tpu.memory_space<vmem>>, vector<1x128xf32>
    %5 = vector.broadcast %4 : vector<1x128xf32> to vector<512x128xf32>
    %6 = arith.addf %3, %5 : vector<512x128xf32>
    %cst = arith.constant 0.000000e+00 : f32
    %7 = vector.broadcast %cst : f32 to vector<512x128xf32>
    %8 = arith.cmpf oge, %6, %7 : vector<512x128xf32>
    %cst_5 = arith.constant 0.00999999977 : f32
    %9 = vector.broadcast %cst_5 : f32 to vector<512x128xf32>
    %10 = arith.mulf %9, %6 : vector<512x128xf32>
    %11 = arith.select %8, %6, %10 : vector<512x128xi1>, vector<512x128xf32>
    %c0_6 = arith.constant 0 : index
    %c0_7 = arith.constant 0 : index
    %12 = vector.load %arg4[%c0_6, %c0_7] : memref<512x128xf32, #tpu.memory_space<vmem>>, vector<512x128xf32>
    tpu.vector_store %arg4[%c0_6, %c0_7], %11 {strides = array<i32>} : memref<512x128xf32, #tpu.memory_space<vmem>>, vector<512x128xf32>,
    return
  }
  func.func @transform_0(%arg0: i32) -> (i32, i32) {
    %c0_i32 = arith.constant 0 : i32
    %c0_i32_0 = arith.constant 0 : i32
    return %arg0, %c0_i32 : i32, i32
  }
  func.func @transform_1(%arg0: i32) -> (i32, i32) {
    %c0_i32 = arith.constant 0 : i32
    %c0_i32_0 = arith.constant 0 : i32
    %c0_i32_1 = arith.constant 0 : i32
    return %c0_i32, %c0_i32_0 : i32, i32
  }
  func.func @transform_2(%arg0: i32) -> (i32, i32) {
    %c0_i32 = arith.constant 0 : i32
    %c0_i32_0 = arith.constant 0 : i32
    %c0_i32_1 = arith.constant 0 : i32
    return %c0_i32, %c0_i32_0 : i32, i32
  }
  func.func @transform_3(%arg0: i32) -> (i32, i32) {
    %c0_i32 = arith.constant 0 : i32
    %c0_i32_0 = arith.constant 0 : i32
    return %arg0, %c0_i32 : i32, i32
  }
}

</mosaic_0001>

<llo_original>
// kernel: double_conv_forward.5
$region0: #{double_conv_forward.5}
  #allocation0 [shape = 'u32[]', space=smem, size = 0x4, offset = 0x4, fixed_abs, tag = 'smem constant byte address 0x4 - core index']
  #allocation1 [shape = 'u32[144,128]{1,0:T(1,128)}', space=vmem, size = 0x12000, scoped, tag = 'internal scratch']
  %s0 = inlined_call_operand.vmem [shape: f32[1024,128], index: 0, kind: input, shape index: {}]
  %s1 = inlined_call_operand.vmem [shape: f32[1,128], index: 1, kind: input, shape index: {}]
  %s2 = inlined_call_operand.vmem [shape: f32[1,128], index: 2, kind: input, shape index: {}]
  %s3 = inlined_call_operand.vmem [shape: bf16[1024,128], index: 3, kind: output, shape index: {}]
  %s4 = sld [smem:[#allocation0]]
  $region45: #{double_conv_forward.5} parent=0
    _
  %s6 = ssub.s32 1, %s4
  %s7 = scalar_select 0, %s6, %s4
  loop: start=0, step=1, limit=4
  $region2: #{double_conv_forward.5} parent=0 // loop_pre_header
    _
  $region3: #{double_conv_forward.5} parent=0 // loop_header
    %s9 = sphi 0, %s13
    %p10 = scmp.ge.s32.totalorder %s9, 4
    %s19 = sphi 0, %s21
    %s22 = sphi 0, %s19
    %s23 = sphi 0, %s22
    %s39 = sphi 0, %s23
    %s43 = sphi 0, %s43
    %s45 = sphi 0, %s43
    %s46 = sphi 0, %s45
    %s60 = sphi 0, %s46
    %s64 = sphi 0, %s64
    %s66 = sphi 0, %s64
    %s67 = sphi 0, %s66
    %s81 = sphi 0, %s67
    %s87 = sphi 0, %s89
    %s90 = sphi 0, %s87
    %s91 = sphi 0, %s90
    %s107 = sphi 0, %s91
  $region4: #{double_conv_forward.5} parent=0 // loop_header_branch
    %12 = sbr.rel (%p10) target = $region8
  $region5: #{double_conv_forward.5} parent=0 // loop_body
    %s14 = ssub.s32 %s9, 1
    %s15 = ssub.s32 %s9, 2
    %s16 = sadd.s32 %s9, 1
    %s17 = ssub.s32 %s9, %s16
    %p18 = scmp.eq.s32.totalorder %s17, 0
    %s20 = sadd.s32 %s19, 1
    %s21 = scalar_select %p18, %s19, %s20
    %p24 = pneg %p18
    %p25 = scmp.eq.s32.totalorder %s9, 1
    %p26 = por %p24, %p25
    %p27 = scmp.ne.s32.totalorder %s19, %s22
    %p28 = scmp.eq.s32.totalorder %s9, 0
    %p29 = por %p27, %p28
    %p30 = scmp.ne.s32.totalorder %s19, %s22
    %p31 = scmp.eq.s32.totalorder %s14, 1
    %p32 = por %p30, %p31
    %p33 = scmp.ne.s32.totalorder %s22, %s23
    %p34 = scmp.eq.s32.totalorder %s14, 0
    %p35 = por %p33, %p34
    %p36 = scmp.ne.s32.totalorder %s22, %s23
    %p37 = scmp.eq.s32.totalorder %s15, 1
    %p38 = por %p36, %p37
    %p40 = scmp.ne.s32.totalorder %s23, %s39
    %p41 = scmp.eq.s32.totalorder %s15, 0
    %p42 = por %p40, %p41
    %s44 = sadd.s32 %s43, 1
    %p47 = scmp.eq.s32.totalorder %s9, 1
    %p48 = scmp.ne.s32.totalorder %s43, %s45
    %p49 = scmp.eq.s32.totalorder %s9, 0
    %p50 = por %p48, %p49
    %p51 = scmp.ne.s32.totalorder %s43, %s45
    %p52 = scmp.eq.s32.totalorder %s14, 1
    %p53 = por %p51, %p52
    %p54 = scmp.ne.s32.totalorder %s45, %s46
    %p55 = scmp.eq.s32.totalorder %s14, 0
    %p56 = por %p54, %p55
    %p57 = scmp.ne.s32.totalorder %s45, %s46
    %p58 = scmp.eq.s32.totalorder %s15, 1
    %p59 = por %p57, %p58
    %p61 = scmp.ne.s32.totalorder %s46, %s60
    %p62 = scmp.eq.s32.totalorder %s15, 0
    %p63 = por %p61, %p62
    %s65 = sadd.s32 %s64, 1
    %p68 = scmp.eq.s32.totalorder %s9, 1
    %p69 = scmp.ne.s32.totalorder %s64, %s66
    %p70 = scmp.eq.s32.totalorder %s9, 0
    %p71 = por %p69, %p70
    %p72 = scmp.ne.s32.totalorder %s64, %s66
    %p73 = scmp.eq.s32.totalorder %s14, 1
    %p74 = por %p72, %p73
    %p75 = scmp.ne.s32.totalorder %s66, %s67
    %p76 = scmp.eq.s32.totalorder %s14, 0
    %p77 = por %p75, %p76
    %p78 = scmp.ne.s32.totalorder %s66, %s67
    %p79 = scmp.eq.s32.totalorder %s15, 1
    %p80 = por %p78, %p79
    %p82 = scmp.ne.s32.totalorder %s67, %s81
    %p83 = scmp.eq.s32.totalorder %s15, 0
    %p84 = por %p82, %p83
    %s85 = ssub.s32 %s9, %s16
    %p86 = scmp.eq.s32.totalorder %s85, 0
    %s88 = sadd.s32 %s87, 1
    %s89 = scalar_select %p86, %s87, %s88
    %p92 = pneg %p86
    %p93 = scmp.eq.s32.totalorder %s9, 1
    %p94 = por %p92, %p93
    %p95 = scmp.ne.s32.totalorder %s87, %s90
    %p96 = scmp.eq.s32.totalorder %s9, 0
    %p97 = por %p95, %p96
    %p98 = scmp.ne.s32.totalorder %s87, %s90
    %p99 = scmp.eq.s32.totalorder %s14, 1
    %p100 = por %p98, %p99
    %p101 = scmp.ne.s32.totalorder %s90, %s91
    %p102 = scmp.eq.s32.totalorder %s14, 0
    %p103 = por %p101, %p102
    %p104 = scmp.ne.s32.totalorder %s90, %s91
    %p105 = scmp.eq.s32.totalorder %s15, 1
    %p106 = por %p104, %p105
    %p108 = scmp.ne.s32.totalorder %s91, %s107
    %p109 = scmp.eq.s32.totalorder %s15, 0
    %p110 = por %p108, %p109
    %p111 = scmp.le.s32.totalorder 1, %s9
    %p112 = scmp.lt.s32.totalorder %s9, 3
    %p113 = pnand %p111, %p112
    %p114 = pneg %p113
    // Predicated region
    $region9: #{double_conv_forward.5} parent=5 // pred_check
      _
    $region10: #{double_conv_forward.5} parent=5 // pred_check_branch
      %116 = sbr.rel (%p113) target = $region12
    $region11: #{double_conv_forward.5} parent=5 // pred_region
      %s117 = ssub.s32 %s9, 1
      // Predicated region
      $region13: #{double_conv_forward.5} parent=11 // pred_check
        %p118 = pneg %p56
      $region14: #{double_conv_forward.5} parent=11 // pred_check_branch
        %120 = sbr.rel (%p118) target = $region16
      $region15: #{double_conv_forward.5} parent=11 // pred_region
        _
      $region16: #{double_conv_forward.5} parent=11 // pred_fallthru
        _
      // Predicated region
      $region17: #{double_conv_forward.5} parent=11 // pred_check
        %p121 = pneg %p77
      $region18: #{double_conv_forward.5} parent=11 // pred_check_branch
        %123 = sbr.rel (%p121) target = $region20
      $region19: #{double_conv_forward.5} parent=11 // pred_region
        _
      $region20: #{double_conv_forward.5} parent=11 // pred_fallthru
        _
    $region12: #{double_conv_forward.5} parent=5 // pred_fallthru
      _
    %p124 = scmp.lt.s32.totalorder %s9, 2
    // Predicated region
    $region21: #{double_conv_forward.5} parent=5 // pred_check
      %p125 = pneg %p124
    $region22: #{double_conv_forward.5} parent=5 // pred_check_branch
      %127 = sbr.rel (%p125) target = $region24
    $region23: #{double_conv_forward.5} parent=5 // pred_region
      // Predicated region
      $region25: #{double_conv_forward.5} parent=23 // pred_check
        %p128 = pneg %p29
      $region26: #{double_conv_forward.5} parent=23 // pred_check_branch
        %130 = sbr.rel (%p128) target = $region28
      $region27: #{double_conv_forward.5} parent=23 // pred_region
        %s131 = smul.u32 64, %s9
        %p132 = scmp.lt.s32.totalorder %s131, 127
        %s133 = scalar_select %p132, %s131, 127
        %s134 = smul.addr %s133, 8
        %s135 = scalar_lea.vmem %s0, %s134
        %s136 = smul.u32 64, %s9
      $region28: #{double_conv_forward.5} parent=23 // pred_fallthru
        _
    $region24: #{double_conv_forward.5} parent=5 // pred_fallthru
      _
    %p137 = scmp.le.s32.totalorder 1, %s9
    %p138 = scmp.lt.s32.totalorder %s9, 3
    %p139 = pnand %p137, %p138
    %p140 = pneg %p139
    // Predicated region
    $region29: #{double_conv_forward.5} parent=5 // pred_check
      _
    $region30: #{double_conv_forward.5} parent=5 // pred_check_branch
      %142 = sbr.rel (%p139) target = $region32
    $region31: #{double_conv_forward.5} parent=5 // pred_region
      %s143 = ssub.s32 %s9, 1
      %s144 = smul.u32 64, %s14
      %p145 = scmp.lt.s32.totalorder %s144, 127
      %s146 = scalar_select %p145, %s144, 127
      %s147 = smul.addr %s146, 8
      %s148 = scalar_lea.vmem %s0, %s147
      %p149 = pneg %p35
      %p150 = pneg %p32
      %p151 = pneg %p56
      %p152 = pneg %p53
      %p153 = pneg %p77
      %p154 = pneg %p74
      %p155 = pneg %p103
      %p156 = pneg %p100
      %s157 = smul.u32 64, %s14
      %p158 = scmp.lt.s32.totalorder %s157, 127
      %s159 = scalar_select %p158, %s157, 127
      %s160 = smul.addr %s159, 4
      %s161 = scalar_lea.vmem %s3, %s160
      %s162 = smul.u32 64, %s14
      %p163 = scmp.lt.s32.totalorder %s162, 127
      %s164 = scalar_select %p163, %s162, 127
      %s165 = smul.addr %s164, 8
      %s166 = scalar_lea.vmem %s0, %s165
      %s167 = smul.u32 64, %s14
      %s168 = smul.u32 64, %s14
      %p169 = scmp.lt.s32.totalorder %s168, 127
      %s170 = scalar_select %p169, %s168, 127
      %s171 = smul.addr %s170, 4
      %s172 = scalar_lea.vmem %s3, %s171
      %s173 = smul.u32 64, %s14
      %v174 = vld [vmem:[%s166] sm:$0xff]
      %v175 = vld [vmem:[%s166 + $0x8] sm:$0xff]
      %v176 = vld [vmem:[%s166 + $0x10] sm:$0xff]
      %v177 = vld [vmem:[%s166 + $0x18] sm:$0xff]
      %v178 = vld [vmem:[%s166 + $0x20] sm:$0xff]
      %v179 = vld [vmem:[%s166 + $0x28] sm:$0xff]
      %v180 = vld [vmem:[%s166 + $0x30] sm:$0xff]
      %v181 = vld [vmem:[%s166 + $0x38] sm:$0xff]
      %v182 = vld [vmem:[%s166 + $0x40] sm:$0xff]
      %v183 = vld [vmem:[%s166 + $0x48] sm:$0xff]
      %v184 = vld [vmem:[%s166 + $0x50] sm:$0xff]
      %v185 = vld [vmem:[%s166 + $0x58] sm:$0xff]
      %v186 = vld [vmem:[%s166 + $0x60] sm:$0xff]
      %v187 = vld [vmem:[%s166 + $0x68] sm:$0xff]
      %v188 = vld [vmem:[%s166 + $0x70] sm:$0xff]
      %v189 = vld [vmem:[%s166 + $0x78] sm:$0xff]
      %v190 = vld [vmem:[%s166 + $0x80] sm:$0xff]
      %v191 = vld [vmem:[%s166 + $0x88] sm:$0xff]
      %v192 = vld [vmem:[%s166 + $0x90] sm:$0xff]
      %v193 = vld [vmem:[%s166 + $0x98] sm:$0xff]
      %v194 = vld [vmem:[%s166 + $0xa0] sm:$0xff]
      %v195 = vld [vmem:[%s166 + $0xa8] sm:$0xff]
      %v196 = vld [vmem:[%s166 + $0xb0] sm:$0xff]
      %v197 = vld [vmem:[%s166 + $0xb8] sm:$0xff]
      %v198 = vld [vmem:[%s166 + $0xc0] sm:$0xff]
      %v199 = vld [vmem:[%s166 + $0xc8] sm:$0xff]
      %v200 = vld [vmem:[%s166 + $0xd0] sm:$0xff]
      %v201 = vld [vmem:[%s166 + $0xd8] sm:$0xff]
      %v202 = vld [vmem:[%s166 + $0xe0] sm:$0xff]
      %v203 = vld [vmem:[%s166 + $0xe8] sm:$0xff]
      %v204 = vld [vmem:[%s166 + $0xf0] sm:$0xff]
      %v205 = vld [vmem:[%s166 + $0xf8] sm:$0xff]
      %v206 = vld [vmem:[%s166 + $0x100] sm:$0xff]
      %v207 = vld [vmem:[%s166 + $0x108] sm:$0xff]
      %v208 = vld [vmem:[%s166 + $0x110] sm:$0xff]
      %v209 = vld [vmem:[%s166 + $0x118] sm:$0xff]
      %v210 = vld [vmem:[%s166 + $0x120] sm:$0xff]
      %v211 = vld [vmem:[%s166 + $0x128] sm:$0xff]
      %v212 = vld [vmem:[%s166 + $0x130] sm:$0xff]
      %v213 = vld [vmem:[%s166 + $0x138] sm:$0xff]
      %v214 = vld [vmem:[%s166 + $0x140] sm:$0xff]
      %v215 = vld [vmem:[%s166 + $0x148] sm:$0xff]
      %v216 = vld [vmem:[%s166 + $0x150] sm:$0xff]
      %v217 = vld [vmem:[%s166 + $0x158] sm:$0xff]
      %v218 = vld [vmem:[%s166 + $0x160] sm:$0xff]
      %v219 = vld [vmem:[%s166 + $0x168] sm:$0xff]
      %v220 = vld [vmem:[%s166 + $0x170] sm:$0xff]
      %v221 = vld [vmem:[%s166 + $0x178] sm:$0xff]
      %v222 = vld [vmem:[%s166 + $0x180] sm:$0xff]
      %v223 = vld [vmem:[%s166 + $0x188] sm:$0xff]
      %v224 = vld [vmem:[%s166 + $0x190] sm:$0xff]
      %v225 = vld [vmem:[%s166 + $0x198] sm:$0xff]
      %v226 = vld [vmem:[%s166 + $0x1a0] sm:$0xff]
      %v227 = vld [vmem:[%s166 + $0x1a8] sm:$0xff]
      %v228 = vld [vmem:[%s166 + $0x1b0] sm:$0xff]
      %v229 = vld [vmem:[%s166 + $0x1b8] sm:$0xff]
      %v230 = vld [vmem:[%s166 + $0x1c0] sm:$0xff]
      %v231 = vld [vmem:[%s166 + $0x1c8] sm:$0xff]
      %v232 = vld [vmem:[%s166 + $0x1d0] sm:$0xff]
      %v233 = vld [vmem:[%s166 + $0x1d8] sm:$0xff]
      %v234 = vld [vmem:[%s166 + $0x1e0] sm:$0xff]
      %v235 = vld [vmem:[%s166 + $0x1e8] sm:$0xff]
      %v236 = vld [vmem:[%s166 + $0x1f0] sm:$0xff]
      %v237 = vld [vmem:[%s166 + $0x1f8] sm:$0xff]
      %v238 = vld [vmem:[%s1] sm:$0x1]
      %v240 = vlaneseq
      %v241 = vshrl.u32 %v240, 7
      %v242 = vsub.s32 0, %v241
      %v243 = vrot.slane %v238, %v242
      %v245 = vmul.f32 %v174, %v243
      %v246 = vmul.f32 %v175, %v243
      %v247 = vmul.f32 %v176, %v243
      %v248 = vmul.f32 %v177, %v243
      %v249 = vmul.f32 %v178, %v243
      %v250 = vmul.f32 %v179, %v243
      %v251 = vmul.f32 %v180, %v243
      %v252 = vmul.f32 %v181, %v243
      %v253 = vmul.f32 %v182, %v243
      %v254 = vmul.f32 %v183, %v243
      %v255 = vmul.f32 %v184, %v243
      %v256 = vmul.f32 %v185, %v243
      %v257 = vmul.f32 %v186, %v243
      %v258 = vmul.f32 %v187, %v243
      %v259 = vmul.f32 %v188, %v243
      %v260 = vmul.f32 %v189, %v243
      %v261 = vmul.f32 %v190, %v243
      %v262 = vmul.f32 %v191, %v243
      %v263 = vmul.f32 %v192, %v243
      %v264 = vmul.f32 %v193, %v243
      %v265 = vmul.f32 %v194, %v243
      %v266 = vmul.f32 %v195, %v243
      %v267 = vmul.f32 %v196, %v243
      %v268 = vmul.f32 %v197, %v243
      %v269 = vmul.f32 %v198, %v243
      %v270 = vmul.f32 %v199, %v243
      %v271 = vmul.f32 %v200, %v243
      %v272 = vmul.f32 %v201, %v243
      %v273 = vmul.f32 %v202, %v243
      %v274 = vmul.f32 %v203, %v243
      %v275 = vmul.f32 %v204, %v243
      %v276 = vmul.f32 %v205, %v243
      %v277 = vmul.f32 %v206, %v243
      %v278 = vmul.f32 %v207, %v243
      %v279 = vmul.f32 %v208, %v243
      %v280 = vmul.f32 %v209, %v243
      %v281 = vmul.f32 %v210, %v243
      %v282 = vmul.f32 %v211, %v243
      %v283 = vmul.f32 %v212, %v243
      %v284 = vmul.f32 %v213, %v243
      %v285 = vmul.f32 %v214, %v243
      %v286 = vmul.f32 %v215, %v243
      %v287 = vmul.f32 %v216, %v243
      %v288 = vmul.f32 %v217, %v243
      %v289 = vmul.f32 %v218, %v243
      %v290 = vmul.f32 %v219, %v243
      %v291 = vmul.f32 %v220, %v243
      %v292 = vmul.f32 %v221, %v243
      %v293 = vmul.f32 %v222, %v243
      %v294 = vmul.f32 %v223, %v243
      %v295 = vmul.f32 %v224, %v243
      %v296 = vmul.f32 %v225, %v243
      %v297 = vmul.f32 %v226, %v243
      %v298 = vmul.f32 %v227, %v243
      %v299 = vmul.f32 %v228, %v243
      %v300 = vmul.f32 %v229, %v243
      %v301 = vmul.f32 %v230, %v243
      %v302 = vmul.f32 %v231, %v243
      %v303 = vmul.f32 %v232, %v243
      %v304 = vmul.f32 %v233, %v243
      %v305 = vmul.f32 %v234, %v243
      %v306 = vmul.f32 %v235, %v243
      %v307 = vmul.f32 %v236, %v243
      %v308 = vmul.f32 %v237, %v243
      %v309 = vld [vmem:[%s2] sm:$0x1]
      %v311 = vlaneseq
      %v312 = vshrl.u32 %v311, 7
      %v313 = vsub.s32 0, %v312
      %v314 = vrot.slane %v309, %v313
      %v316 = vadd.f32 %v245, %v314
      %v317 = vadd.f32 %v246, %v314
      %v318 = vadd.f32 %v247, %v314
      %v319 = vadd.f32 %v248, %v314
      %v320 = vadd.f32 %v249, %v314
      %v321 = vadd.f32 %v250, %v314
      %v322 = vadd.f32 %v251, %v314
      %v323 = vadd.f32 %v252, %v314
      %v324 = vadd.f32 %v253, %v314
      %v325 = vadd.f32 %v254, %v314
      %v326 = vadd.f32 %v255, %v314
      %v327 = vadd.f32 %v256, %v314
      %v328 = vadd.f32 %v257, %v314
      %v329 = vadd.f32 %v258, %v314
      %v330 = vadd.f32 %v259, %v314
      %v331 = vadd.f32 %v260, %v314
      %v332 = vadd.f32 %v261, %v314
      %v333 = vadd.f32 %v262, %v314
      %v334 = vadd.f32 %v263, %v314
      %v335 = vadd.f32 %v264, %v314
      %v336 = vadd.f32 %v265, %v314
      %v337 = vadd.f32 %v266, %v314
      %v338 = vadd.f32 %v267, %v314
      %v339 = vadd.f32 %v268, %v314
      %v340 = vadd.f32 %v269, %v314
      %v341 = vadd.f32 %v270, %v314
      %v342 = vadd.f32 %v271, %v314
      %v343 = vadd.f32 %v272, %v314
      %v344 = vadd.f32 %v273, %v314
      %v345 = vadd.f32 %v274, %v314
      %v346 = vadd.f32 %v275, %v314
      %v347 = vadd.f32 %v276, %v314
      %v348 = vadd.f32 %v277, %v314
      %v349 = vadd.f32 %v278, %v314
      %v350 = vadd.f32 %v279, %v314
      %v351 = vadd.f32 %v280, %v314
      %v352 = vadd.f32 %v281, %v314
      %v353 = vadd.f32 %v282, %v314
      %v354 = vadd.f32 %v283, %v314
      %v355 = vadd.f32 %v284, %v314
      %v356 = vadd.f32 %v285, %v314
      %v357 = vadd.f32 %v286, %v314
      %v358 = vadd.f32 %v287, %v314
      %v359 = vadd.f32 %v288, %v314
      %v360 = vadd.f32 %v289, %v314
      %v361 = vadd.f32 %v290, %v314
      %v362 = vadd.f32 %v291, %v314
      %v363 = vadd.f32 %v292, %v314
      %v364 = vadd.f32 %v293, %v314
      %v365 = vadd.f32 %v294, %v314
      %v366 = vadd.f32 %v295, %v314
      %v367 = vadd.f32 %v296, %v314
      %v368 = vadd.f32 %v297, %v314
      %v369 = vadd.f32 %v298, %v314
      %v370 = vadd.f32 %v299, %v314
      %v371 = vadd.f32 %v300, %v314
      %v372 = vadd.f32 %v301, %v314
      %v373 = vadd.f32 %v302, %v314
      %v374 = vadd.f32 %v303, %v314
      %v375 = vadd.f32 %v304, %v314
      %v376 = vadd.f32 %v305, %v314
      %v377 = vadd.f32 %v306, %v314
      %v378 = vadd.f32 %v307, %v314
      %v379 = vadd.f32 %v308, %v314
      %vm380 = vcmp.ge.f32.partialorder %v316, 0.0
      %vm381 = vcmp.ge.f32.partialorder %v317, 0.0
      %vm382 = vcmp.ge.f32.partialorder %v318, 0.0
      %vm383 = vcmp.ge.f32.partialorder %v319, 0.0
      %vm384 = vcmp.ge.f32.partialorder %v320, 0.0
      %vm385 = vcmp.ge.f32.partialorder %v321, 0.0
      %vm386 = vcmp.ge.f32.partialorder %v322, 0.0
      %vm387 = vcmp.ge.f32.partialorder %v323, 0.0
      %vm388 = vcmp.ge.f32.partialorder %v324, 0.0
      %vm389 = vcmp.ge.f32.partialorder %v325, 0.0
      %vm390 = vcmp.ge.f32.partialorder %v326, 0.0
      %vm391 = vcmp.ge.f32.partialorder %v327, 0.0
      %vm392 = vcmp.ge.f32.partialorder %v328, 0.0
      %vm393 = vcmp.ge.f32.partialorder %v329, 0.0
      %vm394 = vcmp.ge.f32.partialorder %v330, 0.0
      %vm395 = vcmp.ge.f32.partialorder %v331, 0.0
      %vm396 = vcmp.ge.f32.partialorder %v332, 0.0
      %vm397 = vcmp.ge.f32.partialorder %v333, 0.0
      %vm398 = vcmp.ge.f32.partialorder %v334, 0.0
      %vm399 = vcmp.ge.f32.partialorder %v335, 0.0
      %vm400 = vcmp.ge.f32.partialorder %v336, 0.0
      %vm401 = vcmp.ge.f32.partialorder %v337, 0.0
      %vm402 = vcmp.ge.f32.partialorder %v338, 0.0
      %vm403 = vcmp.ge.f32.partialorder %v339, 0.0
      %vm404 = vcmp.ge.f32.partialorder %v340, 0.0
      %vm405 = vcmp.ge.f32.partialorder %v341, 0.0
      %vm406 = vcmp.ge.f32.partialorder %v342, 0.0
      %vm407 = vcmp.ge.f32.partialorder %v343, 0.0
      %vm408 = vcmp.ge.f32.partialorder %v344, 0.0
      %vm409 = vcmp.ge.f32.partialorder %v345, 0.0
      %vm410 = vcmp.ge.f32.partialorder %v346, 0.0
      %vm411 = vcmp.ge.f32.partialorder %v347, 0.0
      %vm412 = vcmp.ge.f32.partialorder %v348, 0.0
      %vm413 = vcmp.ge.f32.partialorder %v349, 0.0
      %vm414 = vcmp.ge.f32.partialorder %v350, 0.0
      %vm415 = vcmp.ge.f32.partialorder %v351, 0.0
      %vm416 = vcmp.ge.f32.partialorder %v352, 0.0
      %vm417 = vcmp.ge.f32.partialorder %v353, 0.0
      %vm418 = vcmp.ge.f32.partialorder %v354, 0.0
      %vm419 = vcmp.ge.f32.partialorder %v355, 0.0
      %vm420 = vcmp.ge.f32.partialorder %v356, 0.0
      %vm421 = vcmp.ge.f32.partialorder %v357, 0.0
      %vm422 = vcmp.ge.f32.partialorder %v358, 0.0
      %vm423 = vcmp.ge.f32.partialorder %v359, 0.0
      %vm424 = vcmp.ge.f32.partialorder %v360, 0.0
      %vm425 = vcmp.ge.f32.partialorder %v361, 0.0
      %vm426 = vcmp.ge.f32.partialorder %v362, 0.0
      %vm427 = vcmp.ge.f32.partialorder %v363, 0.0
      %vm428 = vcmp.ge.f32.partialorder %v364, 0.0
      %vm429 = vcmp.ge.f32.partialorder %v365, 0.0
      %vm430 = vcmp.ge.f32.partialorder %v366, 0.0
      %vm431 = vcmp.ge.f32.partialorder %v367, 0.0
      %vm432 = vcmp.ge.f32.partialorder %v368, 0.0
      %vm433 = vcmp.ge.f32.partialorder %v369, 0.0
      %vm434 = vcmp.ge.f32.partialorder %v370, 0.0
      %vm435 = vcmp.ge.f32.partialorder %v371, 0.0
      %vm436 = vcmp.ge.f32.partialorder %v372, 0.0
      %vm437 = vcmp.ge.f32.partialorder %v373, 0.0
      %vm438 = vcmp.ge.f32.partialorder %v374, 0.0
      %vm439 = vcmp.ge.f32.partialorder %v375, 0.0
      %vm440 = vcmp.ge.f32.partialorder %v376, 0.0
      %vm441 = vcmp.ge.f32.partialorder %v377, 0.0
      %vm442 = vcmp.ge.f32.partialorder %v378, 0.0
      %vm443 = vcmp.ge.f32.partialorder %v379, 0.0
      %v444 = vmul.f32 %v316, 0.01
      %v445 = vmul.f32 %v317, 0.01
      %v446 = vmul.f32 %v318, 0.01
      %v447 = vmul.f32 %v319, 0.01
      %v448 = vmul.f32 %v320, 0.01
      %v449 = vmul.f32 %v321, 0.01
      %v450 = vmul.f32 %v322, 0.01
      %v451 = vmul.f32 %v323, 0.01
      %v452 = vmul.f32 %v324, 0.01
      %v453 = vmul.f32 %v325, 0.01
      %v454 = vmul.f32 %v326, 0.01
      %v455 = vmul.f32 %v327, 0.01
      %v456 = vmul.f32 %v328, 0.01
      %v457 = vmul.f32 %v329, 0.01
      %v458 = vmul.f32 %v330, 0.01
      %v459 = vmul.f32 %v331, 0.01
      %v460 = vmul.f32 %v332, 0.01
      %v461 = vmul.f32 %v333, 0.01
      %v462 = vmul.f32 %v334, 0.01
      %v463 = vmul.f32 %v335, 0.01
      %v464 = vmul.f32 %v336, 0.01
      %v465 = vmul.f32 %v337, 0.01
      %v466 = vmul.f32 %v338, 0.01
      %v467 = vmul.f32 %v339, 0.01
      %v468 = vmul.f32 %v340, 0.01
      %v469 = vmul.f32 %v341, 0.01
      %v470 = vmul.f32 %v342, 0.01
      %v471 = vmul.f32 %v343, 0.01
      %v472 = vmul.f32 %v344, 0.01
      %v473 = vmul.f32 %v345, 0.01
      %v474 = vmul.f32 %v346, 0.01
      %v475 = vmul.f32 %v347, 0.01
      %v476 = vmul.f32 %v348, 0.01
      %v477 = vmul.f32 %v349, 0.01
      %v478 = vmul.f32 %v350, 0.01
      %v479 = vmul.f32 %v351, 0.01
      %v480 = vmul.f32 %v352, 0.01
      %v481 = vmul.f32 %v353, 0.01
      %v482 = vmul.f32 %v354, 0.01
      %v483 = vmul.f32 %v355, 0.01
      %v484 = vmul.f32 %v356, 0.01
      %v485 = vmul.f32 %v357, 0.01
      %v486 = vmul.f32 %v358, 0.01
      %v487 = vmul.f32 %v359, 0.01
      %v488 = vmul.f32 %v360, 0.01
      %v489 = vmul.f32 %v361, 0.01
      %v490 = vmul.f32 %v362, 0.01
      %v491 = vmul.f32 %v363, 0.01
      %v492 = vmul.f32 %v364, 0.01
      %v493 = vmul.f32 %v365, 0.01
      %v494 = vmul.f32 %v366, 0.01
      %v495 = vmul.f32 %v367, 0.01
      %v496 = vmul.f32 %v368, 0.01
      %v497 = vmul.f32 %v369, 0.01
      %v498 = vmul.f32 %v370, 0.01
      %v499 = vmul.f32 %v371, 0.01
      %v500 = vmul.f32 %v372, 0.01
      %v501 = vmul.f32 %v373, 0.01
      %v502 = vmul.f32 %v374, 0.01
      %v503 = vmul.f32 %v375, 0.01
      %v504 = vmul.f32 %v376, 0.01
      %v505 = vmul.f32 %v377, 0.01
      %v506 = vmul.f32 %v378, 0.01
      %v507 = vmul.f32 %v379, 0.01
      %v508 = vsel %vm380, %v316, %v444
      %v509 = vsel %vm381, %v317, %v445
      %v510 = vsel %vm382, %v318, %v446
      %v511 = vsel %vm383, %v319, %v447
      %v512 = vsel %vm384, %v320, %v448
      %v513 = vsel %vm385, %v321, %v449
      %v514 = vsel %vm386, %v322, %v450
      %v515 = vsel %vm387, %v323, %v451
      %v516 = vsel %vm388, %v324, %v452
      %v517 = vsel %vm389, %v325, %v453
      %v518 = vsel %vm390, %v326, %v454
      %v519 = vsel %vm391, %v327, %v455
      %v520 = vsel %vm392, %v328, %v456
      %v521 = vsel %vm393, %v329, %v457
      %v522 = vsel %vm394, %v330, %v458
      %v523 = vsel %vm395, %v331, %v459
      %v524 = vsel %vm396, %v332, %v460
      %v525 = vsel %vm397, %v333, %v461
      %v526 = vsel %vm398, %v334, %v462
      %v527 = vsel %vm399, %v335, %v463
      %v528 = vsel %vm400, %v336, %v464
      %v529 = vsel %vm401, %v337, %v465
      %v530 = vsel %vm402, %v338, %v466
      %v531 = vsel %vm403, %v339, %v467
      %v532 = vsel %vm404, %v340, %v468
      %v533 = vsel %vm405, %v341, %v469
      %v534 = vsel %vm406, %v342, %v470
      %v535 = vsel %vm407, %v343, %v471
      %v536 = vsel %vm408, %v344, %v472
      %v537 = vsel %vm409, %v345, %v473
      %v538 = vsel %vm410, %v346, %v474
      %v539 = vsel %vm411, %v347, %v475
      %v540 = vsel %vm412, %v348, %v476
      %v541 = vsel %vm413, %v349, %v477
      %v542 = vsel %vm414, %v350, %v478
      %v543 = vsel %vm415, %v351, %v479
      %v544 = vsel %vm416, %v352, %v480
      %v545 = vsel %vm417, %v353, %v481
      %v546 = vsel %vm418, %v354, %v482
      %v547 = vsel %vm419, %v355, %v483
      %v548 = vsel %vm420, %v356, %v484
      %v549 = vsel %vm421, %v357, %v485
      %v550 = vsel %vm422, %v358, %v486
      %v551 = vsel %vm423, %v359, %v487
      %v552 = vsel %vm424, %v360, %v488
      %v553 = vsel %vm425, %v361, %v489
      %v554 = vsel %vm426, %v362, %v490
      %v555 = vsel %vm427, %v363, %v491
      %v556 = vsel %vm428, %v364, %v492
      %v557 = vsel %vm429, %v365, %v493
      %v558 = vsel %vm430, %v366, %v494
      %v559 = vsel %vm431, %v367, %v495
      %v560 = vsel %vm432, %v368, %v496
      %v561 = vsel %vm433, %v369, %v497
      %v562 = vsel %vm434, %v370, %v498
      %v563 = vsel %vm435, %v371, %v499
      %v564 = vsel %vm436, %v372, %v500
      %v565 = vsel %vm437, %v373, %v501
      %v566 = vsel %vm438, %v374, %v502
      %v567 = vsel %vm439, %v375, %v503
      %v568 = vsel %vm440, %v376, %v504
      %v569 = vsel %vm441, %v377, %v505
      %v570 = vsel %vm442, %v378, %v506
      %v571 = vsel %vm443, %v379, %v507
      %v572 = vpack.c.bf16 %v509, %v508
      %v573 = vpack.c.bf16 %v511, %v510
      %v574 = vpack.c.bf16 %v513, %v512
      %v575 = vpack.c.bf16 %v515, %v514
      %v576 = vpack.c.bf16 %v517, %v516
      %v577 = vpack.c.bf16 %v519, %v518
      %v578 = vpack.c.bf16 %v521, %v520
      %v579 = vpack.c.bf16 %v523, %v522
      %v580 = vpack.c.bf16 %v525, %v524
      %v581 = vpack.c.bf16 %v527, %v526
      %v582 = vpack.c.bf16 %v529, %v528
      %v583 = vpack.c.bf16 %v531, %v530
      %v584 = vpack.c.bf16 %v533, %v532
      %v585 = vpack.c.bf16 %v535, %v534
      %v586 = vpack.c.bf16 %v537, %v536
      %v587 = vpack.c.bf16 %v539, %v538
      %v588 = vpack.c.bf16 %v541, %v540
      %v589 = vpack.c.bf16 %v543, %v542
      %v590 = vpack.c.bf16 %v545, %v544
      %v591 = vpack.c.bf16 %v547, %v546
      %v592 = vpack.c.bf16 %v549, %v548
      %v593 = vpack.c.bf16 %v551, %v550
      %v594 = vpack.c.bf16 %v553, %v552
      %v595 = vpack.c.bf16 %v555, %v554
      %v596 = vpack.c.bf16 %v557, %v556
      %v597 = vpack.c.bf16 %v559, %v558
      %v598 = vpack.c.bf16 %v561, %v560
      %v599 = vpack.c.bf16 %v563, %v562
      %v600 = vpack.c.bf16 %v565, %v564
      %v601 = vpack.c.bf16 %v567, %v566
      %v602 = vpack.c.bf16 %v569, %v568
      %v603 = vpack.c.bf16 %v571, %v570
      %v636 = vunpack.c.l.b16 %v572
      %v637 = vunpack.c.h.b16 %v572
      %v638 = vunpack.c.l.b16 %v573
      %v639 = vunpack.c.h.b16 %v573
      %v640 = vunpack.c.l.b16 %v574
      %v641 = vunpack.c.h.b16 %v574
      %v642 = vunpack.c.l.b16 %v575
      %v643 = vunpack.c.h.b16 %v575
      %v644 = vunpack.c.l.b16 %v576
      %v645 = vunpack.c.h.b16 %v576
      %v646 = vunpack.c.l.b16 %v577
      %v647 = vunpack.c.h.b16 %v577
      %v648 = vunpack.c.l.b16 %v578
      %v649 = vunpack.c.h.b16 %v578
      %v650 = vunpack.c.l.b16 %v579
      %v651 = vunpack.c.h.b16 %v579
      %v652 = vunpack.c.l.b16 %v580
      %v653 = vunpack.c.h.b16 %v580
      %v654 = vunpack.c.l.b16 %v581
      %v655 = vunpack.c.h.b16 %v581
      %v656 = vunpack.c.l.b16 %v582
      %v657 = vunpack.c.h.b16 %v582
      %v658 = vunpack.c.l.b16 %v583
      %v659 = vunpack.c.h.b16 %v583
      %v660 = vunpack.c.l.b16 %v584
      %v661 = vunpack.c.h.b16 %v584
      %v662 = vunpack.c.l.b16 %v585
      %v663 = vunpack.c.h.b16 %v585
      %v664 = vunpack.c.l.b16 %v586
      %v665 = vunpack.c.h.b16 %v586
      %v666 = vunpack.c.l.b16 %v587
      %v667 = vunpack.c.h.b16 %v587
      %v668 = vunpack.c.l.b16 %v588
      %v669 = vunpack.c.h.b16 %v588
      %v670 = vunpack.c.l.b16 %v589
      %v671 = vunpack.c.h.b16 %v589
      %v672 = vunpack.c.l.b16 %v590
      %v673 = vunpack.c.h.b16 %v590
      %v674 = vunpack.c.l.b16 %v591
      %v675 = vunpack.c.h.b16 %v591
      %v676 = vunpack.c.l.b16 %v592
      %v677 = vunpack.c.h.b16 %v592
      %v678 = vunpack.c.l.b16 %v593
      %v679 = vunpack.c.h.b16 %v593
      %v680 = vunpack.c.l.b16 %v594
      %v681 = vunpack.c.h.b16 %v594
      %v682 = vunpack.c.l.b16 %v595
      %v683 = vunpack.c.h.b16 %v595
      %v684 = vunpack.c.l.b16 %v596
      %v685 = vunpack.c.h.b16 %v596
      %v686 = vunpack.c.l.b16 %v597
      %v687 = vunpack.c.h.b16 %v597
      %v688 = vunpack.c.l.b16 %v598
      %v689 = vunpack.c.h.b16 %v598
      %v690 = vunpack.c.l.b16 %v599
      %v691 = vunpack.c.h.b16 %v599
      %v692 = vunpack.c.l.b16 %v600
      %v693 = vunpack.c.h.b16 %v600
      %v694 = vunpack.c.l.b16 %v601
      %v695 = vunpack.c.h.b16 %v601
      %v696 = vunpack.c.l.b16 %v602
      %v697 = vunpack.c.h.b16 %v602
      %v698 = vunpack.c.l.b16 %v603
      %v699 = vunpack.c.h.b16 %v603
      %v700 = vpack.c.b16 %v636, %v636
      %v701 = vpack.c.b16 %v637, %v637
      %v702 = vpack.c.b16 %v638, %v638
      %v703 = vpack.c.b16 %v639, %v639
      %v704 = vpack.c.b16 %v640, %v640
      %v705 = vpack.c.b16 %v641, %v641
      %v706 = vpack.c.b16 %v642, %v642
      %v707 = vpack.c.b16 %v643, %v643
      %v708 = vpack.c.b16 %v644, %v644
      %v709 = vpack.c.b16 %v645, %v645
      %v710 = vpack.c.b16 %v646, %v646
      %v711 = vpack.c.b16 %v647, %v647
      %v712 = vpack.c.b16 %v648, %v648
      %v713 = vpack.c.b16 %v649, %v649
      %v714 = vpack.c.b16 %v650, %v650
      %v715 = vpack.c.b16 %v651, %v651
      %v716 = vpack.c.b16 %v652, %v652
      %v717 = vpack.c.b16 %v653, %v653
      %v718 = vpack.c.b16 %v654, %v654
      %v719 = vpack.c.b16 %v655, %v655
      %v720 = vpack.c.b16 %v656, %v656
      %v721 = vpack.c.b16 %v657, %v657
      %v722 = vpack.c.b16 %v658, %v658
      %v723 = vpack.c.b16 %v659, %v659
      %v724 = vpack.c.b16 %v660, %v660
      %v725 = vpack.c.b16 %v661, %v661
      %v726 = vpack.c.b16 %v662, %v662
      %v727 = vpack.c.b16 %v663, %v663
      %v728 = vpack.c.b16 %v664, %v664
      %v729 = vpack.c.b16 %v665, %v665
      %v730 = vpack.c.b16 %v666, %v666
      %v731 = vpack.c.b16 %v667, %v667
      %v732 = vpack.c.b16 %v668, %v668
      %v733 = vpack.c.b16 %v669, %v669
      %v734 = vpack.c.b16 %v670, %v670
      %v735 = vpack.c.b16 %v671, %v671
      %v736 = vpack.c.b16 %v672, %v672
      %v737 = vpack.c.b16 %v673, %v673
      %v738 = vpack.c.b16 %v674, %v674
      %v739 = vpack.c.b16 %v675, %v675
      %v740 = vpack.c.b16 %v676, %v676
      %v741 = vpack.c.b16 %v677, %v677
      %v742 = vpack.c.b16 %v678, %v678
      %v743 = vpack.c.b16 %v679, %v679
      %v744 = vpack.c.b16 %v680, %v680
      %v745 = vpack.c.b16 %v681, %v681
      %v746 = vpack.c.b16 %v682, %v682
      %v747 = vpack.c.b16 %v683, %v683
      %v748 = vpack.c.b16 %v684, %v684
      %v749 = vpack.c.b16 %v685, %v685
      %v750 = vpack.c.b16 %v686, %v686
      %v751 = vpack.c.b16 %v687, %v687
      %v752 = vpack.c.b16 %v688, %v688
      %v753 = vpack.c.b16 %v689, %v689
      %v754 = vpack.c.b16 %v690, %v690
      %v755 = vpack.c.b16 %v691, %v691
      %v756 = vpack.c.b16 %v692, %v692
      %v757 = vpack.c.b16 %v693, %v693
      %v758 = vpack.c.b16 %v694, %v694
      %v759 = vpack.c.b16 %v695, %v695
      %v760 = vpack.c.b16 %v696, %v696
      %v761 = vpack.c.b16 %v697, %v697
      %v762 = vpack.c.b16 %v698, %v698
      %v763 = vpack.c.b16 %v699, %v699
      %828 = vst [vmem:[%s172] sm:$0xf] %v700
      %829 = vst [vmem:[%s172 + $0x4] sm:$0xf] %v701
      %830 = vst [vmem:[%s172 + $0x8] sm:$0xf] %v702
      %831 = vst [vmem:[%s172 + $0xc] sm:$0xf] %v703
      %832 = vst [vmem:[%s172 + $0x10] sm:$0xf] %v704
      %833 = vst [vmem:[%s172 + $0x14] sm:$0xf] %v705
      %834 = vst [vmem:[%s172 + $0x18] sm:$0xf] %v706
      %835 = vst [vmem:[%s172 + $0x1c] sm:$0xf] %v707
      %836 = vst [vmem:[%s172 + $0x20] sm:$0xf] %v708
      %837 = vst [vmem:[%s172 + $0x24] sm:$0xf] %v709
      %838 = vst [vmem:[%s172 + $0x28] sm:$0xf] %v710
      %839 = vst [vmem:[%s172 + $0x2c] sm:$0xf] %v711
      %840 = vst [vmem:[%s172 + $0x30] sm:$0xf] %v712
      %841 = vst [vmem:[%s172 + $0x34] sm:$0xf] %v713
      %842 = vst [vmem:[%s172 + $0x38] sm:$0xf] %v714
      %843 = vst [vmem:[%s172 + $0x3c] sm:$0xf] %v715
      %844 = vst [vmem:[%s172 + $0x40] sm:$0xf] %v716
      %845 = vst [vmem:[%s172 + $0x44] sm:$0xf] %v717
      %846 = vst [vmem:[%s172 + $0x48] sm:$0xf] %v718
      %847 = vst [vmem:[%s172 + $0x4c] sm:$0xf] %v719
      %848 = vst [vmem:[%s172 + $0x50] sm:$0xf] %v720
      %849 = vst [vmem:[%s172 + $0x54] sm:$0xf] %v721
      %850 = vst [vmem:[%s172 + $0x58] sm:$0xf] %v722
      %851 = vst [vmem:[%s172 + $0x5c] sm:$0xf] %v723
      %852 = vst [vmem:[%s172 + $0x60] sm:$0xf] %v724
      %853 = vst [vmem:[%s172 + $0x64] sm:$0xf] %v725
      %854 = vst [vmem:[%s172 + $0x68] sm:$0xf] %v726
      %855 = vst [vmem:[%s172 + $0x6c] sm:$0xf] %v727
      %856 = vst [vmem:[%s172 + $0x70] sm:$0xf] %v728
      %857 = vst [vmem:[%s172 + $0x74] sm:$0xf] %v729
      %858 = vst [vmem:[%s172 + $0x78] sm:$0xf] %v730
      %859 = vst [vmem:[%s172 + $0x7c] sm:$0xf] %v731
      %860 = vst [vmem:[%s172 + $0x80] sm:$0xf] %v732
      %861 = vst [vmem:[%s172 + $0x84] sm:$0xf] %v733
      %862 = vst [vmem:[%s172 + $0x88] sm:$0xf] %v734
      %863 = vst [vmem:[%s172 + $0x8c] sm:$0xf] %v735
      %864 = vst [vmem:[%s172 + $0x90] sm:$0xf] %v736
      %865 = vst [vmem:[%s172 + $0x94] sm:$0xf] %v737
      %866 = vst [vmem:[%s172 + $0x98] sm:$0xf] %v738
      %867 = vst [vmem:[%s172 + $0x9c] sm:$0xf] %v739
      %868 = vst [vmem:[%s172 + $0xa0] sm:$0xf] %v740
      %869 = vst [vmem:[%s172 + $0xa4] sm:$0xf] %v741
      %870 = vst [vmem:[%s172 + $0xa8] sm:$0xf] %v742
      %871 = vst [vmem:[%s172 + $0xac] sm:$0xf] %v743
      %872 = vst [vmem:[%s172 + $0xb0] sm:$0xf] %v744
      %873 = vst [vmem:[%s172 + $0xb4] sm:$0xf] %v745
      %874 = vst [vmem:[%s172 + $0xb8] sm:$0xf] %v746
      %875 = vst [vmem:[%s172 + $0xbc] sm:$0xf] %v747
      %876 = vst [vmem:[%s172 + $0xc0] sm:$0xf] %v748
      %877 = vst [vmem:[%s172 + $0xc4] sm:$0xf] %v749
      %878 = vst [vmem:[%s172 + $0xc8] sm:$0xf] %v750
      %879 = vst [vmem:[%s172 + $0xcc] sm:$0xf] %v751
      %880 = vst [vmem:[%s172 + $0xd0] sm:$0xf] %v752
      %881 = vst [vmem:[%s172 + $0xd4] sm:$0xf] %v753
      %882 = vst [vmem:[%s172 + $0xd8] sm:$0xf] %v754
      %883 = vst [vmem:[%s172 + $0xdc] sm:$0xf] %v755
      %884 = vst [vmem:[%s172 + $0xe0] sm:$0xf] %v756
      %885 = vst [vmem:[%s172 + $0xe4] sm:$0xf] %v757
      %886 = vst [vmem:[%s172 + $0xe8] sm:$0xf] %v758
      %887 = vst [vmem:[%s172 + $0xec] sm:$0xf] %v759
      %888 = vst [vmem:[%s172 + $0xf0] sm:$0xf] %v760
      %889 = vst [vmem:[%s172 + $0xf4] sm:$0xf] %v761
      %890 = vst [vmem:[%s172 + $0xf8] sm:$0xf] %v762
      %891 = vst [vmem:[%s172 + $0xfc] sm:$0xf] %v763
      %s892 = smul.u32 64, %s14
      %p893 = scmp.lt.s32.totalorder %s892, 127
      %s894 = scalar_select %p893, %s892, 127
      %s895 = smul.addr %s894, 4
      %s896 = scalar_lea.vmem %s3, %s895
      // Predicated region
      $region33: #{double_conv_forward.5} parent=31 // pred_check
        %p897 = pneg %p100
      $region34: #{double_conv_forward.5} parent=31 // pred_check_branch
        %899 = sbr.rel (%p897) target = $region36
      $region35: #{double_conv_forward.5} parent=31 // pred_region
        %s900 = smul.u32 64, %s14
      $region36: #{double_conv_forward.5} parent=31 // pred_fallthru
        _
    $region32: #{double_conv_forward.5} parent=5 // pred_fallthru
      _
    %p901 = scmp.le.s32.totalorder 2, %s9
    // Predicated region
    $region37: #{double_conv_forward.5} parent=5 // pred_check
      %p902 = pneg %p901
    $region38: #{double_conv_forward.5} parent=5 // pred_check_branch
      %904 = sbr.rel (%p902) target = $region40
    $region39: #{double_conv_forward.5} parent=5 // pred_region
      %s905 = ssub.s32 %s9, 2
      // Predicated region
      $region41: #{double_conv_forward.5} parent=39 // pred_check
        %p906 = pneg %p106
      $region42: #{double_conv_forward.5} parent=39 // pred_check_branch
        %908 = sbr.rel (%p906) target = $region44
      $region43: #{double_conv_forward.5} parent=39 // pred_region
        %s909 = smul.u32 64, %s15
        %p910 = scmp.lt.s32.totalorder %s909, 127
        %s911 = scalar_select %p910, %s909, 127
        %s912 = smul.addr %s911, 4
        %s913 = scalar_lea.vmem %s3, %s912
      $region44: #{double_conv_forward.5} parent=39 // pred_fallthru
        _
    $region40: #{double_conv_forward.5} parent=5 // pred_fallthru
      _
  $region6: #{double_conv_forward.5} parent=0 // loop_footer
    %s13 = sadd.s32 1, %s9
  $region7: #{double_conv_forward.5} parent=0 // loop_footer_branch
    %8 = sbr.rel target = $region3
  $region8: #{double_conv_forward.5} parent=0 // loop_exit
    _

// kernel: double_conv_forward.4
$region0: #{double_conv_forward.4}
  #allocation0 [shape = 'u32[]', space=smem, size = 0x4, offset = 0x4, fixed_abs, tag = 'smem constant byte address 0x4 - core index']
  #allocation1 [shape = 'u32[144,128]{1,0:T(1,128)}', space=vmem, size = 0x12000, scoped, tag = 'internal scratch']
  %s0 = inlined_call_operand.vmem [shape: bf16[2,640,36], index: 0, kind: input, shape index: {}]
  %s1 = inlined_call_operand.vmem [shape: bf16[3,36,128], index: 1, kind: input, shape index: {}]
  %s2 = inlined_call_operand.vmem [shape: f32[1,128], index: 2, kind: input, shape index: {}]
  %s3 = inlined_call_operand.vmem [shape: f32[1024,128], index: 3, kind: output, shape index: {0}]
  %s4 = inlined_call_operand.vmem [shape: f32[4,2,128], index: 4, kind: output, shape index: {1}]
  %5 = xla_tuple %s3, %s4
  %s6 = sld [smem:[#allocation0]]
  $region53: #{double_conv_forward.4} parent=0
    _
  %s8 = ssub.s32 1, %s6
  %s9 = scalar_select 0, %s8, %s6
  loop: start=0, step=1, limit=6
  $region2: #{double_conv_forward.4} parent=0 // loop_pre_header
    _
  $region3: #{double_conv_forward.4} parent=0 // loop_header
    %s11 = sphi 0, %s15
    %p12 = scmp.ge.s32.totalorder %s11, 6
    %s18 = sphi 0, %s30
    %s19 = sphi 0, %s26
    %s20 = sphi 0, %s18
    %s21 = sphi 0, %s19
    %s22 = sphi 0, %s20
    %s23 = sphi 0, %s21
    %s33 = sphi 0, %s35
    %s36 = sphi 0, %s33
    %s37 = sphi 0, %s36
    %s53 = sphi 0, %s37
    %s57 = sphi 0, %s57
    %s59 = sphi 0, %s57
    %s60 = sphi 0, %s59
    %s74 = sphi 0, %s60
    %s78 = sphi 0, %s78
    %s80 = sphi 0, %s78
    %s81 = sphi 0, %s80
    %s95 = sphi 0, %s81
    %s105 = sphi 0, %s107
    %s108 = sphi 0, %s105
    %s109 = sphi 0, %s108
    %s125 = sphi 0, %s109
    %s135 = sphi 0, %s137
    %s138 = sphi 0, %s135
    %s139 = sphi 0, %s138
    %s155 = sphi 0, %s139
  $region4: #{double_conv_forward.4} parent=0 // loop_header_branch
    %14 = sbr.rel (%p12) target = $region8
  $region5: #{double_conv_forward.4} parent=0 // loop_body
    %s16 = ssub.s32 %s11, 1
    %s17 = ssub.s32 %s11, 2
    %s24 = sadd.s32 1, %s19
    %p25 = scmp.ge.s32.totalorder %s24, 2
    %s26 = scalar_select %p25, 0, %s24
    %s27 = sadd.s32 1, %s18
    %s28 = scalar_select %p25, %s27, %s18
    %p29 = scmp.ge.s32.totalorder %s28, 2
    %s30 = scalar_select %p29, 0, %s28
    %s31 = ssub.s32 %s18, %s30
    %p32 = scmp.eq.s32.totalorder %s31, 0
    %s34 = sadd.s32 %s33, 1
    %s35 = scalar_select %p32, %s33, %s34
    %p38 = pneg %p32
    %p39 = scmp.eq.s32.totalorder %s11, 3
    %p40 = por %p38, %p39
    %p41 = scmp.ne.s32.totalorder %s33, %s36
    %p42 = scmp.eq.s32.totalorder %s11, 0
    %p43 = por %p41, %p42
    %p44 = scmp.ne.s32.totalorder %s33, %s36
    %p45 = scmp.eq.s32.totalorder %s16, 3
    %p46 = por %p44, %p45
    %p47 = scmp.ne.s32.totalorder %s36, %s37
    %p48 = scmp.eq.s32.totalorder %s16, 0
    %p49 = por %p47, %p48
    %p50 = scmp.ne.s32.totalorder %s36, %s37
    %p51 = scmp.eq.s32.totalorder %s17, 3
    %p52 = por %p50, %p51
    %p54 = scmp.ne.s32.totalorder %s37, %s53
    %p55 = scmp.eq.s32.totalorder %s17, 0
    %p56 = por %p54, %p55
    %s58 = sadd.s32 %s57, 1
    %p61 = scmp.eq.s32.totalorder %s11, 3
    %p62 = scmp.ne.s32.totalorder %s57, %s59
    %p63 = scmp.eq.s32.totalorder %s11, 0
    %p64 = por %p62, %p63
    %p65 = scmp.ne.s32.totalorder %s57, %s59
    %p66 = scmp.eq.s32.totalorder %s16, 3
    %p67 = por %p65, %p66
    %p68 = scmp.ne.s32.totalorder %s59, %s60
    %p69 = scmp.eq.s32.totalorder %s16, 0
    %p70 = por %p68, %p69
    %p71 = scmp.ne.s32.totalorder %s59, %s60
    %p72 = scmp.eq.s32.totalorder %s17, 3
    %p73 = por %p71, %p72
    %p75 = scmp.ne.s32.totalorder %s60, %s74
    %p76 = scmp.eq.s32.totalorder %s17, 0
    %p77 = por %p75, %p76
    %s79 = sadd.s32 %s78, 1
    %p82 = scmp.eq.s32.totalorder %s11, 3
    %p83 = scmp.ne.s32.totalorder %s78, %s80
    %p84 = scmp.eq.s32.totalorder %s11, 0
    %p85 = por %p83, %p84
    %p86 = scmp.ne.s32.totalorder %s78, %s80
    %p87 = scmp.eq.s32.totalorder %s16, 3
    %p88 = por %p86, %p87
    %p89 = scmp.ne.s32.totalorder %s80, %s81
    %p90 = scmp.eq.s32.totalorder %s16, 0
    %p91 = por %p89, %p90
    %p92 = scmp.ne.s32.totalorder %s80, %s81
    %p93 = scmp.eq.s32.totalorder %s17, 3
    %p94 = por %p92, %p93
    %p96 = scmp.ne.s32.totalorder %s81, %s95
    %p97 = scmp.eq.s32.totalorder %s17, 0
    %p98 = por %p96, %p97
    %s99 = smul.u32 %s18, 2
    %s100 = sadd.s32 %s99, %s19
    %s101 = smul.u32 %s30, 2
    %s102 = sadd.s32 %s101, %s26
    %s103 = ssub.s32 %s100, %s102
    %p104 = scmp.eq.s32.totalorder %s103, 0
    %s106 = sadd.s32 %s105, 1
    %s107 = scalar_select %p104, %s105, %s106
    %p110 = pneg %p104
    %p111 = scmp.eq.s32.totalorder %s11, 3
    %p112 = por %p110, %p111
    %p113 = scmp.ne.s32.totalorder %s105, %s108
    %p114 = scmp.eq.s32.totalorder %s11, 0
    %p115 = por %p113, %p114
    %p116 = scmp.ne.s32.totalorder %s105, %s108
    %p117 = scmp.eq.s32.totalorder %s16, 3
    %p118 = por %p116, %p117
    %p119 = scmp.ne.s32.totalorder %s108, %s109
    %p120 = scmp.eq.s32.totalorder %s16, 0
    %p121 = por %p119, %p120
    %p122 = scmp.ne.s32.totalorder %s108, %s109
    %p123 = scmp.eq.s32.totalorder %s17, 3
    %p124 = por %p122, %p123
    %p126 = scmp.ne.s32.totalorder %s109, %s125
    %p127 = scmp.eq.s32.totalorder %s17, 0
    %p128 = por %p126, %p127
    %s129 = smul.u32 %s18, 2
    %s130 = sadd.s32 %s129, %s19
    %s131 = smul.u32 %s30, 2
    %s132 = sadd.s32 %s131, %s26
    %s133 = ssub.s32 %s130, %s132
    %p134 = scmp.eq.s32.totalorder %s133, 0
    %s136 = sadd.s32 %s135, 1
    %s137 = scalar_select %p134, %s135, %s136
    %p140 = pneg %p134
    %p141 = scmp.eq.s32.totalorder %s11, 3
    %p142 = por %p140, %p141
    %p143 = scmp.ne.s32.totalorder %s135, %s138
    %p144 = scmp.eq.s32.totalorder %s11, 0
    %p145 = por %p143, %p144
    %p146 = scmp.ne.s32.totalorder %s135, %s138
    %p147 = scmp.eq.s32.totalorder %s16, 3
    %p148 = por %p146, %p147
    %p149 = scmp.ne.s32.totalorder %s138, %s139
    %p150 = scmp.eq.s32.totalorder %s16, 0
    %p151 = por %p149, %p150
    %p152 = scmp.ne.s32.totalorder %s138, %s139
    %p153 = scmp.eq.s32.totalorder %s17, 3
    %p154 = por %p152, %p153
    %p156 = scmp.ne.s32.totalorder %s139, %s155
    %p157 = scmp.eq.s32.totalorder %s17, 0
    %p158 = por %p156, %p157
    %p159 = scmp.le.s32.totalorder 1, %s11
    %p160 = scmp.lt.s32.totalorder %s11, 5
    %p161 = pnand %p159, %p160
    %p162 = pneg %p161
    // Predicated region
    $region9: #{double_conv_forward.4} parent=5 // pred_check
      _
    $region10: #{double_conv_forward.4} parent=5 // pred_check_branch
      %164 = sbr.rel (%p161) target = $region12
    $region11: #{double_conv_forward.4} parent=5 // pred_region
      %s165 = ssub.s32 %s11, 1
      // Predicated region
      $region13: #{double_conv_forward.4} parent=11 // pred_check
        %p166 = pneg %p70
      $region14: #{double_conv_forward.4} parent=11 // pred_check_branch
        %168 = sbr.rel (%p166) target = $region16
      $region15: #{double_conv_forward.4} parent=11 // pred_region
        _
      $region16: #{double_conv_forward.4} parent=11 // pred_fallthru
        _
      // Predicated region
      $region17: #{double_conv_forward.4} parent=11 // pred_check
        %p169 = pneg %p91
      $region18: #{double_conv_forward.4} parent=11 // pred_check_branch
        %171 = sbr.rel (%p169) target = $region20
      $region19: #{double_conv_forward.4} parent=11 // pred_region
        _
      $region20: #{double_conv_forward.4} parent=11 // pred_fallthru
        _
    $region12: #{double_conv_forward.4} parent=5 // pred_fallthru
      _
    %p172 = scmp.lt.s32.totalorder %s11, 4
    // Predicated region
    $region21: #{double_conv_forward.4} parent=5 // pred_check
      %p173 = pneg %p172
    $region22: #{double_conv_forward.4} parent=5 // pred_check_branch
      %175 = sbr.rel (%p173) target = $region24
    $region23: #{double_conv_forward.4} parent=5 // pred_region
      // Predicated region
      $region25: #{double_conv_forward.4} parent=23 // pred_check
        %p176 = pneg %p43
      $region26: #{double_conv_forward.4} parent=23 // pred_check_branch
        %178 = sbr.rel (%p176) target = $region28
      $region27: #{double_conv_forward.4} parent=23 // pred_region
        %p179 = scmp.lt.s32.totalorder %s18, 1
        %s180 = scalar_select %p179, %s18, 1
        %s181 = smul.addr %s180, 80
        %s182 = smul.addr %s181, 4
        %s183 = scalar_lea.vmem %s0, %s182
      $region28: #{double_conv_forward.4} parent=23 // pred_fallthru
        _
    $region24: #{double_conv_forward.4} parent=5 // pred_fallthru
      _
    %p184 = scmp.le.s32.totalorder 1, %s11
    %p185 = scmp.lt.s32.totalorder %s11, 5
    %p186 = pnand %p184, %p185
    %p187 = pneg %p186
    // Predicated region
    $region29: #{double_conv_forward.4} parent=5 // pred_check
      _
    $region30: #{double_conv_forward.4} parent=5 // pred_check_branch
      %189 = sbr.rel (%p186) target = $region32
    $region31: #{double_conv_forward.4} parent=5 // pred_region
      %s190 = ssub.s32 %s11, 1
      %p191 = scmp.lt.s32.totalorder %s20, 1
      %s192 = scalar_select %p191, %s20, 1
      %s193 = smul.addr %s192, 80
      %s194 = smul.addr %s193, 4
      %s195 = scalar_lea.vmem %s0, %s194
      %p196 = pneg %p49
      %p197 = pneg %p46
      %p198 = pneg %p70
      %p199 = pneg %p67
      %p200 = pneg %p91
      %p201 = pneg %p88
      %p202 = pneg %p121
      %p203 = pneg %p118
      %s204 = smul.u32 %s20, 2
      %s205 = sadd.s32 %s204, %s21
      %s206 = smul.u32 32, %s205
      %p207 = scmp.lt.s32.totalorder %s206, 127
      %s208 = scalar_select %p207, %s206, 127
      %s209 = smul.addr %s208, 8
      %s210 = scalar_lea.vmem %s3, %s209
      %p211 = pneg %p151
      %p212 = pneg %p148
      %s213 = smul.u32 %s20, 2
      %s214 = sadd.s32 %s213, %s21
      %p215 = scmp.lt.s32.totalorder %s214, 3
      %s216 = scalar_select %p215, %s214, 3
      %s217 = smul.addr %s216, 2
      %s218 = scalar_lea.vmem %s4, %s217
      %p219 = scmp.lt.s32.totalorder %s20, 1
      %s220 = scalar_select %p219, %s20, 1
      %s221 = smul.addr %s220, 80
      %s222 = smul.addr %s221, 4
      %s223 = scalar_lea.vmem %s0, %s222
      %s224 = smul.u32 %s20, 2
      %s225 = sadd.s32 %s224, %s21
      %s226 = smul.u32 32, %s225
      %p227 = scmp.lt.s32.totalorder %s226, 127
      %s228 = scalar_select %p227, %s226, 127
      %s229 = smul.addr %s228, 8
      %s230 = scalar_lea.vmem %s3, %s229
      %s231 = smul.u32 %s20, 2
      %s232 = sadd.s32 %s231, %s21
      %s233 = smul.u32 32, %s232
      %s234 = smul.u32 %s20, 2
      %s235 = sadd.s32 %s234, %s21
      %p236 = scmp.lt.s32.totalorder %s235, 3
      %s237 = scalar_select %p236, %s235, 3
      %s238 = smul.addr %s237, 2
      %s239 = scalar_lea.vmem %s4, %s238
      %s240 = smul.u32 %s20, 2
      %s241 = sadd.s32 %s240, %s21
      %s243 = smul.u32 %s21, 256
      %s244 = sshra.s32 %s243, 3
      %s245 = sand.u32 %s243, 7
      %s246 = smul.addr %s244, 4
      %s247 = scalar_lea.vmem %s223, %s246
      %v248 = vld [vmem:[%s247] sm:$0xf]
      %v249 = vld [vmem:[%s247 + $0x4] sm:$0xf]
      %v250 = vld [vmem:[%s247 + $0x8] sm:$0xf]
      %v251 = vld [vmem:[%s247 + $0xc] sm:$0xf]
      %v252 = vld [vmem:[%s247 + $0x10] sm:$0xf]
      %v253 = vld [vmem:[%s247 + $0x14] sm:$0xf]
      %v254 = vld [vmem:[%s247 + $0x18] sm:$0xf]
      %v255 = vld [vmem:[%s247 + $0x1c] sm:$0xf]
      %v256 = vld [vmem:[%s247 + $0x20] sm:$0xf]
      %v257 = vld [vmem:[%s247 + $0x24] sm:$0xf]
      %v258 = vld [vmem:[%s247 + $0x28] sm:$0xf]
      %v259 = vld [vmem:[%s247 + $0x2c] sm:$0xf]
      %v260 = vld [vmem:[%s247 + $0x30] sm:$0xf]
      %v261 = vld [vmem:[%s247 + $0x34] sm:$0xf]
      %v262 = vld [vmem:[%s247 + $0x38] sm:$0xf]
      %v263 = vld [vmem:[%s247 + $0x3c] sm:$0xf]
      %v264 = vld [vmem:[%s247 + $0x40] sm:$0xf]
      %v265 = vld [vmem:[%s247 + $0x44] sm:$0xf]
      %v266 = vld [vmem:[%s247 + $0x48] sm:$0xf]
      %v267 = vld [vmem:[%s247 + $0x4c] sm:$0xf]
      %v268 = vld [vmem:[%s247 + $0x50] sm:$0xf]
      %v269 = vld [vmem:[%s247 + $0x54] sm:$0xf]
      %v270 = vld [vmem:[%s247 + $0x58] sm:$0xf]
      %v271 = vld [vmem:[%s247 + $0x5c] sm:$0xf]
      %v272 = vld [vmem:[%s247 + $0x60] sm:$0xf]
      %v273 = vld [vmem:[%s247 + $0x64] sm:$0xf]
      %v274 = vld [vmem:[%s247 + $0x68] sm:$0xf]
      %v275 = vld [vmem:[%s247 + $0x6c] sm:$0xf]
      %v276 = vld [vmem:[%s247 + $0x70] sm:$0xf]
      %v277 = vld [vmem:[%s247 + $0x74] sm:$0xf]
      %v278 = vld [vmem:[%s247 + $0x78] sm:$0xf]
      %v279 = vld [vmem:[%s247 + $0x7c] sm:$0xf]
      %v280 = vld [vmem:[%s1] sm:$0xf]
      %v281 = vld [vmem:[%s1 + $0x4] sm:$0xf]
      %v282 = vld [vmem:[%s1 + $0x8] sm:$0xf]
      %v283 = vld [vmem:[%s1 + $0xc] sm:$0xf]
      %v284 = vld [vmem:[%s1 + $0x10] sm:$0x3]
      %s285 = smul.u32 %s21, 4
      %s286 = sadd.s32 %s285, 1
      %s287 = smul.u32 %s286, 64
      %s288 = sshra.s32 %s287, 3
      %s289 = sand.u32 %s287, 7
      %s290 = smul.addr %s288, 4
      %s291 = scalar_lea.vmem %s223, %s290
      %v292 = vld [vmem:[%s291] sm:$0xf]
      %v293 = vld [vmem:[%s291 + $0x4] sm:$0xf]
      %v294 = vld [vmem:[%s291 + $0x8] sm:$0xf]
      %v295 = vld [vmem:[%s291 + $0xc] sm:$0xf]
      %v296 = vld [vmem:[%s291 + $0x10] sm:$0xf]
      %v297 = vld [vmem:[%s291 + $0x14] sm:$0xf]
      %v298 = vld [vmem:[%s291 + $0x18] sm:$0xf]
      %v299 = vld [vmem:[%s291 + $0x1c] sm:$0xf]
      %v300 = vld [vmem:[%s291 + $0x20] sm:$0xf]
      %v301 = vld [vmem:[%s291 + $0x24] sm:$0xf]
      %v302 = vld [vmem:[%s291 + $0x28] sm:$0xf]
      %v303 = vld [vmem:[%s291 + $0x2c] sm:$0xf]
      %v304 = vld [vmem:[%s291 + $0x30] sm:$0xf]
      %v305 = vld [vmem:[%s291 + $0x34] sm:$0xf]
      %v306 = vld [vmem:[%s291 + $0x38] sm:$0xf]
      %v307 = vld [vmem:[%s291 + $0x3c] sm:$0xf]
      %v308 = vld [vmem:[%s291 + $0x40] sm:$0xf]
      %v309 = vld [vmem:[%s291 + $0x44] sm:$0xf]
      %v310 = vld [vmem:[%s291 + $0x48] sm:$0xf]
      %v311 = vld [vmem:[%s291 + $0x4c] sm:$0xf]
      %v312 = vld [vmem:[%s291 + $0x50] sm:$0xf]
      %v313 = vld [vmem:[%s291 + $0x54] sm:$0xf]
      %v314 = vld [vmem:[%s291 + $0x58] sm:$0xf]
      %v315 = vld [vmem:[%s291 + $0x5c] sm:$0xf]
      %v316 = vld [vmem:[%s291 + $0x60] sm:$0xf]
      %v317 = vld [vmem:[%s291 + $0x64] sm:$0xf]
      %v318 = vld [vmem:[%s291 + $0x68] sm:$0xf]
      %v319 = vld [vmem:[%s291 + $0x6c] sm:$0xf]
      %v320 = vld [vmem:[%s291 + $0x70] sm:$0xf]
      %v321 = vld [vmem:[%s291 + $0x74] sm:$0xf]
      %v322 = vld [vmem:[%s291 + $0x78] sm:$0xf]
      %v323 = vld [vmem:[%s291 + $0x7c] sm:$0xf]
      %s324 = scalar_lea.vmem %s1, 20
      %v325 = vld [vmem:[%s324] sm:$0xf]
      %v326 = vld [vmem:[%s324 + $0x4] sm:$0xf]
      %v327 = vld [vmem:[%s324 + $0x8] sm:$0xf]
      %v328 = vld [vmem:[%s324 + $0xc] sm:$0xf]
      %v329 = vld [vmem:[%s324 + $0x10] sm:$0x3]
      %v362 = vunpack.c.l.b16 %v292
      %v363 = vunpack.c.l.b16 %v293
      %v364 = vunpack.c.l.b16 %v294
      %v365 = vunpack.c.l.b16 %v295
      %v366 = vunpack.c.l.b16 %v296
      %v367 = vunpack.c.l.b16 %v297
      %v368 = vunpack.c.l.b16 %v298
      %v369 = vunpack.c.l.b16 %v299
      %v370 = vunpack.c.l.b16 %v300
      %v371 = vunpack.c.l.b16 %v301
      %v372 = vunpack.c.l.b16 %v302
      %v373 = vunpack.c.l.b16 %v303
      %v374 = vunpack.c.l.b16 %v304
      %v375 = vunpack.c.l.b16 %v305
      %v376 = vunpack.c.l.b16 %v306
      %v377 = vunpack.c.l.b16 %v307
      %v378 = vunpack.c.l.b16 %v308
      %v379 = vunpack.c.l.b16 %v309
      %v380 = vunpack.c.l.b16 %v310
      %v381 = vunpack.c.l.b16 %v311
      %v382 = vunpack.c.l.b16 %v312
      %v383 = vunpack.c.l.b16 %v313
      %v384 = vunpack.c.l.b16 %v314
      %v385 = vunpack.c.l.b16 %v315
      %v386 = vunpack.c.l.b16 %v316
      %v387 = vunpack.c.l.b16 %v317
      %v388 = vunpack.c.l.b16 %v318
      %v389 = vunpack.c.l.b16 %v319
      %v390 = vunpack.c.l.b16 %v320
      %v391 = vunpack.c.l.b16 %v321
      %v392 = vunpack.c.l.b16 %v322
      %v393 = vunpack.c.l.b16 %v323
      %v394 = vpack.c.b16 %v363, %v362
      %v395 = vpack.c.b16 %v365, %v364
      %v396 = vpack.c.b16 %v367, %v366
      %v397 = vpack.c.b16 %v369, %v368
      %v398 = vpack.c.b16 %v371, %v370
      %v399 = vpack.c.b16 %v373, %v372
      %v400 = vpack.c.b16 %v375, %v374
      %v401 = vpack.c.b16 %v377, %v376
      %v402 = vpack.c.b16 %v379, %v378
      %v403 = vpack.c.b16 %v381, %v380
      %v404 = vpack.c.b16 %v383, %v382
      %v405 = vpack.c.b16 %v385, %v384
      %v406 = vpack.c.b16 %v387, %v386
      %v407 = vpack.c.b16 %v389, %v388
      %v408 = vpack.c.b16 %v391, %v390
      %v409 = vpack.c.b16 %v393, %v392
      %v415 = vunpack.c.l.b16 %v325
      %v416 = vunpack.c.l.b16 %v326
      %v417 = vunpack.c.l.b16 %v327
      %v418 = vunpack.c.l.b16 %v328
      %v419 = vunpack.c.l.b16 %v329
      %v420 = vpack.c.b16 %v416, %v415
      %v421 = vpack.c.b16 %v418, %v417
      %v422 = vpack.c.b16 %v419, %v419
      %vm425 = vcmask 293888
      %v427 = vsel %vm425, %v394, 0
      %v430 = vsel %vm425, %v395, 0
      %v433 = vsel %vm425, %v396, 0
      %v436 = vsel %vm425, %v397, 0
      %v439 = vsel %vm425, %v398, 0
      %v442 = vsel %vm425, %v399, 0
      %v445 = vsel %vm425, %v400, 0
      %v448 = vsel %vm425, %v401, 0
      %v451 = vsel %vm425, %v402, 0
      %v454 = vsel %vm425, %v403, 0
      %v457 = vsel %vm425, %v404, 0
      %v460 = vsel %vm425, %v405, 0
      %v463 = vsel %vm425, %v406, 0
      %v466 = vsel %vm425, %v407, 0
      %v469 = vsel %vm425, %v408, 0
      %v472 = vsel %vm425, %v409, 0
      %vm474 = vcmask 1041408
      %v476 = vsel %vm474, %v422, 0
      %478 = vmatprep.subr.bf16.mxu0 0
      %479 = vmatpush1.bf16.msra.mxu0 0
      %480 = vmatprep.subr.bf16.mxu0 0
      %481 = vmatpush1.bf16.msra.mxu0 0
      %482 = vmatprep.subr.bf16.mxu0 0
      %483 = vmatpush1.bf16.msra.mxu0 0
      %484 = vmatprep.subr.bf16.mxu0 0
      %485 = vmatpush1.bf16.msra.mxu0 0
      %486 = vmatprep.subr.bf16.mxu0 0
      %487 = vmatpush1.bf16.msra.mxu0 0
      %488 = vmatprep.subr.bf16.mxu0 0
      %489 = vmatpush1.bf16.msra.mxu0 %v476
      %490 = vmatprep.subr.bf16.mxu0 0
      %491 = vmatpush1.bf16.msra.mxu0 %v421
      %492 = vmatprep.subr.bf16.mxu0 0
      %493 = vmatpush1.bf16.msra.mxu0 %v420
      %494 = vmatprep.subr.bf16.mxu0 0
      %495 = vmatpush2.bf16.msra.mxu0 0
      %496 = vmatprep.subr.bf16.mxu0 0
      %497 = vmatpush2.bf16.msra.mxu0 0
      %498 = vmatprep.subr.bf16.mxu0 0
      %499 = vmatpush2.bf16.msra.mxu0 0
      %500 = vmatprep.subr.bf16.mxu0 0
      %501 = vmatpush2.bf16.msra.mxu0 0
      %502 = vmatprep.subr.bf16.mxu0 0
      %503 = vmatpush2.bf16.msra.mxu0 0
      %504 = vmatprep.subr.bf16.mxu0 0
      %505 = vmatpush2.bf16.msra.mxu0 0
      %506 = vmatprep.subr.bf16.mxu0 0
      %507 = vmatpush2.bf16.msra.mxu0 0
      %508 = vmatprep.subr.bf16.mxu0 0
      %509 = vmatpush2.bf16.msra.mxu0 0
      %510 = vmatprep.mubr.bf16.mxu0 0
      %511 = vmatmul.mubr.bf16.gmra.mxu0 %v427
      %v512 = vpop.f32.mrf.mxu0
      %v513 = vadd.f32 0.0, %v512
      %v514 = vpop.f32.mrf.mxu0
      %v515 = vpop.f32.mrf.mxu0
      %v516 = vadd.f32 0.0, %v515
      %v517 = vpop.f32.mrf.mxu0
      %518 = vmatprep.mubr.bf16.mxu0 0
      %519 = vmatmul.mubr.bf16.gmra.mxu0 %v430
      %v520 = vpop.f32.mrf.mxu0
      %v521 = vadd.f32 0.0, %v520
      %v522 = vpop.f32.mrf.mxu0
      %v523 = vpop.f32.mrf.mxu0
      %v524 = vadd.f32 0.0, %v523
      %v525 = vpop.f32.mrf.mxu0
      %526 = vmatprep.mubr.bf16.mxu0 0
      %527 = vmatmul.mubr.bf16.gmra.mxu0 %v433
      %v528 = vpop.f32.mrf.mxu0
      %v529 = vadd.f32 0.0, %v528
      %v530 = vpop.f32.mrf.mxu0
      %v531 = vpop.f32.mrf.mxu0
      %v532 = vadd.f32 0.0, %v531
      %v533 = vpop.f32.mrf.mxu0
      %534 = vmatprep.mubr.bf16.mxu0 0
      %535 = vmatmul.mubr.bf16.gmra.mxu0 %v436
      %v536 = vpop.f32.mrf.mxu0
      %v537 = vadd.f32 0.0, %v536
      %v538 = vpop.f32.mrf.mxu0
      %v539 = vpop.f32.mrf.mxu0
      %v540 = vadd.f32 0.0, %v539
      %v541 = vpop.f32.mrf.mxu0
      %542 = vmatprep.mubr.bf16.mxu0 0
      %543 = vmatmul.mubr.bf16.gmra.mxu0 %v439
      %v544 = vpop.f32.mrf.mxu0
      %v545 = vadd.f32 0.0, %v544
      %v546 = vpop.f32.mrf.mxu0
      %v547 = vpop.f32.mrf.mxu0
      %v548 = vadd.f32 0.0, %v547
      %v549 = vpop.f32.mrf.mxu0
      %550 = vmatprep.mubr.bf16.mxu0 0
      %551 = vmatmul.mubr.bf16.gmra.mxu0 %v442
      %v552 = vpop.f32.mrf.mxu0
      %v553 = vadd.f32 0.0, %v552
      %v554 = vpop.f32.mrf.mxu0
      %v555 = vpop.f32.mrf.mxu0
      %v556 = vadd.f32 0.0, %v555
      %v557 = vpop.f32.mrf.mxu0
      %558 = vmatprep.mubr.bf16.mxu0 0
      %559 = vmatmul.mubr.bf16.gmra.mxu0 %v445
      %v560 = vpop.f32.mrf.mxu0
      %v561 = vadd.f32 0.0, %v560
      %v562 = vpop.f32.mrf.mxu0
      %v563 = vpop.f32.mrf.mxu0
      %v564 = vadd.f32 0.0, %v563
      %v565 = vpop.f32.mrf.mxu0
      %566 = vmatprep.mubr.bf16.mxu0 0
      %567 = vmatmul.mubr.bf16.gmra.mxu0 %v448
      %v568 = vpop.f32.mrf.mxu0
      %v569 = vadd.f32 0.0, %v568
      %v570 = vpop.f32.mrf.mxu0
      %v571 = vpop.f32.mrf.mxu0
      %v572 = vadd.f32 0.0, %v571
      %v573 = vpop.f32.mrf.mxu0
      %574 = vmatprep.mubr.bf16.mxu0 0
      %575 = vmatmul.mubr.bf16.gmra.mxu0 %v451
      %v576 = vpop.f32.mrf.mxu0
      %v577 = vadd.f32 0.0, %v576
      %v578 = vpop.f32.mrf.mxu0
      %v579 = vpop.f32.mrf.mxu0
      %v580 = vadd.f32 0.0, %v579
      %v581 = vpop.f32.mrf.mxu0
      %582 = vmatprep.mubr.bf16.mxu0 0
      %583 = vmatmul.mubr.bf16.gmra.mxu0 %v454
      %v584 = vpop.f32.mrf.mxu0
      %v585 = vadd.f32 0.0, %v584
      %v586 = vpop.f32.mrf.mxu0
      %v587 = vpop.f32.mrf.mxu0
      %v588 = vadd.f32 0.0, %v587
      %v589 = vpop.f32.mrf.mxu0
      %590 = vmatprep.mubr.bf16.mxu0 0
      %591 = vmatmul.mubr.bf16.gmra.mxu0 %v457
      %v592 = vpop.f32.mrf.mxu0
      %v593 = vadd.f32 0.0, %v592
      %v594 = vpop.f32.mrf.mxu0
      %v595 = vpop.f32.mrf.mxu0
      %v596 = vadd.f32 0.0, %v595
      %v597 = vpop.f32.mrf.mxu0
      %598 = vmatprep.mubr.bf16.mxu0 0
      %599 = vmatmul.mubr.bf16.gmra.mxu0 %v460
      %v600 = vpop.f32.mrf.mxu0
      %v601 = vadd.f32 0.0, %v600
      %v602 = vpop.f32.mrf.mxu0
      %v603 = vpop.f32.mrf.mxu0
      %v604 = vadd.f32 0.0, %v603
      %v605 = vpop.f32.mrf.mxu0
      %606 = vmatprep.mubr.bf16.mxu0 0
      %607 = vmatmul.mubr.bf16.gmra.mxu0 %v463
      %v608 = vpop.f32.mrf.mxu0
      %v609 = vadd.f32 0.0, %v608
      %v610 = vpop.f32.mrf.mxu0
      %v611 = vpop.f32.mrf.mxu0
      %v612 = vadd.f32 0.0, %v611
      %v613 = vpop.f32.mrf.mxu0
      %614 = vmatprep.mubr.bf16.mxu0 0
      %615 = vmatmul.mubr.bf16.gmra.mxu0 %v466
      %v616 = vpop.f32.mrf.mxu0
      %v617 = vadd.f32 0.0, %v616
      %v618 = vpop.f32.mrf.mxu0
      %v619 = vpop.f32.mrf.mxu0
      %v620 = vadd.f32 0.0, %v619
      %v621 = vpop.f32.mrf.mxu0
      %622 = vmatprep.mubr.bf16.mxu0 0
      %623 = vmatmul.mubr.bf16.gmra.mxu0 %v469
      %v624 = vpop.f32.mrf.mxu0
      %v625 = vadd.f32 0.0, %v624
      %v626 = vpop.f32.mrf.mxu0
      %v627 = vpop.f32.mrf.mxu0
      %v628 = vadd.f32 0.0, %v627
      %v629 = vpop.f32.mrf.mxu0
      %630 = vmatprep.mubr.bf16.mxu0 0
      %631 = vmatmul.mubr.bf16.gmra.mxu0 %v472
      %v632 = vpop.f32.mrf.mxu0
      %v633 = vadd.f32 0.0, %v632
      %v634 = vpop.f32.mrf.mxu0
      %v635 = vpop.f32.mrf.mxu0
      %v636 = vadd.f32 0.0, %v635
      %v637 = vpop.f32.mrf.mxu0
      %638 = vdwg.mxu0
      %v671 = vunpack.c.l.b16 %v248
      %v672 = vunpack.c.l.b16 %v249
      %v673 = vunpack.c.l.b16 %v250
      %v674 = vunpack.c.l.b16 %v251
      %v675 = vunpack.c.l.b16 %v252
      %v676 = vunpack.c.l.b16 %v253
      %v677 = vunpack.c.l.b16 %v254
      %v678 = vunpack.c.l.b16 %v255
      %v679 = vunpack.c.l.b16 %v256
      %v680 = vunpack.c.l.b16 %v257
      %v681 = vunpack.c.l.b16 %v258
      %v682 = vunpack.c.l.b16 %v259
      %v683 = vunpack.c.l.b16 %v260
      %v684 = vunpack.c.l.b16 %v261
      %v685 = vunpack.c.l.b16 %v262
      %v686 = vunpack.c.l.b16 %v263
      %v687 = vunpack.c.l.b16 %v264
      %v688 = vunpack.c.l.b16 %v265
      %v689 = vunpack.c.l.b16 %v266
      %v690 = vunpack.c.l.b16 %v267
      %v691 = vunpack.c.l.b16 %v268
      %v692 = vunpack.c.l.b16 %v269
      %v693 = vunpack.c.l.b16 %v270
      %v694 = vunpack.c.l.b16 %v271
      %v695 = vunpack.c.l.b16 %v272
      %v696 = vunpack.c.l.b16 %v273
      %v697 = vunpack.c.l.b16 %v274
      %v698 = vunpack.c.l.b16 %v275
      %v699 = vunpack.c.l.b16 %v276
      %v700 = vunpack.c.l.b16 %v277
      %v701 = vunpack.c.l.b16 %v278
      %v702 = vunpack.c.l.b16 %v279
      %v703 = vpack.c.b16 %v672, %v671
      %v704 = vpack.c.b16 %v674, %v673
      %v705 = vpack.c.b16 %v676, %v675
      %v706 = vpack.c.b16 %v678, %v677
      %v707 = vpack.c.b16 %v680, %v679
      %v708 = vpack.c.b16 %v682, %v681
      %v709 = vpack.c.b16 %v684, %v683
      %v710 = vpack.c.b16 %v686, %v685
      %v711 = vpack.c.b16 %v688, %v687
      %v712 = vpack.c.b16 %v690, %v689
      %v713 = vpack.c.b16 %v692, %v691
      %v714 = vpack.c.b16 %v694, %v693
      %v715 = vpack.c.b16 %v696, %v695
      %v716 = vpack.c.b16 %v698, %v697
      %v717 = vpack.c.b16 %v700, %v699
      %v718 = vpack.c.b16 %v702, %v701
      %v724 = vunpack.c.l.b16 %v280
      %v725 = vunpack.c.l.b16 %v281
      %v726 = vunpack.c.l.b16 %v282
      %v727 = vunpack.c.l.b16 %v283
      %v728 = vunpack.c.l.b16 %v284
      %v729 = vpack.c.b16 %v725, %v724
      %v730 = vpack.c.b16 %v727, %v726
      %v731 = vpack.c.b16 %v728, %v728
      %v735 = vsel %vm425, %v703, 0
      %v738 = vsel %vm425, %v704, 0
      %v741 = vsel %vm425, %v705, 0
      %v744 = vsel %vm425, %v706, 0
      %v747 = vsel %vm425, %v707, 0
      %v750 = vsel %vm425, %v708, 0
      %v753 = vsel %vm425, %v709, 0
      %v756 = vsel %vm425, %v710, 0
      %v759 = vsel %vm425, %v711, 0
      %v762 = vsel %vm425, %v712, 0
      %v765 = vsel %vm425, %v713, 0
      %v768 = vsel %vm425, %v714, 0
      %v771 = vsel %vm425, %v715, 0
      %v774 = vsel %vm425, %v716, 0
      %v777 = vsel %vm425, %v717, 0
      %v780 = vsel %vm425, %v718, 0
      %v783 = vsel %vm474, %v731, 0
      %785 = vmatprep.subr.bf16.mxu0 0
      %786 = vmatpush1.bf16.msra.mxu0 0
      %787 = vmatprep.subr.bf16.mxu0 0
      %788 = vmatpush1.bf16.msra.mxu0 0
      %789 = vmatprep.subr.bf16.mxu0 0
      %790 = vmatpush1.bf16.msra.mxu0 0
      %791 = vmatprep.subr.bf16.mxu0 0
      %792 = vmatpush1.bf16.msra.mxu0 0
      %793 = vmatprep.subr.bf16.mxu0 0
      %794 = vmatpush1.bf16.msra.mxu0 0
      %795 = vmatprep.subr.bf16.mxu0 0
      %796 = vmatpush1.bf16.msra.mxu0 %v783
      %797 = vmatprep.subr.bf16.mxu0 0
      %798 = vmatpush1.bf16.msra.mxu0 %v730
      %799 = vmatprep.subr.bf16.mxu0 0
      %800 = vmatpush1.bf16.msra.mxu0 %v729
      %801 = vmatprep.subr.bf16.mxu0 0
      %802 = vmatpush2.bf16.msra.mxu0 0
      %803 = vmatprep.subr.bf16.mxu0 0
      %804 = vmatpush2.bf16.msra.mxu0 0
      %805 = vmatprep.subr.bf16.mxu0 0
      %806 = vmatpush2.bf16.msra.mxu0 0
      %807 = vmatprep.subr.bf16.mxu0 0
      %808 = vmatpush2.bf16.msra.mxu0 0
      %809 = vmatprep.subr.bf16.mxu0 0
      %810 = vmatpush2.bf16.msra.mxu0 0
      %811 = vmatprep.subr.bf16.mxu0 0
      %812 = vmatpush2.bf16.msra.mxu0 0
      %813 = vmatprep.subr.bf16.mxu0 0
      %814 = vmatpush2.bf16.msra.mxu0 0
      %815 = vmatprep.subr.bf16.mxu0 0
      %816 = vmatpush2.bf16.msra.mxu0 0
      %817 = vmatprep.mubr.bf16.mxu0 0
      %818 = vmatmul.mubr.bf16.gmra.mxu0 %v735
      %v819 = vpop.f32.mrf.mxu0
      %v820 = vadd.f32 %v513, %v819
      %v821 = vpop.f32.mrf.mxu0
      %v822 = vpop.f32.mrf.mxu0
      %v823 = vadd.f32 %v516, %v822
      %v824 = vpop.f32.mrf.mxu0
      %825 = vmatprep.mubr.bf16.mxu0 0
      %826 = vmatmul.mubr.bf16.gmra.mxu0 %v738
      %v827 = vpop.f32.mrf.mxu0
      %v828 = vadd.f32 %v521, %v827
      %v829 = vpop.f32.mrf.mxu0
      %v830 = vpop.f32.mrf.mxu0
      %v831 = vadd.f32 %v524, %v830
      %v832 = vpop.f32.mrf.mxu0
      %833 = vmatprep.mubr.bf16.mxu0 0
      %834 = vmatmul.mubr.bf16.gmra.mxu0 %v741
      %v835 = vpop.f32.mrf.mxu0
      %v836 = vadd.f32 %v529, %v835
      %v837 = vpop.f32.mrf.mxu0
      %v838 = vpop.f32.mrf.mxu0
      %v839 = vadd.f32 %v532, %v838
      %v840 = vpop.f32.mrf.mxu0
      %841 = vmatprep.mubr.bf16.mxu0 0
      %842 = vmatmul.mubr.bf16.gmra.mxu0 %v744
      %v843 = vpop.f32.mrf.mxu0
      %v844 = vadd.f32 %v537, %v843
      %v845 = vpop.f32.mrf.mxu0
      %v846 = vpop.f32.mrf.mxu0
      %v847 = vadd.f32 %v540, %v846
      %v848 = vpop.f32.mrf.mxu0
      %849 = vmatprep.mubr.bf16.mxu0 0
      %850 = vmatmul.mubr.bf16.gmra.mxu0 %v747
      %v851 = vpop.f32.mrf.mxu0
      %v852 = vadd.f32 %v545, %v851
      %v853 = vpop.f32.mrf.mxu0
      %v854 = vpop.f32.mrf.mxu0
      %v855 = vadd.f32 %v548, %v854
      %v856 = vpop.f32.mrf.mxu0
      %857 = vmatprep.mubr.bf16.mxu0 0
      %858 = vmatmul.mubr.bf16.gmra.mxu0 %v750
      %v859 = vpop.f32.mrf.mxu0
      %v860 = vadd.f32 %v553, %v859
      %v861 = vpop.f32.mrf.mxu0
      %v862 = vpop.f32.mrf.mxu0
      %v863 = vadd.f32 %v556, %v862
      %v864 = vpop.f32.mrf.mxu0
      %865 = vmatprep.mubr.bf16.mxu0 0
      %866 = vmatmul.mubr.bf16.gmra.mxu0 %v753
      %v867 = vpop.f32.mrf.mxu0
      %v868 = vadd.f32 %v561, %v867
      %v869 = vpop.f32.mrf.mxu0
      %v870 = vpop.f32.mrf.mxu0
      %v871 = vadd.f32 %v564, %v870
      %v872 = vpop.f32.mrf.mxu0
      %873 = vmatprep.mubr.bf16.mxu0 0
      %874 = vmatmul.mubr.bf16.gmra.mxu0 %v756
      %v875 = vpop.f32.mrf.mxu0
      %v876 = vadd.f32 %v569, %v875
      %v877 = vpop.f32.mrf.mxu0
      %v878 = vpop.f32.mrf.mxu0
      %v879 = vadd.f32 %v572, %v878
      %v880 = vpop.f32.mrf.mxu0
      %881 = vmatprep.mubr.bf16.mxu0 0
      %882 = vmatmul.mubr.bf16.gmra.mxu0 %v759
      %v883 = vpop.f32.mrf.mxu0
      %v884 = vadd.f32 %v577, %v883
      %v885 = vpop.f32.mrf.mxu0
      %v886 = vpop.f32.mrf.mxu0
      %v887 = vadd.f32 %v580, %v886
      %v888 = vpop.f32.mrf.mxu0
      %889 = vmatprep.mubr.bf16.mxu0 0
      %890 = vmatmul.mubr.bf16.gmra.mxu0 %v762
      %v891 = vpop.f32.mrf.mxu0
      %v892 = vadd.f32 %v585, %v891
      %v893 = vpop.f32.mrf.mxu0
      %v894 = vpop.f32.mrf.mxu0
      %v895 = vadd.f32 %v588, %v894
      %v896 = vpop.f32.mrf.mxu0
      %897 = vmatprep.mubr.bf16.mxu0 0
      %898 = vmatmul.mubr.bf16.gmra.mxu0 %v765
      %v899 = vpop.f32.mrf.mxu0
      %v900 = vadd.f32 %v593, %v899
      %v901 = vpop.f32.mrf.mxu0
      %v902 = vpop.f32.mrf.mxu0
      %v903 = vadd.f32 %v596, %v902
      %v904 = vpop.f32.mrf.mxu0
      %905 = vmatprep.mubr.bf16.mxu0 0
      %906 = vmatmul.mubr.bf16.gmra.mxu0 %v768
      %v907 = vpop.f32.mrf.mxu0
      %v908 = vadd.f32 %v601, %v907
      %v909 = vpop.f32.mrf.mxu0
      %v910 = vpop.f32.mrf.mxu0
      %v911 = vadd.f32 %v604, %v910
      %v912 = vpop.f32.mrf.mxu0
      %913 = vmatprep.mubr.bf16.mxu0 0
      %914 = vmatmul.mubr.bf16.gmra.mxu0 %v771
      %v915 = vpop.f32.mrf.mxu0
      %v916 = vadd.f32 %v609, %v915
      %v917 = vpop.f32.mrf.mxu0
      %v918 = vpop.f32.mrf.mxu0
      %v919 = vadd.f32 %v612, %v918
      %v920 = vpop.f32.mrf.mxu0
      %921 = vmatprep.mubr.bf16.mxu0 0
      %922 = vmatmul.mubr.bf16.gmra.mxu0 %v774
      %v923 = vpop.f32.mrf.mxu0
      %v924 = vadd.f32 %v617, %v923
      %v925 = vpop.f32.mrf.mxu0
      %v926 = vpop.f32.mrf.mxu0
      %v927 = vadd.f32 %v620, %v926
      %v928 = vpop.f32.mrf.mxu0
      %929 = vmatprep.mubr.bf16.mxu0 0
      %930 = vmatmul.mubr.bf16.gmra.mxu0 %v777
      %v931 = vpop.f32.mrf.mxu0
      %v932 = vadd.f32 %v625, %v931
      %v933 = vpop.f32.mrf.mxu0
      %v934 = vpop.f32.mrf.mxu0
      %v935 = vadd.f32 %v628, %v934
      %v936 = vpop.f32.mrf.mxu0
      %937 = vmatprep.mubr.bf16.mxu0 0
      %938 = vmatmul.mubr.bf16.gmra.mxu0 %v780
      %v939 = vpop.f32.mrf.mxu0
      %v940 = vadd.f32 %v633, %v939
      %v941 = vpop.f32.mrf.mxu0
      %v942 = vpop.f32.mrf.mxu0
      %v943 = vadd.f32 %v636, %v942
      %v944 = vpop.f32.mrf.mxu0
      %945 = vdwg.mxu0
      %s946 = sadd.s32 %s285, 2
      %s947 = smul.u32 %s946, 64
      %s948 = sshra.s32 %s947, 3
      %s949 = sand.u32 %s947, 7
      %s950 = smul.addr %s948, 4
      %s951 = scalar_lea.vmem %s223, %s950
      %v952 = vld [vmem:[%s951] sm:$0xf]
      %v953 = vld [vmem:[%s951 + $0x4] sm:$0xf]
      %v954 = vld [vmem:[%s951 + $0x8] sm:$0xf]
      %v955 = vld [vmem:[%s951 + $0xc] sm:$0xf]
      %v956 = vld [vmem:[%s951 + $0x10] sm:$0xf]
      %v957 = vld [vmem:[%s951 + $0x14] sm:$0xf]
      %v958 = vld [vmem:[%s951 + $0x18] sm:$0xf]
      %v959 = vld [vmem:[%s951 + $0x1c] sm:$0xf]
      %v960 = vld [vmem:[%s951 + $0x20] sm:$0xf]
      %v961 = vld [vmem:[%s951 + $0x24] sm:$0xf]
      %v962 = vld [vmem:[%s951 + $0x28] sm:$0xf]
      %v963 = vld [vmem:[%s951 + $0x2c] sm:$0xf]
      %v964 = vld [vmem:[%s951 + $0x30] sm:$0xf]
      %v965 = vld [vmem:[%s951 + $0x34] sm:$0xf]
      %v966 = vld [vmem:[%s951 + $0x38] sm:$0xf]
      %v967 = vld [vmem:[%s951 + $0x3c] sm:$0xf]
      %v968 = vld [vmem:[%s951 + $0x40] sm:$0xf]
      %v969 = vld [vmem:[%s951 + $0x44] sm:$0xf]
      %v970 = vld [vmem:[%s951 + $0x48] sm:$0xf]
      %v971 = vld [vmem:[%s951 + $0x4c] sm:$0xf]
      %v972 = vld [vmem:[%s951 + $0x50] sm:$0xf]
      %v973 = vld [vmem:[%s951 + $0x54] sm:$0xf]
      %v974 = vld [vmem:[%s951 + $0x58] sm:$0xf]
      %v975 = vld [vmem:[%s951 + $0x5c] sm:$0xf]
      %v976 = vld [vmem:[%s951 + $0x60] sm:$0xf]
      %v977 = vld [vmem:[%s951 + $0x64] sm:$0xf]
      %v978 = vld [vmem:[%s951 + $0x68] sm:$0xf]
      %v979 = vld [vmem:[%s951 + $0x6c] sm:$0xf]
      %v980 = vld [vmem:[%s951 + $0x70] sm:$0xf]
      %v981 = vld [vmem:[%s951 + $0x74] sm:$0xf]
      %v982 = vld [vmem:[%s951 + $0x78] sm:$0xf]
      %v983 = vld [vmem:[%s951 + $0x7c] sm:$0xf]
      %s984 = scalar_lea.vmem %s1, 40
      %v985 = vld [vmem:[%s984] sm:$0xf]
      %v986 = vld [vmem:[%s984 + $0x4] sm:$0xf]
      %v987 = vld [vmem:[%s984 + $0x8] sm:$0xf]
      %v988 = vld [vmem:[%s984 + $0xc] sm:$0xf]
      %v989 = vld [vmem:[%s984 + $0x10] sm:$0x3]
      %v1022 = vunpack.c.l.b16 %v952
      %v1023 = vunpack.c.l.b16 %v953
      %v1024 = vunpack.c.l.b16 %v954
      %v1025 = vunpack.c.l.b16 %v955
      %v1026 = vunpack.c.l.b16 %v956
      %v1027 = vunpack.c.l.b16 %v957
      %v1028 = vunpack.c.l.b16 %v958
      %v1029 = vunpack.c.l.b16 %v959
      %v1030 = vunpack.c.l.b16 %v960
      %v1031 = vunpack.c.l.b16 %v961
      %v1032 = vunpack.c.l.b16 %v962
      %v1033 = vunpack.c.l.b16 %v963
      %v1034 = vunpack.c.l.b16 %v964
      %v1035 = vunpack.c.l.b16 %v965
      %v1036 = vunpack.c.l.b16 %v966
      %v1037 = vunpack.c.l.b16 %v967
      %v1038 = vunpack.c.l.b16 %v968
      %v1039 = vunpack.c.l.b16 %v969
      %v1040 = vunpack.c.l.b16 %v970
      %v1041 = vunpack.c.l.b16 %v971
      %v1042 = vunpack.c.l.b16 %v972
      %v1043 = vunpack.c.l.b16 %v973
      %v1044 = vunpack.c.l.b16 %v974
      %v1045 = vunpack.c.l.b16 %v975
      %v1046 = vunpack.c.l.b16 %v976
      %v1047 = vunpack.c.l.b16 %v977
      %v1048 = vunpack.c.l.b16 %v978
      %v1049 = vunpack.c.l.b16 %v979
      %v1050 = vunpack.c.l.b16 %v980
      %v1051 = vunpack.c.l.b16 %v981
      %v1052 = vunpack.c.l.b16 %v982
      %v1053 = vunpack.c.l.b16 %v983
      %v1054 = vpack.c.b16 %v1023, %v1022
      %v1055 = vpack.c.b16 %v1025, %v1024
      %v1056 = vpack.c.b16 %v1027, %v1026
      %v1057 = vpack.c.b16 %v1029, %v1028
      %v1058 = vpack.c.b16 %v1031, %v1030
      %v1059 = vpack.c.b16 %v1033, %v1032
      %v1060 = vpack.c.b16 %v1035, %v1034
      %v1061 = vpack.c.b16 %v1037, %v1036
      %v1062 = vpack.c.b16 %v1039, %v1038
      %v1063 = vpack.c.b16 %v1041, %v1040
      %v1064 = vpack.c.b16 %v1043, %v1042
      %v1065 = vpack.c.b16 %v1045, %v1044
      %v1066 = vpack.c.b16 %v1047, %v1046
      %v1067 = vpack.c.b16 %v1049, %v1048
      %v1068 = vpack.c.b16 %v1051, %v1050
      %v1069 = vpack.c.b16 %v1053, %v1052
      %v1075 = vunpack.c.l.b16 %v985
      %v1076 = vunpack.c.l.b16 %v986
      %v1077 = vunpack.c.l.b16 %v987
      %v1078 = vunpack.c.l.b16 %v988
      %v1079 = vunpack.c.l.b16 %v989
      %v1080 = vpack.c.b16 %v1076, %v1075
      %v1081 = vpack.c.b16 %v1078, %v1077
      %v1082 = vpack.c.b16 %v1079, %v1079
      %v1086 = vsel %vm425, %v1054, 0
      %v1089 = vsel %vm425, %v1055, 0
      %v1092 = vsel %vm425, %v1056, 0
      %v1095 = vsel %vm425, %v1057, 0
      %v1098 = vsel %vm425, %v1058, 0
      %v1101 = vsel %vm425, %v1059, 0
      %v1104 = vsel %vm425, %v1060, 0
      %v1107 = vsel %vm425, %v1061, 0
      %v1110 = vsel %vm425, %v1062, 0
      %v1113 = vsel %vm425, %v1063, 0
      %v1116 = vsel %vm425, %v1064, 0
      %v1119 = vsel %vm425, %v1065, 0
      %v1122 = vsel %vm425, %v1066, 0
      %v1125 = vsel %vm425, %v1067, 0
      %v1128 = vsel %vm425, %v1068, 0
      %v1131 = vsel %vm425, %v1069, 0
      %v1134 = vsel %vm474, %v1082, 0
      %1136 = vmatprep.subr.bf16.mxu0 0
      %1137 = vmatpush1.bf16.msra.mxu0 0
      %1138 = vmatprep.subr.bf16.mxu0 0
      %1139 = vmatpush1.bf16.msra.mxu0 0
      %1140 = vmatprep.subr.bf16.mxu0 0
      %1141 = vmatpush1.bf16.msra.mxu0 0
      %1142 = vmatprep.subr.bf16.mxu0 0
      %1143 = vmatpush1.bf16.msra.mxu0 0
      %1144 = vmatprep.subr.bf16.mxu0 0
      %1145 = vmatpush1.bf16.msra.mxu0 0
      %1146 = vmatprep.subr.bf16.mxu0 0
      %1147 = vmatpush1.bf16.msra.mxu0 %v1134
      %1148 = vmatprep.subr.bf16.mxu0 0
      %1149 = vmatpush1.bf16.msra.mxu0 %v1081
      %1150 = vmatprep.subr.bf16.mxu0 0
      %1151 = vmatpush1.bf16.msra.mxu0 %v1080
      %1152 = vmatprep.subr.bf16.mxu0 0
      %1153 = vmatpush2.bf16.msra.mxu0 0
      %1154 = vmatprep.subr.bf16.mxu0 0
      %1155 = vmatpush2.bf16.msra.mxu0 0
      %1156 = vmatprep.subr.bf16.mxu0 0
      %1157 = vmatpush2.bf16.msra.mxu0 0
      %1158 = vmatprep.subr.bf16.mxu0 0
      %1159 = vmatpush2.bf16.msra.mxu0 0
      %1160 = vmatprep.subr.bf16.mxu0 0
      %1161 = vmatpush2.bf16.msra.mxu0 0
      %1162 = vmatprep.subr.bf16.mxu0 0
      %1163 = vmatpush2.bf16.msra.mxu0 0
      %1164 = vmatprep.subr.bf16.mxu0 0
      %1165 = vmatpush2.bf16.msra.mxu0 0
      %1166 = vmatprep.subr.bf16.mxu0 0
      %1167 = vmatpush2.bf16.msra.mxu0 0
      %1168 = vmatprep.mubr.bf16.mxu0 0
      %1169 = vmatmul.mubr.bf16.gmra.mxu0 %v1086
      %v1170 = vpop.f32.mrf.mxu0
      %v1171 = vadd.f32 0.0, %v1170
      %v1172 = vpop.f32.mrf.mxu0
      %v1173 = vpop.f32.mrf.mxu0
      %v1174 = vadd.f32 0.0, %v1173
      %v1175 = vpop.f32.mrf.mxu0
      %1176 = vmatprep.mubr.bf16.mxu0 0
      %1177 = vmatmul.mubr.bf16.gmra.mxu0 %v1089
      %v1178 = vpop.f32.mrf.mxu0
      %v1179 = vadd.f32 0.0, %v1178
      %v1180 = vpop.f32.mrf.mxu0
      %v1181 = vpop.f32.mrf.mxu0
      %v1182 = vadd.f32 0.0, %v1181
      %v1183 = vpop.f32.mrf.mxu0
      %1184 = vmatprep.mubr.bf16.mxu0 0
      %1185 = vmatmul.mubr.bf16.gmra.mxu0 %v1092
      %v1186 = vpop.f32.mrf.mxu0
      %v1187 = vadd.f32 0.0, %v1186
      %v1188 = vpop.f32.mrf.mxu0
      %v1189 = vpop.f32.mrf.mxu0
      %v1190 = vadd.f32 0.0, %v1189
      %v1191 = vpop.f32.mrf.mxu0
      %1192 = vmatprep.mubr.bf16.mxu0 0
      %1193 = vmatmul.mubr.bf16.gmra.mxu0 %v1095
      %v1194 = vpop.f32.mrf.mxu0
      %v1195 = vadd.f32 0.0, %v1194
      %v1196 = vpop.f32.mrf.mxu0
      %v1197 = vpop.f32.mrf.mxu0
      %v1198 = vadd.f32 0.0, %v1197
      %v1199 = vpop.f32.mrf.mxu0
      %1200 = vmatprep.mubr.bf16.mxu0 0
      %1201 = vmatmul.mubr.bf16.gmra.mxu0 %v1098
      %v1202 = vpop.f32.mrf.mxu0
      %v1203 = vadd.f32 0.0, %v1202
      %v1204 = vpop.f32.mrf.mxu0
      %v1205 = vpop.f32.mrf.mxu0
      %v1206 = vadd.f32 0.0, %v1205
      %v1207 = vpop.f32.mrf.mxu0
      %1208 = vmatprep.mubr.bf16.mxu0 0
      %1209 = vmatmul.mubr.bf16.gmra.mxu0 %v1101
      %v1210 = vpop.f32.mrf.mxu0
      %v1211 = vadd.f32 0.0, %v1210
      %v1212 = vpop.f32.mrf.mxu0
      %v1213 = vpop.f32.mrf.mxu0
      %v1214 = vadd.f32 0.0, %v1213
      %v1215 = vpop.f32.mrf.mxu0
      %1216 = vmatprep.mubr.bf16.mxu0 0
      %1217 = vmatmul.mubr.bf16.gmra.mxu0 %v1104
      %v1218 = vpop.f32.mrf.mxu0
      %v1219 = vadd.f32 0.0, %v1218
      %v1220 = vpop.f32.mrf.mxu0
      %v1221 = vpop.f32.mrf.mxu0
      %v1222 = vadd.f32 0.0, %v1221
      %v1223 = vpop.f32.mrf.mxu0
      %1224 = vmatprep.mubr.bf16.mxu0 0
      %1225 = vmatmul.mubr.bf16.gmra.mxu0 %v1107
      %v1226 = vpop.f32.mrf.mxu0
      %v1227 = vadd.f32 0.0, %v1226
      %v1228 = vpop.f32.mrf.mxu0
      %v1229 = vpop.f32.mrf.mxu0
      %v1230 = vadd.f32 0.0, %v1229
      %v1231 = vpop.f32.mrf.mxu0
      %1232 = vmatprep.mubr.bf16.mxu0 0
      %1233 = vmatmul.mubr.bf16.gmra.mxu0 %v1110
      %v1234 = vpop.f32.mrf.mxu0
      %v1235 = vadd.f32 0.0, %v1234
      %v1236 = vpop.f32.mrf.mxu0
      %v1237 = vpop.f32.mrf.mxu0
      %v1238 = vadd.f32 0.0, %v1237
      %v1239 = vpop.f32.mrf.mxu0
      %1240 = vmatprep.mubr.bf16.mxu0 0
      %1241 = vmatmul.mubr.bf16.gmra.mxu0 %v1113
      %v1242 = vpop.f32.mrf.mxu0
      %v1243 = vadd.f32 0.0, %v1242
      %v1244 = vpop.f32.mrf.mxu0
      %v1245 = vpop.f32.mrf.mxu0
      %v1246 = vadd.f32 0.0, %v1245
      %v1247 = vpop.f32.mrf.mxu0
      %1248 = vmatprep.mubr.bf16.mxu0 0
      %1249 = vmatmul.mubr.bf16.gmra.mxu0 %v1116
      %v1250 = vpop.f32.mrf.mxu0
      %v1251 = vadd.f32 0.0, %v1250
      %v1252 = vpop.f32.mrf.mxu0
      %v1253 = vpop.f32.mrf.mxu0
      %v1254 = vadd.f32 0.0, %v1253
      %v1255 = vpop.f32.mrf.mxu0
      %1256 = vmatprep.mubr.bf16.mxu0 0
      %1257 = vmatmul.mubr.bf16.gmra.mxu0 %v1119
      %v1258 = vpop.f32.mrf.mxu0
      %v1259 = vadd.f32 0.0, %v1258
      %v1260 = vpop.f32.mrf.mxu0
      %v1261 = vpop.f32.mrf.mxu0
      %v1262 = vadd.f32 0.0, %v1261
      %v1263 = vpop.f32.mrf.mxu0
      %1264 = vmatprep.mubr.bf16.mxu0 0
      %1265 = vmatmul.mubr.bf16.gmra.mxu0 %v1122
      %v1266 = vpop.f32.mrf.mxu0
      %v1267 = vadd.f32 0.0, %v1266
      %v1268 = vpop.f32.mrf.mxu0
      %v1269 = vpop.f32.mrf.mxu0
      %v1270 = vadd.f32 0.0, %v1269
      %v1271 = vpop.f32.mrf.mxu0
      %1272 = vmatprep.mubr.bf16.mxu0 0
      %1273 = vmatmul.mubr.bf16.gmra.mxu0 %v1125
      %v1274 = vpop.f32.mrf.mxu0
      %v1275 = vadd.f32 0.0, %v1274
      %v1276 = vpop.f32.mrf.mxu0
      %v1277 = vpop.f32.mrf.mxu0
      %v1278 = vadd.f32 0.0, %v1277
      %v1279 = vpop.f32.mrf.mxu0
      %1280 = vmatprep.mubr.bf16.mxu0 0
      %1281 = vmatmul.mubr.bf16.gmra.mxu0 %v1128
      %v1282 = vpop.f32.mrf.mxu0
      %v1283 = vadd.f32 0.0, %v1282
      %v1284 = vpop.f32.mrf.mxu0
      %v1285 = vpop.f32.mrf.mxu0
      %v1286 = vadd.f32 0.0, %v1285
      %v1287 = vpop.f32.mrf.mxu0
      %1288 = vmatprep.mubr.bf16.mxu0 0
      %1289 = vmatmul.mubr.bf16.gmra.mxu0 %v1131
      %v1290 = vpop.f32.mrf.mxu0
      %v1291 = vadd.f32 0.0, %v1290
      %v1292 = vpop.f32.mrf.mxu0
      %v1293 = vpop.f32.mrf.mxu0
      %v1294 = vadd.f32 0.0, %v1293
      %v1295 = vpop.f32.mrf.mxu0
      %1296 = vdwg.mxu0
      %v1297 = vadd.f32 %v820, %v1171
      %v1298 = vadd.f32 %v823, %v1174
      %v1299 = vadd.f32 %v828, %v1179
      %v1300 = vadd.f32 %v831, %v1182
      %v1301 = vadd.f32 %v836, %v1187
      %v1302 = vadd.f32 %v839, %v1190
      %v1303 = vadd.f32 %v844, %v1195
      %v1304 = vadd.f32 %v847, %v1198
      %v1305 = vadd.f32 %v852, %v1203
      %v1306 = vadd.f32 %v855, %v1206
      %v1307 = vadd.f32 %v860, %v1211
      %v1308 = vadd.f32 %v863, %v1214
      %v1309 = vadd.f32 %v868, %v1219
      %v1310 = vadd.f32 %v871, %v1222
      %v1311 = vadd.f32 %v876, %v1227
      %v1312 = vadd.f32 %v879, %v1230
      %v1313 = vadd.f32 %v884, %v1235
      %v1314 = vadd.f32 %v887, %v1238
      %v1315 = vadd.f32 %v892, %v1243
      %v1316 = vadd.f32 %v895, %v1246
      %v1317 = vadd.f32 %v900, %v1251
      %v1318 = vadd.f32 %v903, %v1254
      %v1319 = vadd.f32 %v908, %v1259
      %v1320 = vadd.f32 %v911, %v1262
      %v1321 = vadd.f32 %v916, %v1267
      %v1322 = vadd.f32 %v919, %v1270
      %v1323 = vadd.f32 %v924, %v1275
      %v1324 = vadd.f32 %v927, %v1278
      %v1325 = vadd.f32 %v932, %v1283
      %v1326 = vadd.f32 %v935, %v1286
      %v1327 = vadd.f32 %v940, %v1291
      %v1328 = vadd.f32 %v943, %v1294
      %v1329 = vld [vmem:[%s2] sm:$0x1]
      %v1331 = vlaneseq
      %v1332 = vshrl.u32 %v1331, 7
      %v1333 = vsub.s32 0, %v1332
      %v1334 = vrot.slane %v1329, %v1333
      %v1336 = vadd.f32 %v1297, %v1334
      %v1337 = vadd.f32 %v1298, %v1334
      %v1338 = vadd.f32 %v1299, %v1334
      %v1339 = vadd.f32 %v1300, %v1334
      %v1340 = vadd.f32 %v1301, %v1334
      %v1341 = vadd.f32 %v1302, %v1334
      %v1342 = vadd.f32 %v1303, %v1334
      %v1343 = vadd.f32 %v1304, %v1334
      %v1344 = vadd.f32 %v1305, %v1334
      %v1345 = vadd.f32 %v1306, %v1334
      %v1346 = vadd.f32 %v1307, %v1334
      %v1347 = vadd.f32 %v1308, %v1334
      %v1348 = vadd.f32 %v1309, %v1334
      %v1349 = vadd.f32 %v1310, %v1334
      %v1350 = vadd.f32 %v1311, %v1334
      %v1351 = vadd.f32 %v1312, %v1334
      %v1352 = vadd.f32 %v1313, %v1334
      %v1353 = vadd.f32 %v1314, %v1334
      %v1354 = vadd.f32 %v1315, %v1334
      %v1355 = vadd.f32 %v1316, %v1334
      %v1356 = vadd.f32 %v1317, %v1334
      %v1357 = vadd.f32 %v1318, %v1334
      %v1358 = vadd.f32 %v1319, %v1334
      %v1359 = vadd.f32 %v1320, %v1334
      %v1360 = vadd.f32 %v1321, %v1334
      %v1361 = vadd.f32 %v1322, %v1334
      %v1362 = vadd.f32 %v1323, %v1334
      %v1363 = vadd.f32 %v1324, %v1334
      %v1364 = vadd.f32 %v1325, %v1334
      %v1365 = vadd.f32 %v1326, %v1334
      %v1366 = vadd.f32 %v1327, %v1334
      %v1367 = vadd.f32 %v1328, %v1334
      %1368 = vst [vmem:[%s230] sm:$0xff] %v1336
      %1369 = vst [vmem:[%s230 + $0x8] sm:$0xff] %v1337
      %1370 = vst [vmem:[%s230 + $0x10] sm:$0xff] %v1338
      %1371 = vst [vmem:[%s230 + $0x18] sm:$0xff] %v1339
      %1372 = vst [vmem:[%s230 + $0x20] sm:$0xff] %v1340
      %1373 = vst [vmem:[%s230 + $0x28] sm:$0xff] %v1341
      %1374 = vst [vmem:[%s230 + $0x30] sm:$0xff] %v1342
      %1375 = vst [vmem:[%s230 + $0x38] sm:$0xff] %v1343
      %1376 = vst [vmem:[%s230 + $0x40] sm:$0xff] %v1344
      %1377 = vst [vmem:[%s230 + $0x48] sm:$0xff] %v1345
      %1378 = vst [vmem:[%s230 + $0x50] sm:$0xff] %v1346
      %1379 = vst [vmem:[%s230 + $0x58] sm:$0xff] %v1347
      %1380 = vst [vmem:[%s230 + $0x60] sm:$0xff] %v1348
      %1381 = vst [vmem:[%s230 + $0x68] sm:$0xff] %v1349
      %1382 = vst [vmem:[%s230 + $0x70] sm:$0xff] %v1350
      %1383 = vst [vmem:[%s230 + $0x78] sm:$0xff] %v1351
      %1384 = vst [vmem:[%s230 + $0x80] sm:$0xff] %v1352
      %1385 = vst [vmem:[%s230 + $0x88] sm:$0xff] %v1353
      %1386 = vst [vmem:[%s230 + $0x90] sm:$0xff] %v1354
      %1387 = vst [vmem:[%s230 + $0x98] sm:$0xff] %v1355
      %1388 = vst [vmem:[%s230 + $0xa0] sm:$0xff] %v1356
      %1389 = vst [vmem:[%s230 + $0xa8] sm:$0xff] %v1357
      %1390 = vst [vmem:[%s230 + $0xb0] sm:$0xff] %v1358
      %1391 = vst [vmem:[%s230 + $0xb8] sm:$0xff] %v1359
      %1392 = vst [vmem:[%s230 + $0xc0] sm:$0xff] %v1360
      %1393 = vst [vmem:[%s230 + $0xc8] sm:$0xff] %v1361
      %1394 = vst [vmem:[%s230 + $0xd0] sm:$0xff] %v1362
      %1395 = vst [vmem:[%s230 + $0xd8] sm:$0xff] %v1363
      %1396 = vst [vmem:[%s230 + $0xe0] sm:$0xff] %v1364
      %1397 = vst [vmem:[%s230 + $0xe8] sm:$0xff] %v1365
      %1398 = vst [vmem:[%s230 + $0xf0] sm:$0xff] %v1366
      %1399 = vst [vmem:[%s230 + $0xf8] sm:$0xff] %v1367
      %v1400 = vadd.f32 %v1336, %v1337
      %v1401 = vadd.f32 %v1400, %v1338
      %v1402 = vadd.f32 %v1401, %v1339
      %v1403 = vadd.f32 %v1402, %v1340
      %v1404 = vadd.f32 %v1403, %v1341
      %v1405 = vadd.f32 %v1404, %v1342
      %v1406 = vadd.f32 %v1405, %v1343
      %v1407 = vadd.f32 %v1406, %v1344
      %v1408 = vadd.f32 %v1407, %v1345
      %v1409 = vadd.f32 %v1408, %v1346
      %v1410 = vadd.f32 %v1409, %v1347
      %v1411 = vadd.f32 %v1410, %v1348
      %v1412 = vadd.f32 %v1411, %v1349
      %v1413 = vadd.f32 %v1412, %v1350
      %v1414 = vadd.f32 %v1413, %v1351
      %v1415 = vadd.f32 %v1414, %v1352
      %v1416 = vadd.f32 %v1415, %v1353
      %v1417 = vadd.f32 %v1416, %v1354
      %v1418 = vadd.f32 %v1417, %v1355
      %v1419 = vadd.f32 %v1418, %v1356
      %v1420 = vadd.f32 %v1419, %v1357
      %v1421 = vadd.f32 %v1420, %v1358
      %v1422 = vadd.f32 %v1421, %v1359
      %v1423 = vadd.f32 %v1422, %v1360
      %v1424 = vadd.f32 %v1423, %v1361
      %v1425 = vadd.f32 %v1424, %v1362
      %v1426 = vadd.f32 %v1425, %v1363
      %v1427 = vadd.f32 %v1426, %v1364
      %v1428 = vadd.f32 %v1427, %v1365
      %v1429 = vadd.f32 %v1428, %v1366
      %v1430 = vadd.f32 %v1429, %v1367
      %v1431 = vrot.slane %v1430, 4
      %v1432 = vadd.f32 %v1430, %v1431
      %v1433 = vrot.slane %v1432, 2
      %v1434 = vadd.f32 %v1432, %v1433
      %v1435 = vrot.slane %v1434, 1
      %v1436 = vadd.f32 %v1434, %v1435
      %v1437 = vmul.f32 %v1336, %v1336
      %v1438 = vmul.f32 %v1337, %v1337
      %v1439 = vmul.f32 %v1338, %v1338
      %v1440 = vmul.f32 %v1339, %v1339
      %v1441 = vmul.f32 %v1340, %v1340
      %v1442 = vmul.f32 %v1341, %v1341
      %v1443 = vmul.f32 %v1342, %v1342
      %v1444 = vmul.f32 %v1343, %v1343
      %v1445 = vmul.f32 %v1344, %v1344
      %v1446 = vmul.f32 %v1345, %v1345
      %v1447 = vmul.f32 %v1346, %v1346
      %v1448 = vmul.f32 %v1347, %v1347
      %v1449 = vmul.f32 %v1348, %v1348
      %v1450 = vmul.f32 %v1349, %v1349
      %v1451 = vmul.f32 %v1350, %v1350
      %v1452 = vmul.f32 %v1351, %v1351
      %v1453 = vmul.f32 %v1352, %v1352
      %v1454 = vmul.f32 %v1353, %v1353
      %v1455 = vmul.f32 %v1354, %v1354
      %v1456 = vmul.f32 %v1355, %v1355
      %v1457 = vmul.f32 %v1356, %v1356
      %v1458 = vmul.f32 %v1357, %v1357
      %v1459 = vmul.f32 %v1358, %v1358
      %v1460 = vmul.f32 %v1359, %v1359
      %v1461 = vmul.f32 %v1360, %v1360
      %v1462 = vmul.f32 %v1361, %v1361
      %v1463 = vmul.f32 %v1362, %v1362
      %v1464 = vmul.f32 %v1363, %v1363
      %v1465 = vmul.f32 %v1364, %v1364
      %v1466 = vmul.f32 %v1365, %v1365
      %v1467 = vmul.f32 %v1366, %v1366
      %v1468 = vmul.f32 %v1367, %v1367
      %v1469 = vadd.f32 %v1437, %v1438
      %v1470 = vadd.f32 %v1469, %v1439
      %v1471 = vadd.f32 %v1470, %v1440
      %v1472 = vadd.f32 %v1471, %v1441
      %v1473 = vadd.f32 %v1472, %v1442
      %v1474 = vadd.f32 %v1473, %v1443
      %v1475 = vadd.f32 %v1474, %v1444
      %v1476 = vadd.f32 %v1475, %v1445
      %v1477 = vadd.f32 %v1476, %v1446
      %v1478 = vadd.f32 %v1477, %v1447
      %v1479 = vadd.f32 %v1478, %v1448
      %v1480 = vadd.f32 %v1479, %v1449
      %v1481 = vadd.f32 %v1480, %v1450
      %v1482 = vadd.f32 %v1481, %v1451
      %v1483 = vadd.f32 %v1482, %v1452
      %v1484 = vadd.f32 %v1483, %v1453
      %v1485 = vadd.f32 %v1484, %v1454
      %v1486 = vadd.f32 %v1485, %v1455
      %v1487 = vadd.f32 %v1486, %v1456
      %v1488 = vadd.f32 %v1487, %v1457
      %v1489 = vadd.f32 %v1488, %v1458
      %v1490 = vadd.f32 %v1489, %v1459
      %v1491 = vadd.f32 %v1490, %v1460
      %v1492 = vadd.f32 %v1491, %v1461
      %v1493 = vadd.f32 %v1492, %v1462
      %v1494 = vadd.f32 %v1493, %v1463
      %v1495 = vadd.f32 %v1494, %v1464
      %v1496 = vadd.f32 %v1495, %v1465
      %v1497 = vadd.f32 %v1496, %v1466
      %v1498 = vadd.f32 %v1497, %v1467
      %v1499 = vadd.f32 %v1498, %v1468
      %v1500 = vrot.slane %v1499, 4
      %v1501 = vadd.f32 %v1499, %v1500
      %v1502 = vrot.slane %v1501, 2
      %v1503 = vadd.f32 %v1501, %v1502
      %v1504 = vrot.slane %v1503, 1
      %v1505 = vadd.f32 %v1503, %v1504
      %vm1506 = vcmask 1040384
      %v1507 = vsel %vm1506, %v1436, %v1505
      %1508 = vst [vmem:[%s239] sm:$0x3] %v1507
      %s1509 = smul.u32 %s20, 2
      %s1510 = sadd.s32 %s1509, %s21
      %s1511 = smul.u32 32, %s1510
      %p1512 = scmp.lt.s32.totalorder %s1511, 127
      %s1513 = scalar_select %p1512, %s1511, 127
      %s1514 = smul.addr %s1513, 8
      %s1515 = scalar_lea.vmem %s3, %s1514
      %s1516 = smul.u32 %s20, 2
      %s1517 = sadd.s32 %s1516, %s21
      %p1518 = scmp.lt.s32.totalorder %s1517, 3
      %s1519 = scalar_select %p1518, %s1517, 3
      %s1520 = smul.addr %s1519, 2
      %s1521 = scalar_lea.vmem %s4, %s1520
      // Predicated region
      $region33: #{double_conv_forward.4} parent=31 // pred_check
        %p1522 = pneg %p118
      $region34: #{double_conv_forward.4} parent=31 // pred_check_branch
        %1524 = sbr.rel (%p1522) target = $region36
      $region35: #{double_conv_forward.4} parent=31 // pred_region
        %s1525 = smul.u32 %s20, 2
        %s1526 = sadd.s32 %s1525, %s21
        %s1527 = smul.u32 32, %s1526
      $region36: #{double_conv_forward.4} parent=31 // pred_fallthru
        _
      // Predicated region
      $region37: #{double_conv_forward.4} parent=31 // pred_check
        %p1528 = pneg %p148
      $region38: #{double_conv_forward.4} parent=31 // pred_check_branch
        %1530 = sbr.rel (%p1528) target = $region40
      $region39: #{double_conv_forward.4} parent=31 // pred_region
        %s1531 = smul.u32 %s20, 2
        %s1532 = sadd.s32 %s1531, %s21
      $region40: #{double_conv_forward.4} parent=31 // pred_fallthru
        _
    $region32: #{double_conv_forward.4} parent=5 // pred_fallthru
      _
    %p1533 = scmp.le.s32.totalorder 2, %s11
    // Predicated region
    $region41: #{double_conv_forward.4} parent=5 // pred_check
      %p1534 = pneg %p1533
    $region42: #{double_conv_forward.4} parent=5 // pred_check_branch
      %1536 = sbr.rel (%p1534) target = $region44
    $region43: #{double_conv_forward.4} parent=5 // pred_region
      %s1537 = ssub.s32 %s11, 2
      // Predicated region
      $region45: #{double_conv_forward.4} parent=43 // pred_check
        %p1538 = pneg %p124
      $region46: #{double_conv_forward.4} parent=43 // pred_check_branch
        %1540 = sbr.rel (%p1538) target = $region48
      $region47: #{double_conv_forward.4} parent=43 // pred_region
        %s1541 = smul.u32 %s22, 2
        %s1542 = sadd.s32 %s1541, %s23
        %s1543 = smul.u32 32, %s1542
        %p1544 = scmp.lt.s32.totalorder %s1543, 127
        %s1545 = scalar_select %p1544, %s1543, 127
        %s1546 = smul.addr %s1545, 8
        %s1547 = scalar_lea.vmem %s3, %s1546
      $region48: #{double_conv_forward.4} parent=43 // pred_fallthru
        _
      // Predicated region
      $region49: #{double_conv_forward.4} parent=43 // pred_check
        %p1548 = pneg %p154
      $region50: #{double_conv_forward.4} parent=43 // pred_check_branch
        %1550 = sbr.rel (%p1548) target = $region52
      $region51: #{double_conv_forward.4} parent=43 // pred_region
        %s1551 = smul.u32 %s22, 2
        %s1552 = sadd.s32 %s1551, %s23
        %p1553 = scmp.lt.s32.totalorder %s1552, 3
        %s1554 = scalar_select %p1553, %s1552, 3
        %s1555 = smul.addr %s1554, 2
        %s1556 = scalar_lea.vmem %s4, %s1555
      $region52: #{double_conv_forward.4} parent=43 // pred_fallthru
        _
    $region44: #{double_conv_forward.4} parent=5 // pred_fallthru
      _
  $region6: #{double_conv_forward.4} parent=0 // loop_footer
    %s15 = sadd.s32 1, %s11
  $region7: #{double_conv_forward.4} parent=0 // loop_footer_branch
    %10 = sbr.rel target = $region3
  $region8: #{double_conv_forward.4} parent=0 // loop_exit
    _

// kernel: double_conv_forward.6
$region0: #{double_conv_forward.6}
  #allocation0 [shape = 'u32[]', space=smem, size = 0x4, offset = 0x4, fixed_abs, tag = 'smem constant byte address 0x4 - core index']
  #allocation1 [shape = 'u32[144,128]{1,0:T(1,128)}', space=vmem, size = 0x12000, scoped, tag = 'internal scratch']
  %s0 = inlined_call_operand.vmem [shape: bf16[2,640,72], index: 0, kind: input, shape index: {}]
  %s1 = inlined_call_operand.vmem [shape: bf16[3,72,128], index: 1, kind: input, shape index: {}]
  %s2 = inlined_call_operand.vmem [shape: f32[1,128], index: 2, kind: input, shape index: {}]
  %s3 = inlined_call_operand.vmem [shape: f32[1024,128], index: 3, kind: output, shape index: {0}]
  %s4 = inlined_call_operand.vmem [shape: f32[4,2,128], index: 4, kind: output, shape index: {1}]
  %5 = xla_tuple %s3, %s4
  %s6 = sld [smem:[#allocation0]]
  $region53: #{double_conv_forward.6} parent=0
    _
  %s8 = ssub.s32 1, %s6
  %s9 = scalar_select 0, %s8, %s6
  loop: start=0, step=1, limit=6
  $region2: #{double_conv_forward.6} parent=0 // loop_pre_header
    _
  $region3: #{double_conv_forward.6} parent=0 // loop_header
    %s11 = sphi 0, %s15
    %p12 = scmp.ge.s32.totalorder %s11, 6
    %s18 = sphi 0, %s30
    %s19 = sphi 0, %s26
    %s20 = sphi 0, %s18
    %s21 = sphi 0, %s19
    %s22 = sphi 0, %s20
    %s23 = sphi 0, %s21
    %s33 = sphi 0, %s35
    %s36 = sphi 0, %s33
    %s37 = sphi 0, %s36
    %s53 = sphi 0, %s37
    %s57 = sphi 0, %s57
    %s59 = sphi 0, %s57
    %s60 = sphi 0, %s59
    %s74 = sphi 0, %s60
    %s78 = sphi 0, %s78
    %s80 = sphi 0, %s78
    %s81 = sphi 0, %s80
    %s95 = sphi 0, %s81
    %s105 = sphi 0, %s107
    %s108 = sphi 0, %s105
    %s109 = sphi 0, %s108
    %s125 = sphi 0, %s109
    %s135 = sphi 0, %s137
    %s138 = sphi 0, %s135
    %s139 = sphi 0, %s138
    %s155 = sphi 0, %s139
  $region4: #{double_conv_forward.6} parent=0 // loop_header_branch
    %14 = sbr.rel (%p12) target = $region8
  $region5: #{double_conv_forward.6} parent=0 // loop_body
    %s16 = ssub.s32 %s11, 1
    %s17 = ssub.s32 %s11, 2
    %s24 = sadd.s32 1, %s19
    %p25 = scmp.ge.s32.totalorder %s24, 2
    %s26 = scalar_select %p25, 0, %s24
    %s27 = sadd.s32 1, %s18
    %s28 = scalar_select %p25, %s27, %s18
    %p29 = scmp.ge.s32.totalorder %s28, 2
    %s30 = scalar_select %p29, 0, %s28
    %s31 = ssub.s32 %s18, %s30
    %p32 = scmp.eq.s32.totalorder %s31, 0
    %s34 = sadd.s32 %s33, 1
    %s35 = scalar_select %p32, %s33, %s34
    %p38 = pneg %p32
    %p39 = scmp.eq.s32.totalorder %s11, 3
    %p40 = por %p38, %p39
    %p41 = scmp.ne.s32.totalorder %s33, %s36
    %p42 = scmp.eq.s32.totalorder %s11, 0
    %p43 = por %p41, %p42
    %p44 = scmp.ne.s32.totalorder %s33, %s36
    %p45 = scmp.eq.s32.totalorder %s16, 3
    %p46 = por %p44, %p45
    %p47 = scmp.ne.s32.totalorder %s36, %s37
    %p48 = scmp.eq.s32.totalorder %s16, 0
    %p49 = por %p47, %p48
    %p50 = scmp.ne.s32.totalorder %s36, %s37
    %p51 = scmp.eq.s32.totalorder %s17, 3
    %p52 = por %p50, %p51
    %p54 = scmp.ne.s32.totalorder %s37, %s53
    %p55 = scmp.eq.s32.totalorder %s17, 0
    %p56 = por %p54, %p55
    %s58 = sadd.s32 %s57, 1
    %p61 = scmp.eq.s32.totalorder %s11, 3
    %p62 = scmp.ne.s32.totalorder %s57, %s59
    %p63 = scmp.eq.s32.totalorder %s11, 0
    %p64 = por %p62, %p63
    %p65 = scmp.ne.s32.totalorder %s57, %s59
    %p66 = scmp.eq.s32.totalorder %s16, 3
    %p67 = por %p65, %p66
    %p68 = scmp.ne.s32.totalorder %s59, %s60
    %p69 = scmp.eq.s32.totalorder %s16, 0
    %p70 = por %p68, %p69
    %p71 = scmp.ne.s32.totalorder %s59, %s60
    %p72 = scmp.eq.s32.totalorder %s17, 3
    %p73 = por %p71, %p72
    %p75 = scmp.ne.s32.totalorder %s60, %s74
    %p76 = scmp.eq.s32.totalorder %s17, 0
    %p77 = por %p75, %p76
    %s79 = sadd.s32 %s78, 1
    %p82 = scmp.eq.s32.totalorder %s11, 3
    %p83 = scmp.ne.s32.totalorder %s78, %s80
    %p84 = scmp.eq.s32.totalorder %s11, 0
    %p85 = por %p83, %p84
    %p86 = scmp.ne.s32.totalorder %s78, %s80
    %p87 = scmp.eq.s32.totalorder %s16, 3
    %p88 = por %p86, %p87
    %p89 = scmp.ne.s32.totalorder %s80, %s81
    %p90 = scmp.eq.s32.totalorder %s16, 0
    %p91 = por %p89, %p90
    %p92 = scmp.ne.s32.totalorder %s80, %s81
    %p93 = scmp.eq.s32.totalorder %s17, 3
    %p94 = por %p92, %p93
    %p96 = scmp.ne.s32.totalorder %s81, %s95
    %p97 = scmp.eq.s32.totalorder %s17, 0
    %p98 = por %p96, %p97
    %s99 = smul.u32 %s18, 2
    %s100 = sadd.s32 %s99, %s19
    %s101 = smul.u32 %s30, 2
    %s102 = sadd.s32 %s101, %s26
    %s103 = ssub.s32 %s100, %s102
    %p104 = scmp.eq.s32.totalorder %s103, 0
    %s106 = sadd.s32 %s105, 1
    %s107 = scalar_select %p104, %s105, %s106
    %p110 = pneg %p104
    %p111 = scmp.eq.s32.totalorder %s11, 3
    %p112 = por %p110, %p111
    %p113 = scmp.ne.s32.totalorder %s105, %s108
    %p114 = scmp.eq.s32.totalorder %s11, 0
    %p115 = por %p113, %p114
    %p116 = scmp.ne.s32.totalorder %s105, %s108
    %p117 = scmp.eq.s32.totalorder %s16, 3
    %p118 = por %p116, %p117
    %p119 = scmp.ne.s32.totalorder %s108, %s109
    %p120 = scmp.eq.s32.totalorder %s16, 0
    %p121 = por %p119, %p120
    %p122 = scmp.ne.s32.totalorder %s108, %s109
    %p123 = scmp.eq.s32.totalorder %s17, 3
    %p124 = por %p122, %p123
    %p126 = scmp.ne.s32.totalorder %s109, %s125
    %p127 = scmp.eq.s32.totalorder %s17, 0
    %p128 = por %p126, %p127
    %s129 = smul.u32 %s18, 2
    %s130 = sadd.s32 %s129, %s19
    %s131 = smul.u32 %s30, 2
    %s132 = sadd.s32 %s131, %s26
    %s133 = ssub.s32 %s130, %s132
    %p134 = scmp.eq.s32.totalorder %s133, 0
    %s136 = sadd.s32 %s135, 1
    %s137 = scalar_select %p134, %s135, %s136
    %p140 = pneg %p134
    %p141 = scmp.eq.s32.totalorder %s11, 3
    %p142 = por %p140, %p141
    %p143 = scmp.ne.s32.totalorder %s135, %s138
    %p144 = scmp.eq.s32.totalorder %s11, 0
    %p145 = por %p143, %p144
    %p146 = scmp.ne.s32.totalorder %s135, %s138
    %p147 = scmp.eq.s32.totalorder %s16, 3
    %p148 = por %p146, %p147
    %p149 = scmp.ne.s32.totalorder %s138, %s139
    %p150 = scmp.eq.s32.totalorder %s16, 0
    %p151 = por %p149, %p150
    %p152 = scmp.ne.s32.totalorder %s138, %s139
    %p153 = scmp.eq.s32.totalorder %s17, 3
    %p154 = por %p152, %p153
    %p156 = scmp.ne.s32.totalorder %s139, %s155
    %p157 = scmp.eq.s32.totalorder %s17, 0
    %p158 = por %p156, %p157
    %p159 = scmp.le.s32.totalorder 1, %s11
    %p160 = scmp.lt.s32.totalorder %s11, 5
    %p161 = pnand %p159, %p160
    %p162 = pneg %p161
    // Predicated region
    $region9: #{double_conv_forward.6} parent=5 // pred_check
      _
    $region10: #{double_conv_forward.6} parent=5 // pred_check_branch
      %164 = sbr.rel (%p161) target = $region12
    $region11: #{double_conv_forward.6} parent=5 // pred_region
      %s165 = ssub.s32 %s11, 1
      // Predicated region
      $region13: #{double_conv_forward.6} parent=11 // pred_check
        %p166 = pneg %p70
      $region14: #{double_conv_forward.6} parent=11 // pred_check_branch
        %168 = sbr.rel (%p166) target = $region16
      $region15: #{double_conv_forward.6} parent=11 // pred_region
        _
      $region16: #{double_conv_forward.6} parent=11 // pred_fallthru
        _
      // Predicated region
      $region17: #{double_conv_forward.6} parent=11 // pred_check
        %p169 = pneg %p91
      $region18: #{double_conv_forward.6} parent=11 // pred_check_branch
        %171 = sbr.rel (%p169) target = $region20
      $region19: #{double_conv_forward.6} parent=11 // pred_region
        _
      $region20: #{double_conv_forward.6} parent=11 // pred_fallthru
        _
    $region12: #{double_conv_forward.6} parent=5 // pred_fallthru
      _
    %p172 = scmp.lt.s32.totalorder %s11, 4
    // Predicated region
    $region21: #{double_conv_forward.6} parent=5 // pred_check
      %p173 = pneg %p172
    $region22: #{double_conv_forward.6} parent=5 // pred_check_branch
      %175 = sbr.rel (%p173) target = $region24
    $region23: #{double_conv_forward.6} parent=5 // pred_region
      // Predicated region
      $region25: #{double_conv_forward.6} parent=23 // pred_check
        %p176 = pneg %p43
      $region26: #{double_conv_forward.6} parent=23 // pred_check_branch
        %178 = sbr.rel (%p176) target = $region28
      $region27: #{double_conv_forward.6} parent=23 // pred_region
        %p179 = scmp.lt.s32.totalorder %s18, 1
        %s180 = scalar_select %p179, %s18, 1
        %s181 = smul.addr %s180, 80
        %s182 = smul.addr %s181, 4
        %s183 = scalar_lea.vmem %s0, %s182
      $region28: #{double_conv_forward.6} parent=23 // pred_fallthru
        _
    $region24: #{double_conv_forward.6} parent=5 // pred_fallthru
      _
    %p184 = scmp.le.s32.totalorder 1, %s11
    %p185 = scmp.lt.s32.totalorder %s11, 5
    %p186 = pnand %p184, %p185
    %p187 = pneg %p186
    // Predicated region
    $region29: #{double_conv_forward.6} parent=5 // pred_check
      _
    $region30: #{double_conv_forward.6} parent=5 // pred_check_branch
      %189 = sbr.rel (%p186) target = $region32
    $region31: #{double_conv_forward.6} parent=5 // pred_region
      %s190 = ssub.s32 %s11, 1
      %p191 = scmp.lt.s32.totalorder %s20, 1
      %s192 = scalar_select %p191, %s20, 1
      %s193 = smul.addr %s192, 80
      %s194 = smul.addr %s193, 4
      %s195 = scalar_lea.vmem %s0, %s194
      %p196 = pneg %p49
      %p197 = pneg %p46
      %p198 = pneg %p70
      %p199 = pneg %p67
      %p200 = pneg %p91
      %p201 = pneg %p88
      %p202 = pneg %p121
      %p203 = pneg %p118
      %s204 = smul.u32 %s20, 2
      %s205 = sadd.s32 %s204, %s21
      %s206 = smul.u32 32, %s205
      %p207 = scmp.lt.s32.totalorder %s206, 127
      %s208 = scalar_select %p207, %s206, 127
      %s209 = smul.addr %s208, 8
      %s210 = scalar_lea.vmem %s3, %s209
      %p211 = pneg %p151
      %p212 = pneg %p148
      %s213 = smul.u32 %s20, 2
      %s214 = sadd.s32 %s213, %s21
      %p215 = scmp.lt.s32.totalorder %s214, 3
      %s216 = scalar_select %p215, %s214, 3
      %s217 = smul.addr %s216, 2
      %s218 = scalar_lea.vmem %s4, %s217
      %p219 = scmp.lt.s32.totalorder %s20, 1
      %s220 = scalar_select %p219, %s20, 1
      %s221 = smul.addr %s220, 80
      %s222 = smul.addr %s221, 4
      %s223 = scalar_lea.vmem %s0, %s222
      %s224 = smul.u32 %s20, 2
      %s225 = sadd.s32 %s224, %s21
      %s226 = smul.u32 32, %s225
      %p227 = scmp.lt.s32.totalorder %s226, 127
      %s228 = scalar_select %p227, %s226, 127
      %s229 = smul.addr %s228, 8
      %s230 = scalar_lea.vmem %s3, %s229
      %s231 = smul.u32 %s20, 2
      %s232 = sadd.s32 %s231, %s21
      %s233 = smul.u32 32, %s232
      %s234 = smul.u32 %s20, 2
      %s235 = sadd.s32 %s234, %s21
      %p236 = scmp.lt.s32.totalorder %s235, 3
      %s237 = scalar_select %p236, %s235, 3
      %s238 = smul.addr %s237, 2
      %s239 = scalar_lea.vmem %s4, %s238
      %s240 = smul.u32 %s20, 2
      %s241 = sadd.s32 %s240, %s21
      %s243 = smul.u32 %s21, 256
      %s244 = sshra.s32 %s243, 3
      %s245 = sand.u32 %s243, 7
      %s246 = smul.addr %s244, 4
      %s247 = scalar_lea.vmem %s223, %s246
      %v248 = vld [vmem:[%s247] sm:$0xf]
      %v249 = vld [vmem:[%s247 + $0x4] sm:$0xf]
      %v250 = vld [vmem:[%s247 + $0x8] sm:$0xf]
      %v251 = vld [vmem:[%s247 + $0xc] sm:$0xf]
      %v252 = vld [vmem:[%s247 + $0x10] sm:$0xf]
      %v253 = vld [vmem:[%s247 + $0x14] sm:$0xf]
      %v254 = vld [vmem:[%s247 + $0x18] sm:$0xf]
      %v255 = vld [vmem:[%s247 + $0x1c] sm:$0xf]
      %v256 = vld [vmem:[%s247 + $0x20] sm:$0xf]
      %v257 = vld [vmem:[%s247 + $0x24] sm:$0xf]
      %v258 = vld [vmem:[%s247 + $0x28] sm:$0xf]
      %v259 = vld [vmem:[%s247 + $0x2c] sm:$0xf]
      %v260 = vld [vmem:[%s247 + $0x30] sm:$0xf]
      %v261 = vld [vmem:[%s247 + $0x34] sm:$0xf]
      %v262 = vld [vmem:[%s247 + $0x38] sm:$0xf]
      %v263 = vld [vmem:[%s247 + $0x3c] sm:$0xf]
      %v264 = vld [vmem:[%s247 + $0x40] sm:$0xf]
      %v265 = vld [vmem:[%s247 + $0x44] sm:$0xf]
      %v266 = vld [vmem:[%s247 + $0x48] sm:$0xf]
      %v267 = vld [vmem:[%s247 + $0x4c] sm:$0xf]
      %v268 = vld [vmem:[%s247 + $0x50] sm:$0xf]
      %v269 = vld [vmem:[%s247 + $0x54] sm:$0xf]
      %v270 = vld [vmem:[%s247 + $0x58] sm:$0xf]
      %v271 = vld [vmem:[%s247 + $0x5c] sm:$0xf]
      %v272 = vld [vmem:[%s247 + $0x60] sm:$0xf]
      %v273 = vld [vmem:[%s247 + $0x64] sm:$0xf]
      %v274 = vld [vmem:[%s247 + $0x68] sm:$0xf]
      %v275 = vld [vmem:[%s247 + $0x6c] sm:$0xf]
      %v276 = vld [vmem:[%s247 + $0x70] sm:$0xf]
      %v277 = vld [vmem:[%s247 + $0x74] sm:$0xf]
      %v278 = vld [vmem:[%s247 + $0x78] sm:$0xf]
      %v279 = vld [vmem:[%s247 + $0x7c] sm:$0xf]
      %v280 = vld [vmem:[%s1] sm:$0xf]
      %v281 = vld [vmem:[%s1 + $0x4] sm:$0xf]
      %v282 = vld [vmem:[%s1 + $0x8] sm:$0xf]
      %v283 = vld [vmem:[%s1 + $0xc] sm:$0xf]
      %v284 = vld [vmem:[%s1 + $0x10] sm:$0xf]
      %v285 = vld [vmem:[%s1 + $0x14] sm:$0xf]
      %v286 = vld [vmem:[%s1 + $0x18] sm:$0xf]
      %v287 = vld [vmem:[%s1 + $0x1c] sm:$0xf]
      %v288 = vld [vmem:[%s1 + $0x20] sm:$0xf]
      %s289 = smul.u32 %s21, 4
      %s290 = sadd.s32 %s289, 1
      %s291 = smul.u32 %s290, 64
      %s292 = sshra.s32 %s291, 3
      %s293 = sand.u32 %s291, 7
      %s294 = smul.addr %s292, 4
      %s295 = scalar_lea.vmem %s223, %s294
      %v296 = vld [vmem:[%s295] sm:$0xf]
      %v297 = vld [vmem:[%s295 + $0x4] sm:$0xf]
      %v298 = vld [vmem:[%s295 + $0x8] sm:$0xf]
      %v299 = vld [vmem:[%s295 + $0xc] sm:$0xf]
      %v300 = vld [vmem:[%s295 + $0x10] sm:$0xf]
      %v301 = vld [vmem:[%s295 + $0x14] sm:$0xf]
      %v302 = vld [vmem:[%s295 + $0x18] sm:$0xf]
      %v303 = vld [vmem:[%s295 + $0x1c] sm:$0xf]
      %v304 = vld [vmem:[%s295 + $0x20] sm:$0xf]
      %v305 = vld [vmem:[%s295 + $0x24] sm:$0xf]
      %v306 = vld [vmem:[%s295 + $0x28] sm:$0xf]
      %v307 = vld [vmem:[%s295 + $0x2c] sm:$0xf]
      %v308 = vld [vmem:[%s295 + $0x30] sm:$0xf]
      %v309 = vld [vmem:[%s295 + $0x34] sm:$0xf]
      %v310 = vld [vmem:[%s295 + $0x38] sm:$0xf]
      %v311 = vld [vmem:[%s295 + $0x3c] sm:$0xf]
      %v312 = vld [vmem:[%s295 + $0x40] sm:$0xf]
      %v313 = vld [vmem:[%s295 + $0x44] sm:$0xf]
      %v314 = vld [vmem:[%s295 + $0x48] sm:$0xf]
      %v315 = vld [vmem:[%s295 + $0x4c] sm:$0xf]
      %v316 = vld [vmem:[%s295 + $0x50] sm:$0xf]
      %v317 = vld [vmem:[%s295 + $0x54] sm:$0xf]
      %v318 = vld [vmem:[%s295 + $0x58] sm:$0xf]
      %v319 = vld [vmem:[%s295 + $0x5c] sm:$0xf]
      %v320 = vld [vmem:[%s295 + $0x60] sm:$0xf]
      %v321 = vld [vmem:[%s295 + $0x64] sm:$0xf]
      %v322 = vld [vmem:[%s295 + $0x68] sm:$0xf]
      %v323 = vld [vmem:[%s295 + $0x6c] sm:$0xf]
      %v324 = vld [vmem:[%s295 + $0x70] sm:$0xf]
      %v325 = vld [vmem:[%s295 + $0x74] sm:$0xf]
      %v326 = vld [vmem:[%s295 + $0x78] sm:$0xf]
      %v327 = vld [vmem:[%s295 + $0x7c] sm:$0xf]
      %s328 = scalar_lea.vmem %s1, 36
      %v329 = vld [vmem:[%s328] sm:$0xf]
      %v330 = vld [vmem:[%s328 + $0x4] sm:$0xf]
      %v331 = vld [vmem:[%s328 + $0x8] sm:$0xf]
      %v332 = vld [vmem:[%s328 + $0xc] sm:$0xf]
      %v333 = vld [vmem:[%s328 + $0x10] sm:$0xf]
      %v334 = vld [vmem:[%s328 + $0x14] sm:$0xf]
      %v335 = vld [vmem:[%s328 + $0x18] sm:$0xf]
      %v336 = vld [vmem:[%s328 + $0x1c] sm:$0xf]
      %v337 = vld [vmem:[%s328 + $0x20] sm:$0xf]
      %v370 = vunpack.c.l.b16 %v296
      %v371 = vunpack.c.l.b16 %v297
      %v372 = vunpack.c.l.b16 %v298
      %v373 = vunpack.c.l.b16 %v299
      %v374 = vunpack.c.l.b16 %v300
      %v375 = vunpack.c.l.b16 %v301
      %v376 = vunpack.c.l.b16 %v302
      %v377 = vunpack.c.l.b16 %v303
      %v378 = vunpack.c.l.b16 %v304
      %v379 = vunpack.c.l.b16 %v305
      %v380 = vunpack.c.l.b16 %v306
      %v381 = vunpack.c.l.b16 %v307
      %v382 = vunpack.c.l.b16 %v308
      %v383 = vunpack.c.l.b16 %v309
      %v384 = vunpack.c.l.b16 %v310
      %v385 = vunpack.c.l.b16 %v311
      %v386 = vunpack.c.l.b16 %v312
      %v387 = vunpack.c.l.b16 %v313
      %v388 = vunpack.c.l.b16 %v314
      %v389 = vunpack.c.l.b16 %v315
      %v390 = vunpack.c.l.b16 %v316
      %v391 = vunpack.c.l.b16 %v317
      %v392 = vunpack.c.l.b16 %v318
      %v393 = vunpack.c.l.b16 %v319
      %v394 = vunpack.c.l.b16 %v320
      %v395 = vunpack.c.l.b16 %v321
      %v396 = vunpack.c.l.b16 %v322
      %v397 = vunpack.c.l.b16 %v323
      %v398 = vunpack.c.l.b16 %v324
      %v399 = vunpack.c.l.b16 %v325
      %v400 = vunpack.c.l.b16 %v326
      %v401 = vunpack.c.l.b16 %v327
      %v402 = vpack.c.b16 %v371, %v370
      %v403 = vpack.c.b16 %v373, %v372
      %v404 = vpack.c.b16 %v375, %v374
      %v405 = vpack.c.b16 %v377, %v376
      %v406 = vpack.c.b16 %v379, %v378
      %v407 = vpack.c.b16 %v381, %v380
      %v408 = vpack.c.b16 %v383, %v382
      %v409 = vpack.c.b16 %v385, %v384
      %v410 = vpack.c.b16 %v387, %v386
      %v411 = vpack.c.b16 %v389, %v388
      %v412 = vpack.c.b16 %v391, %v390
      %v413 = vpack.c.b16 %v393, %v392
      %v414 = vpack.c.b16 %v395, %v394
      %v415 = vpack.c.b16 %v397, %v396
      %v416 = vpack.c.b16 %v399, %v398
      %v417 = vpack.c.b16 %v401, %v400
      %v427 = vunpack.c.l.b16 %v329
      %v428 = vunpack.c.l.b16 %v330
      %v429 = vunpack.c.l.b16 %v331
      %v430 = vunpack.c.l.b16 %v332
      %v431 = vunpack.c.l.b16 %v333
      %v432 = vunpack.c.l.b16 %v334
      %v433 = vunpack.c.l.b16 %v335
      %v434 = vunpack.c.l.b16 %v336
      %v435 = vunpack.c.l.b16 %v337
      %v436 = vpack.c.b16 %v428, %v427
      %v437 = vpack.c.b16 %v430, %v429
      %v438 = vpack.c.b16 %v432, %v431
      %v439 = vpack.c.b16 %v434, %v433
      %v440 = vpack.c.b16 %v435, %v435
      %vm445 = vcmask 588800
      %v447 = vsel %vm445, %v402, 0
      %v450 = vsel %vm445, %v403, 0
      %v453 = vsel %vm445, %v404, 0
      %v456 = vsel %vm445, %v405, 0
      %v459 = vsel %vm445, %v406, 0
      %v462 = vsel %vm445, %v407, 0
      %v465 = vsel %vm445, %v408, 0
      %v468 = vsel %vm445, %v409, 0
      %v471 = vsel %vm445, %v410, 0
      %v474 = vsel %vm445, %v411, 0
      %v477 = vsel %vm445, %v412, 0
      %v480 = vsel %vm445, %v413, 0
      %v483 = vsel %vm445, %v414, 0
      %v486 = vsel %vm445, %v415, 0
      %v489 = vsel %vm445, %v416, 0
      %v492 = vsel %vm445, %v417, 0
      %vm494 = vcmask 1043456
      %v496 = vsel %vm494, %v440, 0
      %498 = vmatprep.subr.bf16.mxu0 0
      %499 = vmatpush1.bf16.msra.mxu0 0
      %500 = vmatprep.subr.bf16.mxu0 0
      %501 = vmatpush1.bf16.msra.mxu0 0
      %502 = vmatprep.subr.bf16.mxu0 0
      %503 = vmatpush1.bf16.msra.mxu0 0
      %504 = vmatprep.subr.bf16.mxu0 0
      %505 = vmatpush1.bf16.msra.mxu0 %v496
      %506 = vmatprep.subr.bf16.mxu0 0
      %507 = vmatpush1.bf16.msra.mxu0 %v439
      %508 = vmatprep.subr.bf16.mxu0 0
      %509 = vmatpush1.bf16.msra.mxu0 %v438
      %510 = vmatprep.subr.bf16.mxu0 0
      %511 = vmatpush1.bf16.msra.mxu0 %v437
      %512 = vmatprep.subr.bf16.mxu0 0
      %513 = vmatpush1.bf16.msra.mxu0 %v436
      %514 = vmatprep.subr.bf16.mxu0 0
      %515 = vmatpush2.bf16.msra.mxu0 0
      %516 = vmatprep.subr.bf16.mxu0 0
      %517 = vmatpush2.bf16.msra.mxu0 0
      %518 = vmatprep.subr.bf16.mxu0 0
      %519 = vmatpush2.bf16.msra.mxu0 0
      %520 = vmatprep.subr.bf16.mxu0 0
      %521 = vmatpush2.bf16.msra.mxu0 0
      %522 = vmatprep.subr.bf16.mxu0 0
      %523 = vmatpush2.bf16.msra.mxu0 0
      %524 = vmatprep.subr.bf16.mxu0 0
      %525 = vmatpush2.bf16.msra.mxu0 0
      %526 = vmatprep.subr.bf16.mxu0 0
      %527 = vmatpush2.bf16.msra.mxu0 0
      %528 = vmatprep.subr.bf16.mxu0 0
      %529 = vmatpush2.bf16.msra.mxu0 0
      %530 = vmatprep.mubr.bf16.mxu0 0
      %531 = vmatmul.mubr.bf16.gmra.mxu0 %v447
      %v532 = vpop.f32.mrf.mxu0
      %v533 = vadd.f32 0.0, %v532
      %v534 = vpop.f32.mrf.mxu0
      %v535 = vpop.f32.mrf.mxu0
      %v536 = vadd.f32 0.0, %v535
      %v537 = vpop.f32.mrf.mxu0
      %538 = vmatprep.mubr.bf16.mxu0 0
      %539 = vmatmul.mubr.bf16.gmra.mxu0 %v450
      %v540 = vpop.f32.mrf.mxu0
      %v541 = vadd.f32 0.0, %v540
      %v542 = vpop.f32.mrf.mxu0
      %v543 = vpop.f32.mrf.mxu0
      %v544 = vadd.f32 0.0, %v543
      %v545 = vpop.f32.mrf.mxu0
      %546 = vmatprep.mubr.bf16.mxu0 0
      %547 = vmatmul.mubr.bf16.gmra.mxu0 %v453
      %v548 = vpop.f32.mrf.mxu0
      %v549 = vadd.f32 0.0, %v548
      %v550 = vpop.f32.mrf.mxu0
      %v551 = vpop.f32.mrf.mxu0
      %v552 = vadd.f32 0.0, %v551
      %v553 = vpop.f32.mrf.mxu0
      %554 = vmatprep.mubr.bf16.mxu0 0
      %555 = vmatmul.mubr.bf16.gmra.mxu0 %v456
      %v556 = vpop.f32.mrf.mxu0
      %v557 = vadd.f32 0.0, %v556
      %v558 = vpop.f32.mrf.mxu0
      %v559 = vpop.f32.mrf.mxu0
      %v560 = vadd.f32 0.0, %v559
      %v561 = vpop.f32.mrf.mxu0
      %562 = vmatprep.mubr.bf16.mxu0 0
      %563 = vmatmul.mubr.bf16.gmra.mxu0 %v459
      %v564 = vpop.f32.mrf.mxu0
      %v565 = vadd.f32 0.0, %v564
      %v566 = vpop.f32.mrf.mxu0
      %v567 = vpop.f32.mrf.mxu0
      %v568 = vadd.f32 0.0, %v567
      %v569 = vpop.f32.mrf.mxu0
      %570 = vmatprep.mubr.bf16.mxu0 0
      %571 = vmatmul.mubr.bf16.gmra.mxu0 %v462
      %v572 = vpop.f32.mrf.mxu0
      %v573 = vadd.f32 0.0, %v572
      %v574 = vpop.f32.mrf.mxu0
      %v575 = vpop.f32.mrf.mxu0
      %v576 = vadd.f32 0.0, %v575
      %v577 = vpop.f32.mrf.mxu0
      %578 = vmatprep.mubr.bf16.mxu0 0
      %579 = vmatmul.mubr.bf16.gmra.mxu0 %v465
      %v580 = vpop.f32.mrf.mxu0
      %v581 = vadd.f32 0.0, %v580
      %v582 = vpop.f32.mrf.mxu0
      %v583 = vpop.f32.mrf.mxu0
      %v584 = vadd.f32 0.0, %v583
      %v585 = vpop.f32.mrf.mxu0
      %586 = vmatprep.mubr.bf16.mxu0 0
      %587 = vmatmul.mubr.bf16.gmra.mxu0 %v468
      %v588 = vpop.f32.mrf.mxu0
      %v589 = vadd.f32 0.0, %v588
      %v590 = vpop.f32.mrf.mxu0
      %v591 = vpop.f32.mrf.mxu0
      %v592 = vadd.f32 0.0, %v591
      %v593 = vpop.f32.mrf.mxu0
      %594 = vmatprep.mubr.bf16.mxu0 0
      %595 = vmatmul.mubr.bf16.gmra.mxu0 %v471
      %v596 = vpop.f32.mrf.mxu0
      %v597 = vadd.f32 0.0, %v596
      %v598 = vpop.f32.mrf.mxu0
      %v599 = vpop.f32.mrf.mxu0
      %v600 = vadd.f32 0.0, %v599
      %v601 = vpop.f32.mrf.mxu0
      %602 = vmatprep.mubr.bf16.mxu0 0
      %603 = vmatmul.mubr.bf16.gmra.mxu0 %v474
      %v604 = vpop.f32.mrf.mxu0
      %v605 = vadd.f32 0.0, %v604
      %v606 = vpop.f32.mrf.mxu0
      %v607 = vpop.f32.mrf.mxu0
      %v608 = vadd.f32 0.0, %v607
      %v609 = vpop.f32.mrf.mxu0
      %610 = vmatprep.mubr.bf16.mxu0 0
      %611 = vmatmul.mubr.bf16.gmra.mxu0 %v477
      %v612 = vpop.f32.mrf.mxu0
      %v613 = vadd.f32 0.0, %v612
      %v614 = vpop.f32.mrf.mxu0
      %v615 = vpop.f32.mrf.mxu0
      %v616 = vadd.f32 0.0, %v615
      %v617 = vpop.f32.mrf.mxu0
      %618 = vmatprep.mubr.bf16.mxu0 0
      %619 = vmatmul.mubr.bf16.gmra.mxu0 %v480
      %v620 = vpop.f32.mrf.mxu0
      %v621 = vadd.f32 0.0, %v620
      %v622 = vpop.f32.mrf.mxu0
      %v623 = vpop.f32.mrf.mxu0
      %v624 = vadd.f32 0.0, %v623
      %v625 = vpop.f32.mrf.mxu0
      %626 = vmatprep.mubr.bf16.mxu0 0
      %627 = vmatmul.mubr.bf16.gmra.mxu0 %v483
      %v628 = vpop.f32.mrf.mxu0
      %v629 = vadd.f32 0.0, %v628
      %v630 = vpop.f32.mrf.mxu0
      %v631 = vpop.f32.mrf.mxu0
      %v632 = vadd.f32 0.0, %v631
      %v633 = vpop.f32.mrf.mxu0
      %634 = vmatprep.mubr.bf16.mxu0 0
      %635 = vmatmul.mubr.bf16.gmra.mxu0 %v486
      %v636 = vpop.f32.mrf.mxu0
      %v637 = vadd.f32 0.0, %v636
      %v638 = vpop.f32.mrf.mxu0
      %v639 = vpop.f32.mrf.mxu0
      %v640 = vadd.f32 0.0, %v639
      %v641 = vpop.f32.mrf.mxu0
      %642 = vmatprep.mubr.bf16.mxu0 0
      %643 = vmatmul.mubr.bf16.gmra.mxu0 %v489
      %v644 = vpop.f32.mrf.mxu0
      %v645 = vadd.f32 0.0, %v644
      %v646 = vpop.f32.mrf.mxu0
      %v647 = vpop.f32.mrf.mxu0
      %v648 = vadd.f32 0.0, %v647
      %v649 = vpop.f32.mrf.mxu0
      %650 = vmatprep.mubr.bf16.mxu0 0
      %651 = vmatmul.mubr.bf16.gmra.mxu0 %v492
      %v652 = vpop.f32.mrf.mxu0
      %v653 = vadd.f32 0.0, %v652
      %v654 = vpop.f32.mrf.mxu0
      %v655 = vpop.f32.mrf.mxu0
      %v656 = vadd.f32 0.0, %v655
      %v657 = vpop.f32.mrf.mxu0
      %658 = vdwg.mxu0
      %v691 = vunpack.c.l.b16 %v248
      %v692 = vunpack.c.l.b16 %v249
      %v693 = vunpack.c.l.b16 %v250
      %v694 = vunpack.c.l.b16 %v251
      %v695 = vunpack.c.l.b16 %v252
      %v696 = vunpack.c.l.b16 %v253
      %v697 = vunpack.c.l.b16 %v254
      %v698 = vunpack.c.l.b16 %v255
      %v699 = vunpack.c.l.b16 %v256
      %v700 = vunpack.c.l.b16 %v257
      %v701 = vunpack.c.l.b16 %v258
      %v702 = vunpack.c.l.b16 %v259
      %v703 = vunpack.c.l.b16 %v260
      %v704 = vunpack.c.l.b16 %v261
      %v705 = vunpack.c.l.b16 %v262
      %v706 = vunpack.c.l.b16 %v263
      %v707 = vunpack.c.l.b16 %v264
      %v708 = vunpack.c.l.b16 %v265
      %v709 = vunpack.c.l.b16 %v266
      %v710 = vunpack.c.l.b16 %v267
      %v711 = vunpack.c.l.b16 %v268
      %v712 = vunpack.c.l.b16 %v269
      %v713 = vunpack.c.l.b16 %v270
      %v714 = vunpack.c.l.b16 %v271
      %v715 = vunpack.c.l.b16 %v272
      %v716 = vunpack.c.l.b16 %v273
      %v717 = vunpack.c.l.b16 %v274
      %v718 = vunpack.c.l.b16 %v275
      %v719 = vunpack.c.l.b16 %v276
      %v720 = vunpack.c.l.b16 %v277
      %v721 = vunpack.c.l.b16 %v278
      %v722 = vunpack.c.l.b16 %v279
      %v723 = vpack.c.b16 %v692, %v691
      %v724 = vpack.c.b16 %v694, %v693
      %v725 = vpack.c.b16 %v696, %v695
      %v726 = vpack.c.b16 %v698, %v697
      %v727 = vpack.c.b16 %v700, %v699
      %v728 = vpack.c.b16 %v702, %v701
      %v729 = vpack.c.b16 %v704, %v703
      %v730 = vpack.c.b16 %v706, %v705
      %v731 = vpack.c.b16 %v708, %v707
      %v732 = vpack.c.b16 %v710, %v709
      %v733 = vpack.c.b16 %v712, %v711
      %v734 = vpack.c.b16 %v714, %v713
      %v735 = vpack.c.b16 %v716, %v715
      %v736 = vpack.c.b16 %v718, %v717
      %v737 = vpack.c.b16 %v720, %v719
      %v738 = vpack.c.b16 %v722, %v721
      %v748 = vunpack.c.l.b16 %v280
      %v749 = vunpack.c.l.b16 %v281
      %v750 = vunpack.c.l.b16 %v282
      %v751 = vunpack.c.l.b16 %v283
      %v752 = vunpack.c.l.b16 %v284
      %v753 = vunpack.c.l.b16 %v285
      %v754 = vunpack.c.l.b16 %v286
      %v755 = vunpack.c.l.b16 %v287
      %v756 = vunpack.c.l.b16 %v288
      %v757 = vpack.c.b16 %v749, %v748
      %v758 = vpack.c.b16 %v751, %v750
      %v759 = vpack.c.b16 %v753, %v752
      %v760 = vpack.c.b16 %v755, %v754
      %v761 = vpack.c.b16 %v756, %v756
      %v767 = vsel %vm445, %v723, 0
      %v770 = vsel %vm445, %v724, 0
      %v773 = vsel %vm445, %v725, 0
      %v776 = vsel %vm445, %v726, 0
      %v779 = vsel %vm445, %v727, 0
      %v782 = vsel %vm445, %v728, 0
      %v785 = vsel %vm445, %v729, 0
      %v788 = vsel %vm445, %v730, 0
      %v791 = vsel %vm445, %v731, 0
      %v794 = vsel %vm445, %v732, 0
      %v797 = vsel %vm445, %v733, 0
      %v800 = vsel %vm445, %v734, 0
      %v803 = vsel %vm445, %v735, 0
      %v806 = vsel %vm445, %v736, 0
      %v809 = vsel %vm445, %v737, 0
      %v812 = vsel %vm445, %v738, 0
      %v815 = vsel %vm494, %v761, 0
      %817 = vmatprep.subr.bf16.mxu0 0
      %818 = vmatpush1.bf16.msra.mxu0 0
      %819 = vmatprep.subr.bf16.mxu0 0
      %820 = vmatpush1.bf16.msra.mxu0 0
      %821 = vmatprep.subr.bf16.mxu0 0
      %822 = vmatpush1.bf16.msra.mxu0 0
      %823 = vmatprep.subr.bf16.mxu0 0
      %824 = vmatpush1.bf16.msra.mxu0 %v815
      %825 = vmatprep.subr.bf16.mxu0 0
      %826 = vmatpush1.bf16.msra.mxu0 %v760
      %827 = vmatprep.subr.bf16.mxu0 0
      %828 = vmatpush1.bf16.msra.mxu0 %v759
      %829 = vmatprep.subr.bf16.mxu0 0
      %830 = vmatpush1.bf16.msra.mxu0 %v758
      %831 = vmatprep.subr.bf16.mxu0 0
      %832 = vmatpush1.bf16.msra.mxu0 %v757
      %833 = vmatprep.subr.bf16.mxu0 0
      %834 = vmatpush2.bf16.msra.mxu0 0
      %835 = vmatprep.subr.bf16.mxu0 0
      %836 = vmatpush2.bf16.msra.mxu0 0
      %837 = vmatprep.subr.bf16.mxu0 0
      %838 = vmatpush2.bf16.msra.mxu0 0
      %839 = vmatprep.subr.bf16.mxu0 0
      %840 = vmatpush2.bf16.msra.mxu0 0
      %841 = vmatprep.subr.bf16.mxu0 0
      %842 = vmatpush2.bf16.msra.mxu0 0
      %843 = vmatprep.subr.bf16.mxu0 0
      %844 = vmatpush2.bf16.msra.mxu0 0
      %845 = vmatprep.subr.bf16.mxu0 0
      %846 = vmatpush2.bf16.msra.mxu0 0
      %847 = vmatprep.subr.bf16.mxu0 0
      %848 = vmatpush2.bf16.msra.mxu0 0
      %849 = vmatprep.mubr.bf16.mxu0 0
      %850 = vmatmul.mubr.bf16.gmra.mxu0 %v767
      %v851 = vpop.f32.mrf.mxu0
      %v852 = vadd.f32 %v533, %v851
      %v853 = vpop.f32.mrf.mxu0
      %v854 = vpop.f32.mrf.mxu0
      %v855 = vadd.f32 %v536, %v854
      %v856 = vpop.f32.mrf.mxu0
      %857 = vmatprep.mubr.bf16.mxu0 0
      %858 = vmatmul.mubr.bf16.gmra.mxu0 %v770
      %v859 = vpop.f32.mrf.mxu0
      %v860 = vadd.f32 %v541, %v859
      %v861 = vpop.f32.mrf.mxu0
      %v862 = vpop.f32.mrf.mxu0
      %v863 = vadd.f32 %v544, %v862
      %v864 = vpop.f32.mrf.mxu0
      %865 = vmatprep.mubr.bf16.mxu0 0
      %866 = vmatmul.mubr.bf16.gmra.mxu0 %v773
      %v867 = vpop.f32.mrf.mxu0
      %v868 = vadd.f32 %v549, %v867
      %v869 = vpop.f32.mrf.mxu0
      %v870 = vpop.f32.mrf.mxu0
      %v871 = vadd.f32 %v552, %v870
      %v872 = vpop.f32.mrf.mxu0
      %873 = vmatprep.mubr.bf16.mxu0 0
      %874 = vmatmul.mubr.bf16.gmra.mxu0 %v776
      %v875 = vpop.f32.mrf.mxu0
      %v876 = vadd.f32 %v557, %v875
      %v877 = vpop.f32.mrf.mxu0
      %v878 = vpop.f32.mrf.mxu0
      %v879 = vadd.f32 %v560, %v878
      %v880 = vpop.f32.mrf.mxu0
      %881 = vmatprep.mubr.bf16.mxu0 0
      %882 = vmatmul.mubr.bf16.gmra.mxu0 %v779
      %v883 = vpop.f32.mrf.mxu0
      %v884 = vadd.f32 %v565, %v883
      %v885 = vpop.f32.mrf.mxu0
      %v886 = vpop.f32.mrf.mxu0
      %v887 = vadd.f32 %v568, %v886
      %v888 = vpop.f32.mrf.mxu0
      %889 = vmatprep.mubr.bf16.mxu0 0
      %890 = vmatmul.mubr.bf16.gmra.mxu0 %v782
      %v891 = vpop.f32.mrf.mxu0
      %v892 = vadd.f32 %v573, %v891
      %v893 = vpop.f32.mrf.mxu0
      %v894 = vpop.f32.mrf.mxu0
      %v895 = vadd.f32 %v576, %v894
      %v896 = vpop.f32.mrf.mxu0
      %897 = vmatprep.mubr.bf16.mxu0 0
      %898 = vmatmul.mubr.bf16.gmra.mxu0 %v785
      %v899 = vpop.f32.mrf.mxu0
      %v900 = vadd.f32 %v581, %v899
      %v901 = vpop.f32.mrf.mxu0
      %v902 = vpop.f32.mrf.mxu0
      %v903 = vadd.f32 %v584, %v902
      %v904 = vpop.f32.mrf.mxu0
      %905 = vmatprep.mubr.bf16.mxu0 0
      %906 = vmatmul.mubr.bf16.gmra.mxu0 %v788
      %v907 = vpop.f32.mrf.mxu0
      %v908 = vadd.f32 %v589, %v907
      %v909 = vpop.f32.mrf.mxu0
      %v910 = vpop.f32.mrf.mxu0
      %v911 = vadd.f32 %v592, %v910
      %v912 = vpop.f32.mrf.mxu0
      %913 = vmatprep.mubr.bf16.mxu0 0
      %914 = vmatmul.mubr.bf16.gmra.mxu0 %v791
      %v915 = vpop.f32.mrf.mxu0
      %v916 = vadd.f32 %v597, %v915
      %v917 = vpop.f32.mrf.mxu0
      %v918 = vpop.f32.mrf.mxu0
      %v919 = vadd.f32 %v600, %v918
      %v920 = vpop.f32.mrf.mxu0
      %921 = vmatprep.mubr.bf16.mxu0 0
      %922 = vmatmul.mubr.bf16.gmra.mxu0 %v794
      %v923 = vpop.f32.mrf.mxu0
      %v924 = vadd.f32 %v605, %v923
      %v925 = vpop.f32.mrf.mxu0
      %v926 = vpop.f32.mrf.mxu0
      %v927 = vadd.f32 %v608, %v926
      %v928 = vpop.f32.mrf.mxu0
      %929 = vmatprep.mubr.bf16.mxu0 0
      %930 = vmatmul.mubr.bf16.gmra.mxu0 %v797
      %v931 = vpop.f32.mrf.mxu0
      %v932 = vadd.f32 %v613, %v931
      %v933 = vpop.f32.mrf.mxu0
      %v934 = vpop.f32.mrf.mxu0
      %v935 = vadd.f32 %v616, %v934
      %v936 = vpop.f32.mrf.mxu0
      %937 = vmatprep.mubr.bf16.mxu0 0
      %938 = vmatmul.mubr.bf16.gmra.mxu0 %v800
      %v939 = vpop.f32.mrf.mxu0
      %v940 = vadd.f32 %v621, %v939
      %v941 = vpop.f32.mrf.mxu0
      %v942 = vpop.f32.mrf.mxu0
      %v943 = vadd.f32 %v624, %v942
      %v944 = vpop.f32.mrf.mxu0
      %945 = vmatprep.mubr.bf16.mxu0 0
      %946 = vmatmul.mubr.bf16.gmra.mxu0 %v803
      %v947 = vpop.f32.mrf.mxu0
      %v948 = vadd.f32 %v629, %v947
      %v949 = vpop.f32.mrf.mxu0
      %v950 = vpop.f32.mrf.mxu0
      %v951 = vadd.f32 %v632, %v950
      %v952 = vpop.f32.mrf.mxu0
      %953 = vmatprep.mubr.bf16.mxu0 0
      %954 = vmatmul.mubr.bf16.gmra.mxu0 %v806
      %v955 = vpop.f32.mrf.mxu0
      %v956 = vadd.f32 %v637, %v955
      %v957 = vpop.f32.mrf.mxu0
      %v958 = vpop.f32.mrf.mxu0
      %v959 = vadd.f32 %v640, %v958
      %v960 = vpop.f32.mrf.mxu0
      %961 = vmatprep.mubr.bf16.mxu0 0
      %962 = vmatmul.mubr.bf16.gmra.mxu0 %v809
      %v963 = vpop.f32.mrf.mxu0
      %v964 = vadd.f32 %v645, %v963
      %v965 = vpop.f32.mrf.mxu0
      %v966 = vpop.f32.mrf.mxu0
      %v967 = vadd.f32 %v648, %v966
      %v968 = vpop.f32.mrf.mxu0
      %969 = vmatprep.mubr.bf16.mxu0 0
      %970 = vmatmul.mubr.bf16.gmra.mxu0 %v812
      %v971 = vpop.f32.mrf.mxu0
      %v972 = vadd.f32 %v653, %v971
      %v973 = vpop.f32.mrf.mxu0
      %v974 = vpop.f32.mrf.mxu0
      %v975 = vadd.f32 %v656, %v974
      %v976 = vpop.f32.mrf.mxu0
      %977 = vdwg.mxu0
      %s978 = sadd.s32 %s289, 2
      %s979 = smul.u32 %s978, 64
      %s980 = sshra.s32 %s979, 3
      %s981 = sand.u32 %s979, 7
      %s982 = smul.addr %s980, 4
      %s983 = scalar_lea.vmem %s223, %s982
      %v984 = vld [vmem:[%s983] sm:$0xf]
      %v985 = vld [vmem:[%s983 + $0x4] sm:$0xf]
      %v986 = vld [vmem:[%s983 + $0x8] sm:$0xf]
      %v987 = vld [vmem:[%s983 + $0xc] sm:$0xf]
      %v988 = vld [vmem:[%s983 + $0x10] sm:$0xf]
      %v989 = vld [vmem:[%s983 + $0x14] sm:$0xf]
      %v990 = vld [vmem:[%s983 + $0x18] sm:$0xf]
      %v991 = vld [vmem:[%s983 + $0x1c] sm:$0xf]
      %v992 = vld [vmem:[%s983 + $0x20] sm:$0xf]
      %v993 = vld [vmem:[%s983 + $0x24] sm:$0xf]
      %v994 = vld [vmem:[%s983 + $0x28] sm:$0xf]
      %v995 = vld [vmem:[%s983 + $0x2c] sm:$0xf]
      %v996 = vld [vmem:[%s983 + $0x30] sm:$0xf]
      %v997 = vld [vmem:[%s983 + $0x34] sm:$0xf]
      %v998 = vld [vmem:[%s983 + $0x38] sm:$0xf]
      %v999 = vld [vmem:[%s983 + $0x3c] sm:$0xf]
      %v1000 = vld [vmem:[%s983 + $0x40] sm:$0xf]
      %v1001 = vld [vmem:[%s983 + $0x44] sm:$0xf]
      %v1002 = vld [vmem:[%s983 + $0x48] sm:$0xf]
      %v1003 = vld [vmem:[%s983 + $0x4c] sm:$0xf]
      %v1004 = vld [vmem:[%s983 + $0x50] sm:$0xf]
      %v1005 = vld [vmem:[%s983 + $0x54] sm:$0xf]
      %v1006 = vld [vmem:[%s983 + $0x58] sm:$0xf]
      %v1007 = vld [vmem:[%s983 + $0x5c] sm:$0xf]
      %v1008 = vld [vmem:[%s983 + $0x60] sm:$0xf]
      %v1009 = vld [vmem:[%s983 + $0x64] sm:$0xf]
      %v1010 = vld [vmem:[%s983 + $0x68] sm:$0xf]
      %v1011 = vld [vmem:[%s983 + $0x6c] sm:$0xf]
      %v1012 = vld [vmem:[%s983 + $0x70] sm:$0xf]
      %v1013 = vld [vmem:[%s983 + $0x74] sm:$0xf]
      %v1014 = vld [vmem:[%s983 + $0x78] sm:$0xf]
      %v1015 = vld [vmem:[%s983 + $0x7c] sm:$0xf]
      %s1016 = scalar_lea.vmem %s1, 72
      %v1017 = vld [vmem:[%s1016] sm:$0xf]
      %v1018 = vld [vmem:[%s1016 + $0x4] sm:$0xf]
      %v1019 = vld [vmem:[%s1016 + $0x8] sm:$0xf]
      %v1020 = vld [vmem:[%s1016 + $0xc] sm:$0xf]
      %v1021 = vld [vmem:[%s1016 + $0x10] sm:$0xf]
      %v1022 = vld [vmem:[%s1016 + $0x14] sm:$0xf]
      %v1023 = vld [vmem:[%s1016 + $0x18] sm:$0xf]
      %v1024 = vld [vmem:[%s1016 + $0x1c] sm:$0xf]
      %v1025 = vld [vmem:[%s1016 + $0x20] sm:$0xf]
      %v1058 = vunpack.c.l.b16 %v984
      %v1059 = vunpack.c.l.b16 %v985
      %v1060 = vunpack.c.l.b16 %v986
      %v1061 = vunpack.c.l.b16 %v987
      %v1062 = vunpack.c.l.b16 %v988
      %v1063 = vunpack.c.l.b16 %v989
      %v1064 = vunpack.c.l.b16 %v990
      %v1065 = vunpack.c.l.b16 %v991
      %v1066 = vunpack.c.l.b16 %v992
      %v1067 = vunpack.c.l.b16 %v993
      %v1068 = vunpack.c.l.b16 %v994
      %v1069 = vunpack.c.l.b16 %v995
      %v1070 = vunpack.c.l.b16 %v996
      %v1071 = vunpack.c.l.b16 %v997
      %v1072 = vunpack.c.l.b16 %v998
      %v1073 = vunpack.c.l.b16 %v999
      %v1074 = vunpack.c.l.b16 %v1000
      %v1075 = vunpack.c.l.b16 %v1001
      %v1076 = vunpack.c.l.b16 %v1002
      %v1077 = vunpack.c.l.b16 %v1003
      %v1078 = vunpack.c.l.b16 %v1004
      %v1079 = vunpack.c.l.b16 %v1005
      %v1080 = vunpack.c.l.b16 %v1006
      %v1081 = vunpack.c.l.b16 %v1007
      %v1082 = vunpack.c.l.b16 %v1008
      %v1083 = vunpack.c.l.b16 %v1009
      %v1084 = vunpack.c.l.b16 %v1010
      %v1085 = vunpack.c.l.b16 %v1011
      %v1086 = vunpack.c.l.b16 %v1012
      %v1087 = vunpack.c.l.b16 %v1013
      %v1088 = vunpack.c.l.b16 %v1014
      %v1089 = vunpack.c.l.b16 %v1015
      %v1090 = vpack.c.b16 %v1059, %v1058
      %v1091 = vpack.c.b16 %v1061, %v1060
      %v1092 = vpack.c.b16 %v1063, %v1062
      %v1093 = vpack.c.b16 %v1065, %v1064
      %v1094 = vpack.c.b16 %v1067, %v1066
      %v1095 = vpack.c.b16 %v1069, %v1068
      %v1096 = vpack.c.b16 %v1071, %v1070
      %v1097 = vpack.c.b16 %v1073, %v1072
      %v1098 = vpack.c.b16 %v1075, %v1074
      %v1099 = vpack.c.b16 %v1077, %v1076
      %v1100 = vpack.c.b16 %v1079, %v1078
      %v1101 = vpack.c.b16 %v1081, %v1080
      %v1102 = vpack.c.b16 %v1083, %v1082
      %v1103 = vpack.c.b16 %v1085, %v1084
      %v1104 = vpack.c.b16 %v1087, %v1086
      %v1105 = vpack.c.b16 %v1089, %v1088
      %v1115 = vunpack.c.l.b16 %v1017
      %v1116 = vunpack.c.l.b16 %v1018
      %v1117 = vunpack.c.l.b16 %v1019
      %v1118 = vunpack.c.l.b16 %v1020
      %v1119 = vunpack.c.l.b16 %v1021
      %v1120 = vunpack.c.l.b16 %v1022
      %v1121 = vunpack.c.l.b16 %v1023
      %v1122 = vunpack.c.l.b16 %v1024
      %v1123 = vunpack.c.l.b16 %v1025
      %v1124 = vpack.c.b16 %v1116, %v1115
      %v1125 = vpack.c.b16 %v1118, %v1117
      %v1126 = vpack.c.b16 %v1120, %v1119
      %v1127 = vpack.c.b16 %v1122, %v1121
      %v1128 = vpack.c.b16 %v1123, %v1123
      %v1134 = vsel %vm445, %v1090, 0
      %v1137 = vsel %vm445, %v1091, 0
      %v1140 = vsel %vm445, %v1092, 0
      %v1143 = vsel %vm445, %v1093, 0
      %v1146 = vsel %vm445, %v1094, 0
      %v1149 = vsel %vm445, %v1095, 0
      %v1152 = vsel %vm445, %v1096, 0
      %v1155 = vsel %vm445, %v1097, 0
      %v1158 = vsel %vm445, %v1098, 0
      %v1161 = vsel %vm445, %v1099, 0
      %v1164 = vsel %vm445, %v1100, 0
      %v1167 = vsel %vm445, %v1101, 0
      %v1170 = vsel %vm445, %v1102, 0
      %v1173 = vsel %vm445, %v1103, 0
      %v1176 = vsel %vm445, %v1104, 0
      %v1179 = vsel %vm445, %v1105, 0
      %v1182 = vsel %vm494, %v1128, 0
      %1184 = vmatprep.subr.bf16.mxu0 0
      %1185 = vmatpush1.bf16.msra.mxu0 0
      %1186 = vmatprep.subr.bf16.mxu0 0
      %1187 = vmatpush1.bf16.msra.mxu0 0
      %1188 = vmatprep.subr.bf16.mxu0 0
      %1189 = vmatpush1.bf16.msra.mxu0 0
      %1190 = vmatprep.subr.bf16.mxu0 0
      %1191 = vmatpush1.bf16.msra.mxu0 %v1182
      %1192 = vmatprep.subr.bf16.mxu0 0
      %1193 = vmatpush1.bf16.msra.mxu0 %v1127
      %1194 = vmatprep.subr.bf16.mxu0 0
      %1195 = vmatpush1.bf16.msra.mxu0 %v1126
      %1196 = vmatprep.subr.bf16.mxu0 0
      %1197 = vmatpush1.bf16.msra.mxu0 %v1125
      %1198 = vmatprep.subr.bf16.mxu0 0
      %1199 = vmatpush1.bf16.msra.mxu0 %v1124
      %1200 = vmatprep.subr.bf16.mxu0 0
      %1201 = vmatpush2.bf16.msra.mxu0 0
      %1202 = vmatprep.subr.bf16.mxu0 0
      %1203 = vmatpush2.bf16.msra.mxu0 0
      %1204 = vmatprep.subr.bf16.mxu0 0
      %1205 = vmatpush2.bf16.msra.mxu0 0
      %1206 = vmatprep.subr.bf16.mxu0 0
      %1207 = vmatpush2.bf16.msra.mxu0 0
      %1208 = vmatprep.subr.bf16.mxu0 0
      %1209 = vmatpush2.bf16.msra.mxu0 0
      %1210 = vmatprep.subr.bf16.mxu0 0
      %1211 = vmatpush2.bf16.msra.mxu0 0
      %1212 = vmatprep.subr.bf16.mxu0 0
      %1213 = vmatpush2.bf16.msra.mxu0 0
      %1214 = vmatprep.subr.bf16.mxu0 0
      %1215 = vmatpush2.bf16.msra.mxu0 0
      %1216 = vmatprep.mubr.bf16.mxu0 0
      %1217 = vmatmul.mubr.bf16.gmra.mxu0 %v1134
      %v1218 = vpop.f32.mrf.mxu0
      %v1219 = vadd.f32 0.0, %v1218
      %v1220 = vpop.f32.mrf.mxu0
      %v1221 = vpop.f32.mrf.mxu0
      %v1222 = vadd.f32 0.0, %v1221
      %v1223 = vpop.f32.mrf.mxu0
      %1224 = vmatprep.mubr.bf16.mxu0 0
      %1225 = vmatmul.mubr.bf16.gmra.mxu0 %v1137
      %v1226 = vpop.f32.mrf.mxu0
      %v1227 = vadd.f32 0.0, %v1226
      %v1228 = vpop.f32.mrf.mxu0
      %v1229 = vpop.f32.mrf.mxu0
      %v1230 = vadd.f32 0.0, %v1229
      %v1231 = vpop.f32.mrf.mxu0
      %1232 = vmatprep.mubr.bf16.mxu0 0
      %1233 = vmatmul.mubr.bf16.gmra.mxu0 %v1140
      %v1234 = vpop.f32.mrf.mxu0
      %v1235 = vadd.f32 0.0, %v1234
      %v1236 = vpop.f32.mrf.mxu0
      %v1237 = vpop.f32.mrf.mxu0
      %v1238 = vadd.f32 0.0, %v1237
      %v1239 = vpop.f32.mrf.mxu0
      %1240 = vmatprep.mubr.bf16.mxu0 0
      %1241 = vmatmul.mubr.bf16.gmra.mxu0 %v1143
      %v1242 = vpop.f32.mrf.mxu0
      %v1243 = vadd.f32 0.0, %v1242
      %v1244 = vpop.f32.mrf.mxu0
      %v1245 = vpop.f32.mrf.mxu0
      %v1246 = vadd.f32 0.0, %v1245
      %v1247 = vpop.f32.mrf.mxu0
      %1248 = vmatprep.mubr.bf16.mxu0 0
      %1249 = vmatmul.mubr.bf16.gmra.mxu0 %v1146
      %v1250 = vpop.f32.mrf.mxu0
      %v1251 = vadd.f32 0.0, %v1250
      %v1252 = vpop.f32.mrf.mxu0
      %v1253 = vpop.f32.mrf.mxu0
      %v1254 = vadd.f32 0.0, %v1253
      %v1255 = vpop.f32.mrf.mxu0
      %1256 = vmatprep.mubr.bf16.mxu0 0
      %1257 = vmatmul.mubr.bf16.gmra.mxu0 %v1149
      %v1258 = vpop.f32.mrf.mxu0
      %v1259 = vadd.f32 0.0, %v1258
      %v1260 = vpop.f32.mrf.mxu0
      %v1261 = vpop.f32.mrf.mxu0
      %v1262 = vadd.f32 0.0, %v1261
      %v1263 = vpop.f32.mrf.mxu0
      %1264 = vmatprep.mubr.bf16.mxu0 0
      %1265 = vmatmul.mubr.bf16.gmra.mxu0 %v1152
      %v1266 = vpop.f32.mrf.mxu0
      %v1267 = vadd.f32 0.0, %v1266
      %v1268 = vpop.f32.mrf.mxu0
      %v1269 = vpop.f32.mrf.mxu0
      %v1270 = vadd.f32 0.0, %v1269
      %v1271 = vpop.f32.mrf.mxu0
      %1272 = vmatprep.mubr.bf16.mxu0 0
      %1273 = vmatmul.mubr.bf16.gmra.mxu0 %v1155
      %v1274 = vpop.f32.mrf.mxu0
      %v1275 = vadd.f32 0.0, %v1274
      %v1276 = vpop.f32.mrf.mxu0
      %v1277 = vpop.f32.mrf.mxu0
      %v1278 = vadd.f32 0.0, %v1277
      %v1279 = vpop.f32.mrf.mxu0
      %1280 = vmatprep.mubr.bf16.mxu0 0
      %1281 = vmatmul.mubr.bf16.gmra.mxu0 %v1158
      %v1282 = vpop.f32.mrf.mxu0
      %v1283 = vadd.f32 0.0, %v1282
      %v1284 = vpop.f32.mrf.mxu0
      %v1285 = vpop.f32.mrf.mxu0
      %v1286 = vadd.f32 0.0, %v1285
      %v1287 = vpop.f32.mrf.mxu0
      %1288 = vmatprep.mubr.bf16.mxu0 0
      %1289 = vmatmul.mubr.bf16.gmra.mxu0 %v1161
      %v1290 = vpop.f32.mrf.mxu0
      %v1291 = vadd.f32 0.0, %v1290
      %v1292 = vpop.f32.mrf.mxu0
      %v1293 = vpop.f32.mrf.mxu0
      %v1294 = vadd.f32 0.0, %v1293
      %v1295 = vpop.f32.mrf.mxu0
      %1296 = vmatprep.mubr.bf16.mxu0 0
      %1297 = vmatmul.mubr.bf16.gmra.mxu0 %v1164
      %v1298 = vpop.f32.mrf.mxu0
      %v1299 = vadd.f32 0.0, %v1298
      %v1300 = vpop.f32.mrf.mxu0
      %v1301 = vpop.f32.mrf.mxu0
      %v1302 = vadd.f32 0.0, %v1301
      %v1303 = vpop.f32.mrf.mxu0
      %1304 = vmatprep.mubr.bf16.mxu0 0
      %1305 = vmatmul.mubr.bf16.gmra.mxu0 %v1167
      %v1306 = vpop.f32.mrf.mxu0
      %v1307 = vadd.f32 0.0, %v1306
      %v1308 = vpop.f32.mrf.mxu0
      %v1309 = vpop.f32.mrf.mxu0
      %v1310 = vadd.f32 0.0, %v1309
      %v1311 = vpop.f32.mrf.mxu0
      %1312 = vmatprep.mubr.bf16.mxu0 0
      %1313 = vmatmul.mubr.bf16.gmra.mxu0 %v1170
      %v1314 = vpop.f32.mrf.mxu0
      %v1315 = vadd.f32 0.0, %v1314
      %v1316 = vpop.f32.mrf.mxu0
      %v1317 = vpop.f32.mrf.mxu0
      %v1318 = vadd.f32 0.0, %v1317
      %v1319 = vpop.f32.mrf.mxu0
      %1320 = vmatprep.mubr.bf16.mxu0 0
      %1321 = vmatmul.mubr.bf16.gmra.mxu0 %v1173
      %v1322 = vpop.f32.mrf.mxu0
      %v1323 = vadd.f32 0.0, %v1322
      %v1324 = vpop.f32.mrf.mxu0
      %v1325 = vpop.f32.mrf.mxu0
      %v1326 = vadd.f32 0.0, %v1325
      %v1327 = vpop.f32.mrf.mxu0
      %1328 = vmatprep.mubr.bf16.mxu0 0
      %1329 = vmatmul.mubr.bf16.gmra.mxu0 %v1176
      %v1330 = vpop.f32.mrf.mxu0
      %v1331 = vadd.f32 0.0, %v1330
      %v1332 = vpop.f32.mrf.mxu0
      %v1333 = vpop.f32.mrf.mxu0
      %v1334 = vadd.f32 0.0, %v1333
      %v1335 = vpop.f32.mrf.mxu0
      %1336 = vmatprep.mubr.bf16.mxu0 0
      %1337 = vmatmul.mubr.bf16.gmra.mxu0 %v1179
      %v1338 = vpop.f32.mrf.mxu0
      %v1339 = vadd.f32 0.0, %v1338
      %v1340 = vpop.f32.mrf.mxu0
      %v1341 = vpop.f32.mrf.mxu0
      %v1342 = vadd.f32 0.0, %v1341
      %v1343 = vpop.f32.mrf.mxu0
      %1344 = vdwg.mxu0
      %v1345 = vadd.f32 %v852, %v1219
      %v1346 = vadd.f32 %v855, %v1222
      %v1347 = vadd.f32 %v860, %v1227
      %v1348 = vadd.f32 %v863, %v1230
      %v1349 = vadd.f32 %v868, %v1235
      %v1350 = vadd.f32 %v871, %v1238
      %v1351 = vadd.f32 %v876, %v1243
      %v1352 = vadd.f32 %v879, %v1246
      %v1353 = vadd.f32 %v884, %v1251
      %v1354 = vadd.f32 %v887, %v1254
      %v1355 = vadd.f32 %v892, %v1259
      %v1356 = vadd.f32 %v895, %v1262
      %v1357 = vadd.f32 %v900, %v1267
      %v1358 = vadd.f32 %v903, %v1270
      %v1359 = vadd.f32 %v908, %v1275
      %v1360 = vadd.f32 %v911, %v1278
      %v1361 = vadd.f32 %v916, %v1283
      %v1362 = vadd.f32 %v919, %v1286
      %v1363 = vadd.f32 %v924, %v1291
      %v1364 = vadd.f32 %v927, %v1294
      %v1365 = vadd.f32 %v932, %v1299
      %v1366 = vadd.f32 %v935, %v1302
      %v1367 = vadd.f32 %v940, %v1307
      %v1368 = vadd.f32 %v943, %v1310
      %v1369 = vadd.f32 %v948, %v1315
      %v1370 = vadd.f32 %v951, %v1318
      %v1371 = vadd.f32 %v956, %v1323
      %v1372 = vadd.f32 %v959, %v1326
      %v1373 = vadd.f32 %v964, %v1331
      %v1374 = vadd.f32 %v967, %v1334
      %v1375 = vadd.f32 %v972, %v1339
      %v1376 = vadd.f32 %v975, %v1342
      %v1377 = vld [vmem:[%s2] sm:$0x1]
      %v1379 = vlaneseq
      %v1380 = vshrl.u32 %v1379, 7
      %v1381 = vsub.s32 0, %v1380
      %v1382 = vrot.slane %v1377, %v1381
      %v1384 = vadd.f32 %v1345, %v1382
      %v1385 = vadd.f32 %v1346, %v1382
      %v1386 = vadd.f32 %v1347, %v1382
      %v1387 = vadd.f32 %v1348, %v1382
      %v1388 = vadd.f32 %v1349, %v1382
      %v1389 = vadd.f32 %v1350, %v1382
      %v1390 = vadd.f32 %v1351, %v1382
      %v1391 = vadd.f32 %v1352, %v1382
      %v1392 = vadd.f32 %v1353, %v1382
      %v1393 = vadd.f32 %v1354, %v1382
      %v1394 = vadd.f32 %v1355, %v1382
      %v1395 = vadd.f32 %v1356, %v1382
      %v1396 = vadd.f32 %v1357, %v1382
      %v1397 = vadd.f32 %v1358, %v1382
      %v1398 = vadd.f32 %v1359, %v1382
      %v1399 = vadd.f32 %v1360, %v1382
      %v1400 = vadd.f32 %v1361, %v1382
      %v1401 = vadd.f32 %v1362, %v1382
      %v1402 = vadd.f32 %v1363, %v1382
      %v1403 = vadd.f32 %v1364, %v1382
      %v1404 = vadd.f32 %v1365, %v1382
      %v1405 = vadd.f32 %v1366, %v1382
      %v1406 = vadd.f32 %v1367, %v1382
      %v1407 = vadd.f32 %v1368, %v1382
      %v1408 = vadd.f32 %v1369, %v1382
      %v1409 = vadd.f32 %v1370, %v1382
      %v1410 = vadd.f32 %v1371, %v1382
      %v1411 = vadd.f32 %v1372, %v1382
      %v1412 = vadd.f32 %v1373, %v1382
      %v1413 = vadd.f32 %v1374, %v1382
      %v1414 = vadd.f32 %v1375, %v1382
      %v1415 = vadd.f32 %v1376, %v1382
      %1416 = vst [vmem:[%s230] sm:$0xff] %v1384
      %1417 = vst [vmem:[%s230 + $0x8] sm:$0xff] %v1385
      %1418 = vst [vmem:[%s230 + $0x10] sm:$0xff] %v1386
      %1419 = vst [vmem:[%s230 + $0x18] sm:$0xff] %v1387
      %1420 = vst [vmem:[%s230 + $0x20] sm:$0xff] %v1388
      %1421 = vst [vmem:[%s230 + $0x28] sm:$0xff] %v1389
      %1422 = vst [vmem:[%s230 + $0x30] sm:$0xff] %v1390
      %1423 = vst [vmem:[%s230 + $0x38] sm:$0xff] %v1391
      %1424 = vst [vmem:[%s230 + $0x40] sm:$0xff] %v1392
      %1425 = vst [vmem:[%s230 + $0x48] sm:$0xff] %v1393
      %1426 = vst [vmem:[%s230 + $0x50] sm:$0xff] %v1394
      %1427 = vst [vmem:[%s230 + $0x58] sm:$0xff] %v1395
      %1428 = vst [vmem:[%s230 + $0x60] sm:$0xff] %v1396
      %1429 = vst [vmem:[%s230 + $0x68] sm:$0xff] %v1397
      %1430 = vst [vmem:[%s230 + $0x70] sm:$0xff] %v1398
      %1431 = vst [vmem:[%s230 + $0x78] sm:$0xff] %v1399
      %1432 = vst [vmem:[%s230 + $0x80] sm:$0xff] %v1400
      %1433 = vst [vmem:[%s230 + $0x88] sm:$0xff] %v1401
      %1434 = vst [vmem:[%s230 + $0x90] sm:$0xff] %v1402
      %1435 = vst [vmem:[%s230 + $0x98] sm:$0xff] %v1403
      %1436 = vst [vmem:[%s230 + $0xa0] sm:$0xff] %v1404
      %1437 = vst [vmem:[%s230 + $0xa8] sm:$0xff] %v1405
      %1438 = vst [vmem:[%s230 + $0xb0] sm:$0xff] %v1406
      %1439 = vst [vmem:[%s230 + $0xb8] sm:$0xff] %v1407
      %1440 = vst [vmem:[%s230 + $0xc0] sm:$0xff] %v1408
      %1441 = vst [vmem:[%s230 + $0xc8] sm:$0xff] %v1409
      %1442 = vst [vmem:[%s230 + $0xd0] sm:$0xff] %v1410
      %1443 = vst [vmem:[%s230 + $0xd8] sm:$0xff] %v1411
      %1444 = vst [vmem:[%s230 + $0xe0] sm:$0xff] %v1412
      %1445 = vst [vmem:[%s230 + $0xe8] sm:$0xff] %v1413
      %1446 = vst [vmem:[%s230 + $0xf0] sm:$0xff] %v1414
      %1447 = vst [vmem:[%s230 + $0xf8] sm:$0xff] %v1415
      %v1448 = vadd.f32 %v1384, %v1385
      %v1449 = vadd.f32 %v1448, %v1386
      %v1450 = vadd.f32 %v1449, %v1387
      %v1451 = vadd.f32 %v1450, %v1388
      %v1452 = vadd.f32 %v1451, %v1389
      %v1453 = vadd.f32 %v1452, %v1390
      %v1454 = vadd.f32 %v1453, %v1391
      %v1455 = vadd.f32 %v1454, %v1392
      %v1456 = vadd.f32 %v1455, %v1393
      %v1457 = vadd.f32 %v1456, %v1394
      %v1458 = vadd.f32 %v1457, %v1395
      %v1459 = vadd.f32 %v1458, %v1396
      %v1460 = vadd.f32 %v1459, %v1397
      %v1461 = vadd.f32 %v1460, %v1398
      %v1462 = vadd.f32 %v1461, %v1399
      %v1463 = vadd.f32 %v1462, %v1400
      %v1464 = vadd.f32 %v1463, %v1401
      %v1465 = vadd.f32 %v1464, %v1402
      %v1466 = vadd.f32 %v1465, %v1403
      %v1467 = vadd.f32 %v1466, %v1404
      %v1468 = vadd.f32 %v1467, %v1405
      %v1469 = vadd.f32 %v1468, %v1406
      %v1470 = vadd.f32 %v1469, %v1407
      %v1471 = vadd.f32 %v1470, %v1408
      %v1472 = vadd.f32 %v1471, %v1409
      %v1473 = vadd.f32 %v1472, %v1410
      %v1474 = vadd.f32 %v1473, %v1411
      %v1475 = vadd.f32 %v1474, %v1412
      %v1476 = vadd.f32 %v1475, %v1413
      %v1477 = vadd.f32 %v1476, %v1414
      %v1478 = vadd.f32 %v1477, %v1415
      %v1479 = vrot.slane %v1478, 4
      %v1480 = vadd.f32 %v1478, %v1479
      %v1481 = vrot.slane %v1480, 2
      %v1482 = vadd.f32 %v1480, %v1481
      %v1483 = vrot.slane %v1482, 1
      %v1484 = vadd.f32 %v1482, %v1483
      %v1485 = vmul.f32 %v1384, %v1384
      %v1486 = vmul.f32 %v1385, %v1385
      %v1487 = vmul.f32 %v1386, %v1386
      %v1488 = vmul.f32 %v1387, %v1387
      %v1489 = vmul.f32 %v1388, %v1388
      %v1490 = vmul.f32 %v1389, %v1389
      %v1491 = vmul.f32 %v1390, %v1390
      %v1492 = vmul.f32 %v1391, %v1391
      %v1493 = vmul.f32 %v1392, %v1392
      %v1494 = vmul.f32 %v1393, %v1393
      %v1495 = vmul.f32 %v1394, %v1394
      %v1496 = vmul.f32 %v1395, %v1395
      %v1497 = vmul.f32 %v1396, %v1396
      %v1498 = vmul.f32 %v1397, %v1397
      %v1499 = vmul.f32 %v1398, %v1398
      %v1500 = vmul.f32 %v1399, %v1399
      %v1501 = vmul.f32 %v1400, %v1400
      %v1502 = vmul.f32 %v1401, %v1401
      %v1503 = vmul.f32 %v1402, %v1402
      %v1504 = vmul.f32 %v1403, %v1403
      %v1505 = vmul.f32 %v1404, %v1404
      %v1506 = vmul.f32 %v1405, %v1405
      %v1507 = vmul.f32 %v1406, %v1406
      %v1508 = vmul.f32 %v1407, %v1407
      %v1509 = vmul.f32 %v1408, %v1408
      %v1510 = vmul.f32 %v1409, %v1409
      %v1511 = vmul.f32 %v1410, %v1410
      %v1512 = vmul.f32 %v1411, %v1411
      %v1513 = vmul.f32 %v1412, %v1412
      %v1514 = vmul.f32 %v1413, %v1413
      %v1515 = vmul.f32 %v1414, %v1414
      %v1516 = vmul.f32 %v1415, %v1415
      %v1517 = vadd.f32 %v1485, %v1486
      %v1518 = vadd.f32 %v1517, %v1487
      %v1519 = vadd.f32 %v1518, %v1488
      %v1520 = vadd.f32 %v1519, %v1489
      %v1521 = vadd.f32 %v1520, %v1490
      %v1522 = vadd.f32 %v1521, %v1491
      %v1523 = vadd.f32 %v1522, %v1492
      %v1524 = vadd.f32 %v1523, %v1493
      %v1525 = vadd.f32 %v1524, %v1494
      %v1526 = vadd.f32 %v1525, %v1495
      %v1527 = vadd.f32 %v1526, %v1496
      %v1528 = vadd.f32 %v1527, %v1497
      %v1529 = vadd.f32 %v1528, %v1498
      %v1530 = vadd.f32 %v1529, %v1499
      %v1531 = vadd.f32 %v1530, %v1500
      %v1532 = vadd.f32 %v1531, %v1501
      %v1533 = vadd.f32 %v1532, %v1502
      %v1534 = vadd.f32 %v1533, %v1503
      %v1535 = vadd.f32 %v1534, %v1504
      %v1536 = vadd.f32 %v1535, %v1505
      %v1537 = vadd.f32 %v1536, %v1506
      %v1538 = vadd.f32 %v1537, %v1507
      %v1539 = vadd.f32 %v1538, %v1508
      %v1540 = vadd.f32 %v1539, %v1509
      %v1541 = vadd.f32 %v1540, %v1510
      %v1542 = vadd.f32 %v1541, %v1511
      %v1543 = vadd.f32 %v1542, %v1512
      %v1544 = vadd.f32 %v1543, %v1513
      %v1545 = vadd.f32 %v1544, %v1514
      %v1546 = vadd.f32 %v1545, %v1515
      %v1547 = vadd.f32 %v1546, %v1516
      %v1548 = vrot.slane %v1547, 4
      %v1549 = vadd.f32 %v1547, %v1548
      %v1550 = vrot.slane %v1549, 2
      %v1551 = vadd.f32 %v1549, %v1550
      %v1552 = vrot.slane %v1551, 1
      %v1553 = vadd.f32 %v1551, %v1552
      %vm1554 = vcmask 1040384
      %v1555 = vsel %vm1554, %v1484, %v1553
      %1556 = vst [vmem:[%s239] sm:$0x3] %v1555
      %s1557 = smul.u32 %s20, 2
      %s1558 = sadd.s32 %s1557, %s21
      %s1559 = smul.u32 32, %s1558
      %p1560 = scmp.lt.s32.totalorder %s1559, 127
      %s1561 = scalar_select %p1560, %s1559, 127
      %s1562 = smul.addr %s1561, 8
      %s1563 = scalar_lea.vmem %s3, %s1562
      %s1564 = smul.u32 %s20, 2
      %s1565 = sadd.s32 %s1564, %s21
      %p1566 = scmp.lt.s32.totalorder %s1565, 3
      %s1567 = scalar_select %p1566, %s1565, 3
      %s1568 = smul.addr %s1567, 2
      %s1569 = scalar_lea.vmem %s4, %s1568
      // Predicated region
      $region33: #{double_conv_forward.6} parent=31 // pred_check
        %p1570 = pneg %p118
      $region34: #{double_conv_forward.6} parent=31 // pred_check_branch
        %1572 = sbr.rel (%p1570) target = $region36
      $region35: #{double_conv_forward.6} parent=31 // pred_region
        %s1573 = smul.u32 %s20, 2
        %s1574 = sadd.s32 %s1573, %s21
        %s1575 = smul.u32 32, %s1574
      $region36: #{double_conv_forward.6} parent=31 // pred_fallthru
        _
      // Predicated region
      $region37: #{double_conv_forward.6} parent=31 // pred_check
        %p1576 = pneg %p148
      $region38: #{double_conv_forward.6} parent=31 // pred_check_branch
        %1578 = sbr.rel (%p1576) target = $region40
      $region39: #{double_conv_forward.6} parent=31 // pred_region
        %s1579 = smul.u32 %s20, 2
        %s1580 = sadd.s32 %s1579, %s21
      $region40: #{double_conv_forward.6} parent=31 // pred_fallthru
        _
    $region32: #{double_conv_forward.6} parent=5 // pred_fallthru
      _
    %p1581 = scmp.le.s32.totalorder 2, %s11
    // Predicated region
    $region41: #{double_conv_forward.6} parent=5 // pred_check
      %p1582 = pneg %p1581
    $region42: #{double_conv_forward.6} parent=5 // pred_check_branch
      %1584 = sbr.rel (%p1582) target = $region44
    $region43: #{double_conv_forward.6} parent=5 // pred_region
      %s1585 = ssub.s32 %s11, 2
      // Predicated region
      $region45: #{double_conv_forward.6} parent=43 // pred_check
        %p1586 = pneg %p124
      $region46: #{double_conv_forward.6} parent=43 // pred_check_branch
        %1588 = sbr.rel (%p1586) target = $region48
      $region47: #{double_conv_forward.6} parent=43 // pred_region
        %s1589 = smul.u32 %s22, 2
        %s1590 = sadd.s32 %s1589, %s23
        %s1591 = smul.u32 32, %s1590
        %p1592 = scmp.lt.s32.totalorder %s1591, 127
        %s1593 = scalar_select %p1592, %s1591, 127
        %s1594 = smul.addr %s1593, 8
        %s1595 = scalar_lea.vmem %s3, %s1594
      $region48: #{double_conv_forward.6} parent=43 // pred_fallthru
        _
      // Predicated region
      $region49: #{double_conv_forward.6} parent=43 // pred_check
        %p1596 = pneg %p154
      $region50: #{double_conv_forward.6} parent=43 // pred_check_branch
        %1598 = sbr.rel (%p1596) target = $region52
      $region51: #{double_conv_forward.6} parent=43 // pred_region
        %s1599 = smul.u32 %s22, 2
        %s1600 = sadd.s32 %s1599, %s23
        %p1601 = scmp.lt.s32.totalorder %s1600, 3
        %s1602 = scalar_select %p1601, %s1600, 3
        %s1603 = smul.addr %s1602, 2
        %s1604 = scalar_lea.vmem %s4, %s1603
      $region52: #{double_conv_forward.6} parent=43 // pred_fallthru
        _
    $region44: #{double_conv_forward.6} parent=5 // pred_fallthru
      _
  $region6: #{double_conv_forward.6} parent=0 // loop_footer
    %s15 = sadd.s32 1, %s11
  $region7: #{double_conv_forward.6} parent=0 // loop_footer_branch
    %10 = sbr.rel target = $region3
  $region8: #{double_conv_forward.6} parent=0 // loop_exit
    _

// kernel: double_conv_forward.7
$region0: #{double_conv_forward.7}
  #allocation0 [shape = 'u32[]', space=smem, size = 0x4, offset = 0x4, fixed_abs, tag = 'smem constant byte address 0x4 - core index']
  #allocation1 [shape = 'u32[144,128]{1,0:T(1,128)}', space=vmem, size = 0x12000, scoped, tag = 'internal scratch']
  %s0 = inlined_call_operand.vmem [shape: f32[1024,128], index: 0, kind: input, shape index: {}]
  %s1 = inlined_call_operand.vmem [shape: f32[1,128], index: 1, kind: input, shape index: {}]
  %s2 = inlined_call_operand.vmem [shape: f32[1,128], index: 2, kind: input, shape index: {}]
  %s3 = inlined_call_operand.vmem [shape: f32[1024,128], index: 3, kind: output, shape index: {}]
  %s4 = sld [smem:[#allocation0]]
  $region45: #{double_conv_forward.7} parent=0
    _
  %s6 = ssub.s32 1, %s4
  %s7 = scalar_select 0, %s6, %s4
  loop: start=0, step=1, limit=4
  $region2: #{double_conv_forward.7} parent=0 // loop_pre_header
    _
  $region3: #{double_conv_forward.7} parent=0 // loop_header
    %s9 = sphi 0, %s13
    %p10 = scmp.ge.s32.totalorder %s9, 4
    %s19 = sphi 0, %s21
    %s22 = sphi 0, %s19
    %s23 = sphi 0, %s22
    %s39 = sphi 0, %s23
    %s43 = sphi 0, %s43
    %s45 = sphi 0, %s43
    %s46 = sphi 0, %s45
    %s60 = sphi 0, %s46
    %s64 = sphi 0, %s64
    %s66 = sphi 0, %s64
    %s67 = sphi 0, %s66
    %s81 = sphi 0, %s67
    %s87 = sphi 0, %s89
    %s90 = sphi 0, %s87
    %s91 = sphi 0, %s90
    %s107 = sphi 0, %s91
  $region4: #{double_conv_forward.7} parent=0 // loop_header_branch
    %12 = sbr.rel (%p10) target = $region8
  $region5: #{double_conv_forward.7} parent=0 // loop_body
    %s14 = ssub.s32 %s9, 1
    %s15 = ssub.s32 %s9, 2
    %s16 = sadd.s32 %s9, 1
    %s17 = ssub.s32 %s9, %s16
    %p18 = scmp.eq.s32.totalorder %s17, 0
    %s20 = sadd.s32 %s19, 1
    %s21 = scalar_select %p18, %s19, %s20
    %p24 = pneg %p18
    %p25 = scmp.eq.s32.totalorder %s9, 1
    %p26 = por %p24, %p25
    %p27 = scmp.ne.s32.totalorder %s19, %s22
    %p28 = scmp.eq.s32.totalorder %s9, 0
    %p29 = por %p27, %p28
    %p30 = scmp.ne.s32.totalorder %s19, %s22
    %p31 = scmp.eq.s32.totalorder %s14, 1
    %p32 = por %p30, %p31
    %p33 = scmp.ne.s32.totalorder %s22, %s23
    %p34 = scmp.eq.s32.totalorder %s14, 0
    %p35 = por %p33, %p34
    %p36 = scmp.ne.s32.totalorder %s22, %s23
    %p37 = scmp.eq.s32.totalorder %s15, 1
    %p38 = por %p36, %p37
    %p40 = scmp.ne.s32.totalorder %s23, %s39
    %p41 = scmp.eq.s32.totalorder %s15, 0
    %p42 = por %p40, %p41
    %s44 = sadd.s32 %s43, 1
    %p47 = scmp.eq.s32.totalorder %s9, 1
    %p48 = scmp.ne.s32.totalorder %s43, %s45
    %p49 = scmp.eq.s32.totalorder %s9, 0
    %p50 = por %p48, %p49
    %p51 = scmp.ne.s32.totalorder %s43, %s45
    %p52 = scmp.eq.s32.totalorder %s14, 1
    %p53 = por %p51, %p52
    %p54 = scmp.ne.s32.totalorder %s45, %s46
    %p55 = scmp.eq.s32.totalorder %s14, 0
    %p56 = por %p54, %p55
    %p57 = scmp.ne.s32.totalorder %s45, %s46
    %p58 = scmp.eq.s32.totalorder %s15, 1
    %p59 = por %p57, %p58
    %p61 = scmp.ne.s32.totalorder %s46, %s60
    %p62 = scmp.eq.s32.totalorder %s15, 0
    %p63 = por %p61, %p62
    %s65 = sadd.s32 %s64, 1
    %p68 = scmp.eq.s32.totalorder %s9, 1
    %p69 = scmp.ne.s32.totalorder %s64, %s66
    %p70 = scmp.eq.s32.totalorder %s9, 0
    %p71 = por %p69, %p70
    %p72 = scmp.ne.s32.totalorder %s64, %s66
    %p73 = scmp.eq.s32.totalorder %s14, 1
    %p74 = por %p72, %p73
    %p75 = scmp.ne.s32.totalorder %s66, %s67
    %p76 = scmp.eq.s32.totalorder %s14, 0
    %p77 = por %p75, %p76
    %p78 = scmp.ne.s32.totalorder %s66, %s67
    %p79 = scmp.eq.s32.totalorder %s15, 1
    %p80 = por %p78, %p79
    %p82 = scmp.ne.s32.totalorder %s67, %s81
    %p83 = scmp.eq.s32.totalorder %s15, 0
    %p84 = por %p82, %p83
    %s85 = ssub.s32 %s9, %s16
    %p86 = scmp.eq.s32.totalorder %s85, 0
    %s88 = sadd.s32 %s87, 1
    %s89 = scalar_select %p86, %s87, %s88
    %p92 = pneg %p86
    %p93 = scmp.eq.s32.totalorder %s9, 1
    %p94 = por %p92, %p93
    %p95 = scmp.ne.s32.totalorder %s87, %s90
    %p96 = scmp.eq.s32.totalorder %s9, 0
    %p97 = por %p95, %p96
    %p98 = scmp.ne.s32.totalorder %s87, %s90
    %p99 = scmp.eq.s32.totalorder %s14, 1
    %p100 = por %p98, %p99
    %p101 = scmp.ne.s32.totalorder %s90, %s91
    %p102 = scmp.eq.s32.totalorder %s14, 0
    %p103 = por %p101, %p102
    %p104 = scmp.ne.s32.totalorder %s90, %s91
    %p105 = scmp.eq.s32.totalorder %s15, 1
    %p106 = por %p104, %p105
    %p108 = scmp.ne.s32.totalorder %s91, %s107
    %p109 = scmp.eq.s32.totalorder %s15, 0
    %p110 = por %p108, %p109
    %p111 = scmp.le.s32.totalorder 1, %s9
    %p112 = scmp.lt.s32.totalorder %s9, 3
    %p113 = pnand %p111, %p112
    %p114 = pneg %p113
    // Predicated region
    $region9: #{double_conv_forward.7} parent=5 // pred_check
      _
    $region10: #{double_conv_forward.7} parent=5 // pred_check_branch
      %116 = sbr.rel (%p113) target = $region12
    $region11: #{double_conv_forward.7} parent=5 // pred_region
      %s117 = ssub.s32 %s9, 1
      // Predicated region
      $region13: #{double_conv_forward.7} parent=11 // pred_check
        %p118 = pneg %p56
      $region14: #{double_conv_forward.7} parent=11 // pred_check_branch
        %120 = sbr.rel (%p118) target = $region16
      $region15: #{double_conv_forward.7} parent=11 // pred_region
        _
      $region16: #{double_conv_forward.7} parent=11 // pred_fallthru
        _
      // Predicated region
      $region17: #{double_conv_forward.7} parent=11 // pred_check
        %p121 = pneg %p77
      $region18: #{double_conv_forward.7} parent=11 // pred_check_branch
        %123 = sbr.rel (%p121) target = $region20
      $region19: #{double_conv_forward.7} parent=11 // pred_region
        _
      $region20: #{double_conv_forward.7} parent=11 // pred_fallthru
        _
    $region12: #{double_conv_forward.7} parent=5 // pred_fallthru
      _
    %p124 = scmp.lt.s32.totalorder %s9, 2
    // Predicated region
    $region21: #{double_conv_forward.7} parent=5 // pred_check
      %p125 = pneg %p124
    $region22: #{double_conv_forward.7} parent=5 // pred_check_branch
      %127 = sbr.rel (%p125) target = $region24
    $region23: #{double_conv_forward.7} parent=5 // pred_region
      // Predicated region
      $region25: #{double_conv_forward.7} parent=23 // pred_check
        %p128 = pneg %p29
      $region26: #{double_conv_forward.7} parent=23 // pred_check_branch
        %130 = sbr.rel (%p128) target = $region28
      $region27: #{double_conv_forward.7} parent=23 // pred_region
        %s131 = smul.u32 64, %s9
        %p132 = scmp.lt.s32.totalorder %s131, 127
        %s133 = scalar_select %p132, %s131, 127
        %s134 = smul.addr %s133, 8
        %s135 = scalar_lea.vmem %s0, %s134
        %s136 = smul.u32 64, %s9
      $region28: #{double_conv_forward.7} parent=23 // pred_fallthru
        _
    $region24: #{double_conv_forward.7} parent=5 // pred_fallthru
      _
    %p137 = scmp.le.s32.totalorder 1, %s9
    %p138 = scmp.lt.s32.totalorder %s9, 3
    %p139 = pnand %p137, %p138
    %p140 = pneg %p139
    // Predicated region
    $region29: #{double_conv_forward.7} parent=5 // pred_check
      _
    $region30: #{double_conv_forward.7} parent=5 // pred_check_branch
      %142 = sbr.rel (%p139) target = $region32
    $region31: #{double_conv_forward.7} parent=5 // pred_region
      %s143 = ssub.s32 %s9, 1
      %s144 = smul.u32 64, %s14
      %p145 = scmp.lt.s32.totalorder %s144, 127
      %s146 = scalar_select %p145, %s144, 127
      %s147 = smul.addr %s146, 8
      %s148 = scalar_lea.vmem %s0, %s147
      %p149 = pneg %p35
      %p150 = pneg %p32
      %p151 = pneg %p56
      %p152 = pneg %p53
      %p153 = pneg %p77
      %p154 = pneg %p74
      %p155 = pneg %p103
      %p156 = pneg %p100
      %s157 = smul.u32 64, %s14
      %p158 = scmp.lt.s32.totalorder %s157, 127
      %s159 = scalar_select %p158, %s157, 127
      %s160 = smul.addr %s159, 8
      %s161 = scalar_lea.vmem %s3, %s160
      %s162 = smul.u32 64, %s14
      %p163 = scmp.lt.s32.totalorder %s162, 127
      %s164 = scalar_select %p163, %s162, 127
      %s165 = smul.addr %s164, 8
      %s166 = scalar_lea.vmem %s0, %s165
      %s167 = smul.u32 64, %s14
      %s168 = smul.u32 64, %s14
      %p169 = scmp.lt.s32.totalorder %s168, 127
      %s170 = scalar_select %p169, %s168, 127
      %s171 = smul.addr %s170, 8
      %s172 = scalar_lea.vmem %s3, %s171
      %s173 = smul.u32 64, %s14
      %v174 = vld [vmem:[%s166] sm:$0xff]
      %v175 = vld [vmem:[%s166 + $0x8] sm:$0xff]
      %v176 = vld [vmem:[%s166 + $0x10] sm:$0xff]
      %v177 = vld [vmem:[%s166 + $0x18] sm:$0xff]
      %v178 = vld [vmem:[%s166 + $0x20] sm:$0xff]
      %v179 = vld [vmem:[%s166 + $0x28] sm:$0xff]
      %v180 = vld [vmem:[%s166 + $0x30] sm:$0xff]
      %v181 = vld [vmem:[%s166 + $0x38] sm:$0xff]
      %v182 = vld [vmem:[%s166 + $0x40] sm:$0xff]
      %v183 = vld [vmem:[%s166 + $0x48] sm:$0xff]
      %v184 = vld [vmem:[%s166 + $0x50] sm:$0xff]
      %v185 = vld [vmem:[%s166 + $0x58] sm:$0xff]
      %v186 = vld [vmem:[%s166 + $0x60] sm:$0xff]
      %v187 = vld [vmem:[%s166 + $0x68] sm:$0xff]
      %v188 = vld [vmem:[%s166 + $0x70] sm:$0xff]
      %v189 = vld [vmem:[%s166 + $0x78] sm:$0xff]
      %v190 = vld [vmem:[%s166 + $0x80] sm:$0xff]
      %v191 = vld [vmem:[%s166 + $0x88] sm:$0xff]
      %v192 = vld [vmem:[%s166 + $0x90] sm:$0xff]
      %v193 = vld [vmem:[%s166 + $0x98] sm:$0xff]
      %v194 = vld [vmem:[%s166 + $0xa0] sm:$0xff]
      %v195 = vld [vmem:[%s166 + $0xa8] sm:$0xff]
      %v196 = vld [vmem:[%s166 + $0xb0] sm:$0xff]
      %v197 = vld [vmem:[%s166 + $0xb8] sm:$0xff]
      %v198 = vld [vmem:[%s166 + $0xc0] sm:$0xff]
      %v199 = vld [vmem:[%s166 + $0xc8] sm:$0xff]
      %v200 = vld [vmem:[%s166 + $0xd0] sm:$0xff]
      %v201 = vld [vmem:[%s166 + $0xd8] sm:$0xff]
      %v202 = vld [vmem:[%s166 + $0xe0] sm:$0xff]
      %v203 = vld [vmem:[%s166 + $0xe8] sm:$0xff]
      %v204 = vld [vmem:[%s166 + $0xf0] sm:$0xff]
      %v205 = vld [vmem:[%s166 + $0xf8] sm:$0xff]
      %v206 = vld [vmem:[%s166 + $0x100] sm:$0xff]
      %v207 = vld [vmem:[%s166 + $0x108] sm:$0xff]
      %v208 = vld [vmem:[%s166 + $0x110] sm:$0xff]
      %v209 = vld [vmem:[%s166 + $0x118] sm:$0xff]
      %v210 = vld [vmem:[%s166 + $0x120] sm:$0xff]
      %v211 = vld [vmem:[%s166 + $0x128] sm:$0xff]
      %v212 = vld [vmem:[%s166 + $0x130] sm:$0xff]
      %v213 = vld [vmem:[%s166 + $0x138] sm:$0xff]
      %v214 = vld [vmem:[%s166 + $0x140] sm:$0xff]
      %v215 = vld [vmem:[%s166 + $0x148] sm:$0xff]
      %v216 = vld [vmem:[%s166 + $0x150] sm:$0xff]
      %v217 = vld [vmem:[%s166 + $0x158] sm:$0xff]
      %v218 = vld [vmem:[%s166 + $0x160] sm:$0xff]
      %v219 = vld [vmem:[%s166 + $0x168] sm:$0xff]
      %v220 = vld [vmem:[%s166 + $0x170] sm:$0xff]
      %v221 = vld [vmem:[%s166 + $0x178] sm:$0xff]
      %v222 = vld [vmem:[%s166 + $0x180] sm:$0xff]
      %v223 = vld [vmem:[%s166 + $0x188] sm:$0xff]
      %v224 = vld [vmem:[%s166 + $0x190] sm:$0xff]
      %v225 = vld [vmem:[%s166 + $0x198] sm:$0xff]
      %v226 = vld [vmem:[%s166 + $0x1a0] sm:$0xff]
      %v227 = vld [vmem:[%s166 + $0x1a8] sm:$0xff]
      %v228 = vld [vmem:[%s166 + $0x1b0] sm:$0xff]
      %v229 = vld [vmem:[%s166 + $0x1b8] sm:$0xff]
      %v230 = vld [vmem:[%s166 + $0x1c0] sm:$0xff]
      %v231 = vld [vmem:[%s166 + $0x1c8] sm:$0xff]
      %v232 = vld [vmem:[%s166 + $0x1d0] sm:$0xff]
      %v233 = vld [vmem:[%s166 + $0x1d8] sm:$0xff]
      %v234 = vld [vmem:[%s166 + $0x1e0] sm:$0xff]
      %v235 = vld [vmem:[%s166 + $0x1e8] sm:$0xff]
      %v236 = vld [vmem:[%s166 + $0x1f0] sm:$0xff]
      %v237 = vld [vmem:[%s166 + $0x1f8] sm:$0xff]
      %v238 = vld [vmem:[%s1] sm:$0x1]
      %v240 = vlaneseq
      %v241 = vshrl.u32 %v240, 7
      %v242 = vsub.s32 0, %v241
      %v243 = vrot.slane %v238, %v242
      %v245 = vmul.f32 %v174, %v243
      %v246 = vmul.f32 %v175, %v243
      %v247 = vmul.f32 %v176, %v243
      %v248 = vmul.f32 %v177, %v243
      %v249 = vmul.f32 %v178, %v243
      %v250 = vmul.f32 %v179, %v243
      %v251 = vmul.f32 %v180, %v243
      %v252 = vmul.f32 %v181, %v243
      %v253 = vmul.f32 %v182, %v243
      %v254 = vmul.f32 %v183, %v243
      %v255 = vmul.f32 %v184, %v243
      %v256 = vmul.f32 %v185, %v243
      %v257 = vmul.f32 %v186, %v243
      %v258 = vmul.f32 %v187, %v243
      %v259 = vmul.f32 %v188, %v243
      %v260 = vmul.f32 %v189, %v243
      %v261 = vmul.f32 %v190, %v243
      %v262 = vmul.f32 %v191, %v243
      %v263 = vmul.f32 %v192, %v243
      %v264 = vmul.f32 %v193, %v243
      %v265 = vmul.f32 %v194, %v243
      %v266 = vmul.f32 %v195, %v243
      %v267 = vmul.f32 %v196, %v243
      %v268 = vmul.f32 %v197, %v243
      %v269 = vmul.f32 %v198, %v243
      %v270 = vmul.f32 %v199, %v243
      %v271 = vmul.f32 %v200, %v243
      %v272 = vmul.f32 %v201, %v243
      %v273 = vmul.f32 %v202, %v243
      %v274 = vmul.f32 %v203, %v243
      %v275 = vmul.f32 %v204, %v243
      %v276 = vmul.f32 %v205, %v243
      %v277 = vmul.f32 %v206, %v243
      %v278 = vmul.f32 %v207, %v243
      %v279 = vmul.f32 %v208, %v243
      %v280 = vmul.f32 %v209, %v243
      %v281 = vmul.f32 %v210, %v243
      %v282 = vmul.f32 %v211, %v243
      %v283 = vmul.f32 %v212, %v243
      %v284 = vmul.f32 %v213, %v243
      %v285 = vmul.f32 %v214, %v243
      %v286 = vmul.f32 %v215, %v243
      %v287 = vmul.f32 %v216, %v243
      %v288 = vmul.f32 %v217, %v243
      %v289 = vmul.f32 %v218, %v243
      %v290 = vmul.f32 %v219, %v243
      %v291 = vmul.f32 %v220, %v243
      %v292 = vmul.f32 %v221, %v243
      %v293 = vmul.f32 %v222, %v243
      %v294 = vmul.f32 %v223, %v243
      %v295 = vmul.f32 %v224, %v243
      %v296 = vmul.f32 %v225, %v243
      %v297 = vmul.f32 %v226, %v243
      %v298 = vmul.f32 %v227, %v243
      %v299 = vmul.f32 %v228, %v243
      %v300 = vmul.f32 %v229, %v243
      %v301 = vmul.f32 %v230, %v243
      %v302 = vmul.f32 %v231, %v243
      %v303 = vmul.f32 %v232, %v243
      %v304 = vmul.f32 %v233, %v243
      %v305 = vmul.f32 %v234, %v243
      %v306 = vmul.f32 %v235, %v243
      %v307 = vmul.f32 %v236, %v243
      %v308 = vmul.f32 %v237, %v243
      %v309 = vld [vmem:[%s2] sm:$0x1]
      %v311 = vlaneseq
      %v312 = vshrl.u32 %v311, 7
      %v313 = vsub.s32 0, %v312
      %v314 = vrot.slane %v309, %v313
      %v316 = vadd.f32 %v245, %v314
      %v317 = vadd.f32 %v246, %v314
      %v318 = vadd.f32 %v247, %v314
      %v319 = vadd.f32 %v248, %v314
      %v320 = vadd.f32 %v249, %v314
      %v321 = vadd.f32 %v250, %v314
      %v322 = vadd.f32 %v251, %v314
      %v323 = vadd.f32 %v252, %v314
      %v324 = vadd.f32 %v253, %v314
      %v325 = vadd.f32 %v254, %v314
      %v326 = vadd.f32 %v255, %v314
      %v327 = vadd.f32 %v256, %v314
      %v328 = vadd.f32 %v257, %v314
      %v329 = vadd.f32 %v258, %v314
      %v330 = vadd.f32 %v259, %v314
      %v331 = vadd.f32 %v260, %v314
      %v332 = vadd.f32 %v261, %v314
      %v333 = vadd.f32 %v262, %v314
      %v334 = vadd.f32 %v263, %v314
      %v335 = vadd.f32 %v264, %v314
      %v336 = vadd.f32 %v265, %v314
      %v337 = vadd.f32 %v266, %v314
      %v338 = vadd.f32 %v267, %v314
      %v339 = vadd.f32 %v268, %v314
      %v340 = vadd.f32 %v269, %v314
      %v341 = vadd.f32 %v270, %v314
      %v342 = vadd.f32 %v271, %v314
      %v343 = vadd.f32 %v272, %v314
      %v344 = vadd.f32 %v273, %v314
      %v345 = vadd.f32 %v274, %v314
      %v346 = vadd.f32 %v275, %v314
      %v347 = vadd.f32 %v276, %v314
      %v348 = vadd.f32 %v277, %v314
      %v349 = vadd.f32 %v278, %v314
      %v350 = vadd.f32 %v279, %v314
      %v351 = vadd.f32 %v280, %v314
      %v352 = vadd.f32 %v281, %v314
      %v353 = vadd.f32 %v282, %v314
      %v354 = vadd.f32 %v283, %v314
      %v355 = vadd.f32 %v284, %v314
      %v356 = vadd.f32 %v285, %v314
      %v357 = vadd.f32 %v286, %v314
      %v358 = vadd.f32 %v287, %v314
      %v359 = vadd.f32 %v288, %v314
      %v360 = vadd.f32 %v289, %v314
      %v361 = vadd.f32 %v290, %v314
      %v362 = vadd.f32 %v291, %v314
      %v363 = vadd.f32 %v292, %v314
      %v364 = vadd.f32 %v293, %v314
      %v365 = vadd.f32 %v294, %v314
      %v366 = vadd.f32 %v295, %v314
      %v367 = vadd.f32 %v296, %v314
      %v368 = vadd.f32 %v297, %v314
      %v369 = vadd.f32 %v298, %v314
      %v370 = vadd.f32 %v299, %v314
      %v371 = vadd.f32 %v300, %v314
      %v372 = vadd.f32 %v301, %v314
      %v373 = vadd.f32 %v302, %v314
      %v374 = vadd.f32 %v303, %v314
      %v375 = vadd.f32 %v304, %v314
      %v376 = vadd.f32 %v305, %v314
      %v377 = vadd.f32 %v306, %v314
      %v378 = vadd.f32 %v307, %v314
      %v379 = vadd.f32 %v308, %v314
      %vm380 = vcmp.ge.f32.partialorder %v316, 0.0
      %vm381 = vcmp.ge.f32.partialorder %v317, 0.0
      %vm382 = vcmp.ge.f32.partialorder %v318, 0.0
      %vm383 = vcmp.ge.f32.partialorder %v319, 0.0
      %vm384 = vcmp.ge.f32.partialorder %v320, 0.0
      %vm385 = vcmp.ge.f32.partialorder %v321, 0.0
      %vm386 = vcmp.ge.f32.partialorder %v322, 0.0
      %vm387 = vcmp.ge.f32.partialorder %v323, 0.0
      %vm388 = vcmp.ge.f32.partialorder %v324, 0.0
      %vm389 = vcmp.ge.f32.partialorder %v325, 0.0
      %vm390 = vcmp.ge.f32.partialorder %v326, 0.0
      %vm391 = vcmp.ge.f32.partialorder %v327, 0.0
      %vm392 = vcmp.ge.f32.partialorder %v328, 0.0
      %vm393 = vcmp.ge.f32.partialorder %v329, 0.0
      %vm394 = vcmp.ge.f32.partialorder %v330, 0.0
      %vm395 = vcmp.ge.f32.partialorder %v331, 0.0
      %vm396 = vcmp.ge.f32.partialorder %v332, 0.0
      %vm397 = vcmp.ge.f32.partialorder %v333, 0.0
      %vm398 = vcmp.ge.f32.partialorder %v334, 0.0
      %vm399 = vcmp.ge.f32.partialorder %v335, 0.0
      %vm400 = vcmp.ge.f32.partialorder %v336, 0.0
      %vm401 = vcmp.ge.f32.partialorder %v337, 0.0
      %vm402 = vcmp.ge.f32.partialorder %v338, 0.0
      %vm403 = vcmp.ge.f32.partialorder %v339, 0.0
      %vm404 = vcmp.ge.f32.partialorder %v340, 0.0
      %vm405 = vcmp.ge.f32.partialorder %v341, 0.0
      %vm406 = vcmp.ge.f32.partialorder %v342, 0.0
      %vm407 = vcmp.ge.f32.partialorder %v343, 0.0
      %vm408 = vcmp.ge.f32.partialorder %v344, 0.0
      %vm409 = vcmp.ge.f32.partialorder %v345, 0.0
      %vm410 = vcmp.ge.f32.partialorder %v346, 0.0
      %vm411 = vcmp.ge.f32.partialorder %v347, 0.0
      %vm412 = vcmp.ge.f32.partialorder %v348, 0.0
      %vm413 = vcmp.ge.f32.partialorder %v349, 0.0
      %vm414 = vcmp.ge.f32.partialorder %v350, 0.0
      %vm415 = vcmp.ge.f32.partialorder %v351, 0.0
      %vm416 = vcmp.ge.f32.partialorder %v352, 0.0
      %vm417 = vcmp.ge.f32.partialorder %v353, 0.0
      %vm418 = vcmp.ge.f32.partialorder %v354, 0.0
      %vm419 = vcmp.ge.f32.partialorder %v355, 0.0
      %vm420 = vcmp.ge.f32.partialorder %v356, 0.0
      %vm421 = vcmp.ge.f32.partialorder %v357, 0.0
      %vm422 = vcmp.ge.f32.partialorder %v358, 0.0
      %vm423 = vcmp.ge.f32.partialorder %v359, 0.0
      %vm424 = vcmp.ge.f32.partialorder %v360, 0.0
      %vm425 = vcmp.ge.f32.partialorder %v361, 0.0
      %vm426 = vcmp.ge.f32.partialorder %v362, 0.0
      %vm427 = vcmp.ge.f32.partialorder %v363, 0.0
      %vm428 = vcmp.ge.f32.partialorder %v364, 0.0
      %vm429 = vcmp.ge.f32.partialorder %v365, 0.0
      %vm430 = vcmp.ge.f32.partialorder %v366, 0.0
      %vm431 = vcmp.ge.f32.partialorder %v367, 0.0
      %vm432 = vcmp.ge.f32.partialorder %v368, 0.0
      %vm433 = vcmp.ge.f32.partialorder %v369, 0.0
      %vm434 = vcmp.ge.f32.partialorder %v370, 0.0
      %vm435 = vcmp.ge.f32.partialorder %v371, 0.0
      %vm436 = vcmp.ge.f32.partialorder %v372, 0.0
      %vm437 = vcmp.ge.f32.partialorder %v373, 0.0
      %vm438 = vcmp.ge.f32.partialorder %v374, 0.0
      %vm439 = vcmp.ge.f32.partialorder %v375, 0.0
      %vm440 = vcmp.ge.f32.partialorder %v376, 0.0
      %vm441 = vcmp.ge.f32.partialorder %v377, 0.0
      %vm442 = vcmp.ge.f32.partialorder %v378, 0.0
      %vm443 = vcmp.ge.f32.partialorder %v379, 0.0
      %v444 = vmul.f32 %v316, 0.01
      %v445 = vmul.f32 %v317, 0.01
      %v446 = vmul.f32 %v318, 0.01
      %v447 = vmul.f32 %v319, 0.01
      %v448 = vmul.f32 %v320, 0.01
      %v449 = vmul.f32 %v321, 0.01
      %v450 = vmul.f32 %v322, 0.01
      %v451 = vmul.f32 %v323, 0.01
      %v452 = vmul.f32 %v324, 0.01
      %v453 = vmul.f32 %v325, 0.01
      %v454 = vmul.f32 %v326, 0.01
      %v455 = vmul.f32 %v327, 0.01
      %v456 = vmul.f32 %v328, 0.01
      %v457 = vmul.f32 %v329, 0.01
      %v458 = vmul.f32 %v330, 0.01
      %v459 = vmul.f32 %v331, 0.01
      %v460 = vmul.f32 %v332, 0.01
      %v461 = vmul.f32 %v333, 0.01
      %v462 = vmul.f32 %v334, 0.01
      %v463 = vmul.f32 %v335, 0.01
      %v464 = vmul.f32 %v336, 0.01
      %v465 = vmul.f32 %v337, 0.01
      %v466 = vmul.f32 %v338, 0.01
      %v467 = vmul.f32 %v339, 0.01
      %v468 = vmul.f32 %v340, 0.01
      %v469 = vmul.f32 %v341, 0.01
      %v470 = vmul.f32 %v342, 0.01
      %v471 = vmul.f32 %v343, 0.01
      %v472 = vmul.f32 %v344, 0.01
      %v473 = vmul.f32 %v345, 0.01
      %v474 = vmul.f32 %v346, 0.01
      %v475 = vmul.f32 %v347, 0.01
      %v476 = vmul.f32 %v348, 0.01
      %v477 = vmul.f32 %v349, 0.01
      %v478 = vmul.f32 %v350, 0.01
      %v479 = vmul.f32 %v351, 0.01
      %v480 = vmul.f32 %v352, 0.01
      %v481 = vmul.f32 %v353, 0.01
      %v482 = vmul.f32 %v354, 0.01
      %v483 = vmul.f32 %v355, 0.01
      %v484 = vmul.f32 %v356, 0.01
      %v485 = vmul.f32 %v357, 0.01
      %v486 = vmul.f32 %v358, 0.01
      %v487 = vmul.f32 %v359, 0.01
      %v488 = vmul.f32 %v360, 0.01
      %v489 = vmul.f32 %v361, 0.01
      %v490 = vmul.f32 %v362, 0.01
      %v491 = vmul.f32 %v363, 0.01
      %v492 = vmul.f32 %v364, 0.01
      %v493 = vmul.f32 %v365, 0.01
      %v494 = vmul.f32 %v366, 0.01
      %v495 = vmul.f32 %v367, 0.01
      %v496 = vmul.f32 %v368, 0.01
      %v497 = vmul.f32 %v369, 0.01
      %v498 = vmul.f32 %v370, 0.01
      %v499 = vmul.f32 %v371, 0.01
      %v500 = vmul.f32 %v372, 0.01
      %v501 = vmul.f32 %v373, 0.01
      %v502 = vmul.f32 %v374, 0.01
      %v503 = vmul.f32 %v375, 0.01
      %v504 = vmul.f32 %v376, 0.01
      %v505 = vmul.f32 %v377, 0.01
      %v506 = vmul.f32 %v378, 0.01
      %v507 = vmul.f32 %v379, 0.01
      %v508 = vsel %vm380, %v316, %v444
      %v509 = vsel %vm381, %v317, %v445
      %v510 = vsel %vm382, %v318, %v446
      %v511 = vsel %vm383, %v319, %v447
      %v512 = vsel %vm384, %v320, %v448
      %v513 = vsel %vm385, %v321, %v449
      %v514 = vsel %vm386, %v322, %v450
      %v515 = vsel %vm387, %v323, %v451
      %v516 = vsel %vm388, %v324, %v452
      %v517 = vsel %vm389, %v325, %v453
      %v518 = vsel %vm390, %v326, %v454
      %v519 = vsel %vm391, %v327, %v455
      %v520 = vsel %vm392, %v328, %v456
      %v521 = vsel %vm393, %v329, %v457
      %v522 = vsel %vm394, %v330, %v458
      %v523 = vsel %vm395, %v331, %v459
      %v524 = vsel %vm396, %v332, %v460
      %v525 = vsel %vm397, %v333, %v461
      %v526 = vsel %vm398, %v334, %v462
      %v527 = vsel %vm399, %v335, %v463
      %v528 = vsel %vm400, %v336, %v464
      %v529 = vsel %vm401, %v337, %v465
      %v530 = vsel %vm402, %v338, %v466
      %v531 = vsel %vm403, %v339, %v467
      %v532 = vsel %vm404, %v340, %v468
      %v533 = vsel %vm405, %v341, %v469
      %v534 = vsel %vm406, %v342, %v470
      %v535 = vsel %vm407, %v343, %v471
      %v536 = vsel %vm408, %v344, %v472
      %v537 = vsel %vm409, %v345, %v473
      %v538 = vsel %vm410, %v346, %v474
      %v539 = vsel %vm411, %v347, %v475
      %v540 = vsel %vm412, %v348, %v476
      %v541 = vsel %vm413, %v349, %v477
      %v542 = vsel %vm414, %v350, %v478
      %v543 = vsel %vm415, %v351, %v479
      %v544 = vsel %vm416, %v352, %v480
      %v545 = vsel %vm417, %v353, %v481
      %v546 = vsel %vm418, %v354, %v482
      %v547 = vsel %vm419, %v355, %v483
      %v548 = vsel %vm420, %v356, %v484
      %v549 = vsel %vm421, %v357, %v485
      %v550 = vsel %vm422, %v358, %v486
      %v551 = vsel %vm423, %v359, %v487
      %v552 = vsel %vm424, %v360, %v488
      %v553 = vsel %vm425, %v361, %v489
      %v554 = vsel %vm426, %v362, %v490
      %v555 = vsel %vm427, %v363, %v491
      %v556 = vsel %vm428, %v364, %v492
      %v557 = vsel %vm429, %v365, %v493
      %v558 = vsel %vm430, %v366, %v494
      %v559 = vsel %vm431, %v367, %v495
      %v560 = vsel %vm432, %v368, %v496
      %v561 = vsel %vm433, %v369, %v497
      %v562 = vsel %vm434, %v370, %v498
      %v563 = vsel %vm435, %v371, %v499
      %v564 = vsel %vm436, %v372, %v500
      %v565 = vsel %vm437, %v373, %v501
      %v566 = vsel %vm438, %v374, %v502
      %v567 = vsel %vm439, %v375, %v503
      %v568 = vsel %vm440, %v376, %v504
      %v569 = vsel %vm441, %v377, %v505
      %v570 = vsel %vm442, %v378, %v506
      %v571 = vsel %vm443, %v379, %v507
      %572 = vst [vmem:[%s172] sm:$0xff] %v508
      %573 = vst [vmem:[%s172 + $0x8] sm:$0xff] %v509
      %574 = vst [vmem:[%s172 + $0x10] sm:$0xff] %v510
      %575 = vst [vmem:[%s172 + $0x18] sm:$0xff] %v511
      %576 = vst [vmem:[%s172 + $0x20] sm:$0xff] %v512
      %577 = vst [vmem:[%s172 + $0x28] sm:$0xff] %v513
      %578 = vst [vmem:[%s172 + $0x30] sm:$0xff] %v514
      %579 = vst [vmem:[%s172 + $0x38] sm:$0xff] %v515
      %580 = vst [vmem:[%s172 + $0x40] sm:$0xff] %v516
      %581 = vst [vmem:[%s172 + $0x48] sm:$0xff] %v517
      %582 = vst [vmem:[%s172 + $0x50] sm:$0xff] %v518
      %583 = vst [vmem:[%s172 + $0x58] sm:$0xff] %v519
      %584 = vst [vmem:[%s172 + $0x60] sm:$0xff] %v520
      %585 = vst [vmem:[%s172 + $0x68] sm:$0xff] %v521
      %586 = vst [vmem:[%s172 + $0x70] sm:$0xff] %v522
      %587 = vst [vmem:[%s172 + $0x78] sm:$0xff] %v523
      %588 = vst [vmem:[%s172 + $0x80] sm:$0xff] %v524
      %589 = vst [vmem:[%s172 + $0x88] sm:$0xff] %v525
      %590 = vst [vmem:[%s172 + $0x90] sm:$0xff] %v526
      %591 = vst [vmem:[%s172 + $0x98] sm:$0xff] %v527
      %592 = vst [vmem:[%s172 + $0xa0] sm:$0xff] %v528
      %593 = vst [vmem:[%s172 + $0xa8] sm:$0xff] %v529
      %594 = vst [vmem:[%s172 + $0xb0] sm:$0xff] %v530
      %595 = vst [vmem:[%s172 + $0xb8] sm:$0xff] %v531
      %596 = vst [vmem:[%s172 + $0xc0] sm:$0xff] %v532
      %597 = vst [vmem:[%s172 + $0xc8] sm:$0xff] %v533
      %598 = vst [vmem:[%s172 + $0xd0] sm:$0xff] %v534
      %599 = vst [vmem:[%s172 + $0xd8] sm:$0xff] %v535
      %600 = vst [vmem:[%s172 + $0xe0] sm:$0xff] %v536
      %601 = vst [vmem:[%s172 + $0xe8] sm:$0xff] %v537
      %602 = vst [vmem:[%s172 + $0xf0] sm:$0xff] %v538
      %603 = vst [vmem:[%s172 + $0xf8] sm:$0xff] %v539
      %604 = vst [vmem:[%s172 + $0x100] sm:$0xff] %v540
      %605 = vst [vmem:[%s172 + $0x108] sm:$0xff] %v541
      %606 = vst [vmem:[%s172 + $0x110] sm:$0xff] %v542
      %607 = vst [vmem:[%s172 + $0x118] sm:$0xff] %v543
      %608 = vst [vmem:[%s172 + $0x120] sm:$0xff] %v544
      %609 = vst [vmem:[%s172 + $0x128] sm:$0xff] %v545
      %610 = vst [vmem:[%s172 + $0x130] sm:$0xff] %v546
      %611 = vst [vmem:[%s172 + $0x138] sm:$0xff] %v547
      %612 = vst [vmem:[%s172 + $0x140] sm:$0xff] %v548
      %613 = vst [vmem:[%s172 + $0x148] sm:$0xff] %v549
      %614 = vst [vmem:[%s172 + $0x150] sm:$0xff] %v550
      %615 = vst [vmem:[%s172 + $0x158] sm:$0xff] %v551
      %616 = vst [vmem:[%s172 + $0x160] sm:$0xff] %v552
      %617 = vst [vmem:[%s172 + $0x168] sm:$0xff] %v553
      %618 = vst [vmem:[%s172 + $0x170] sm:$0xff] %v554
      %619 = vst [vmem:[%s172 + $0x178] sm:$0xff] %v555
      %620 = vst [vmem:[%s172 + $0x180] sm:$0xff] %v556
      %621 = vst [vmem:[%s172 + $0x188] sm:$0xff] %v557
      %622 = vst [vmem:[%s172 + $0x190] sm:$0xff] %v558
      %623 = vst [vmem:[%s172 + $0x198] sm:$0xff] %v559
      %624 = vst [vmem:[%s172 + $0x1a0] sm:$0xff] %v560
      %625 = vst [vmem:[%s172 + $0x1a8] sm:$0xff] %v561
      %626 = vst [vmem:[%s172 + $0x1b0] sm:$0xff] %v562
      %627 = vst [vmem:[%s172 + $0x1b8] sm:$0xff] %v563
      %628 = vst [vmem:[%s172 + $0x1c0] sm:$0xff] %v564
      %629 = vst [vmem:[%s172 + $0x1c8] sm:$0xff] %v565
      %630 = vst [vmem:[%s172 + $0x1d0] sm:$0xff] %v566
      %631 = vst [vmem:[%s172 + $0x1d8] sm:$0xff] %v567
      %632 = vst [vmem:[%s172 + $0x1e0] sm:$0xff] %v568
      %633 = vst [vmem:[%s172 + $0x1e8] sm:$0xff] %v569
      %634 = vst [vmem:[%s172 + $0x1f0] sm:$0xff] %v570
      %635 = vst [vmem:[%s172 + $0x1f8] sm:$0xff] %v571
      %s636 = smul.u32 64, %s14
      %p637 = scmp.lt.s32.totalorder %s636, 127
      %s638 = scalar_select %p637, %s636, 127
      %s639 = smul.addr %s638, 8
      %s640 = scalar_lea.vmem %s3, %s639
      // Predicated region
      $region33: #{double_conv_forward.7} parent=31 // pred_check
        %p641 = pneg %p100
      $region34: #{double_conv_forward.7} parent=31 // pred_check_branch
        %643 = sbr.rel (%p641) target = $region36
      $region35: #{double_conv_forward.7} parent=31 // pred_region
        %s644 = smul.u32 64, %s14
      $region36: #{double_conv_forward.7} parent=31 // pred_fallthru
        _
    $region32: #{double_conv_forward.7} parent=5 // pred_fallthru
      _
    %p645 = scmp.le.s32.totalorder 2, %s9
    // Predicated region
    $region37: #{double_conv_forward.7} parent=5 // pred_check
      %p646 = pneg %p645
    $region38: #{double_conv_forward.7} parent=5 // pred_check_branch
      %648 = sbr.rel (%p646) target = $region40
    $region39: #{double_conv_forward.7} parent=5 // pred_region
      %s649 = ssub.s32 %s9, 2
      // Predicated region
      $region41: #{double_conv_forward.7} parent=39 // pred_check
        %p650 = pneg %p106
      $region42: #{double_conv_forward.7} parent=39 // pred_check_branch
        %652 = sbr.rel (%p650) target = $region44
      $region43: #{double_conv_forward.7} parent=39 // pred_region
        %s653 = smul.u32 64, %s15
        %p654 = scmp.lt.s32.totalorder %s653, 127
        %s655 = scalar_select %p654, %s653, 127
        %s656 = smul.addr %s655, 8
        %s657 = scalar_lea.vmem %s3, %s656
      $region44: #{double_conv_forward.7} parent=39 // pred_fallthru
        _
    $region40: #{double_conv_forward.7} parent=5 // pred_fallthru
      _
  $region6: #{double_conv_forward.7} parent=0 // loop_footer
    %s13 = sadd.s32 1, %s9
  $region7: #{double_conv_forward.7} parent=0 // loop_footer_branch
    %8 = sbr.rel target = $region3
  $region8: #{double_conv_forward.7} parent=0 // loop_exit
    _

</llo_original>
